<compile_context>
chip_gen: v7x
topology: tpu7x:2x2x1
jax: 0.10.0
libtpu: 0.0.40
codegen_flags: <defaults>
</compile_context>

<pallas_src>
import math

import jax
import jax.numpy as jnp
import numpy as np
from jax.experimental import pallas as pl
from jax.experimental.pallas import tpu as pltpu


def _make_decoder_block_kernel(n_heads, head_dim):
    H, d = n_heads, head_dim

    def layer_norm(x, gamma, beta, eps=1e-5):
        mean = jnp.mean(x, axis=-1, keepdims=True)
        var = jnp.mean(jnp.square(x - mean), axis=-1, keepdims=True)
        return (x - mean) * jax.lax.rsqrt(var + eps) * gamma + beta

    def split_heads(x2d):
        # (N, H*d) -> (H*N, d) bf16, head-major rows.  Cast ONCE to bf16 before the lane
        # slices so every slice/concat copy (a real copy, not a view) moves half the bytes.
        xb = x2d.astype(jnp.bfloat16)
        return jnp.concatenate([xb[:, h * d:(h + 1) * d] for h in range(H)], axis=0)

    def attention_core(qh, kh, vh, bt, sq, sk, wo, bo, mask_add):
        # qh/kh/vh: (H*bt*seq, d) bf16, already head-projected (q pre-scaled by 1/sqrt(d)).
        # Group to (H*bt, seq, d) and run ONE batched score / context matmul pair.
        qg = qh.reshape(H * bt, sq, d)
        kg = kh.reshape(H * bt, sk, d)
        vg = vh.reshape(H * bt, sk, d)

        s = jnp.einsum('gqd,gkd->gqk', qg, kg,
                       preferred_element_type=jnp.float32)        # (H*bt, sq, sk) f32
        if mask_add is not None:
            # Additive 0 / -1e20 mask, broadcast over heads via a leading-dim-only reshape.
            s = (s.reshape(H, bt, sq, sk) + mask_add[None]).reshape(H * bt, sq, sk)
        s = s - jnp.max(s, axis=-1, keepdims=True)
        p = jnp.exp(s)
        p = p / jnp.sum(p, axis=-1, keepdims=True)

        ctx = jnp.einsum('gqk,gkd->gqd', p.astype(jnp.bfloat16), vg,
                         preferred_element_type=jnp.float32)      # (H*bt, sq, d) f32
        ctx = ctx.reshape(H, bt * sq, d).astype(jnp.bfloat16)
        ctx2d = jnp.concatenate([ctx[h] for h in range(H)], axis=-1)   # (bt*sq, E) bf16
        out = jnp.dot(ctx2d, wo, preferred_element_type=jnp.float32)
        return out + bo

    def self_mha(x2d, bt, s_len, wkqv, wo, bo, mask_add):
        # Single head split + single fused (d, 3d) projection for k/q/v.
        xh = split_heads(x2d)                                     # (H*n, d) bf16
        kqv = jnp.dot(xh, wkqv,
                      preferred_element_type=jnp.float32).astype(jnp.bfloat16)
        kh = kqv[:, 0 * d:1 * d]
        qh = kqv[:, 1 * d:2 * d]
        vh = kqv[:, 2 * d:3 * d]
        return attention_core(qh, kh, vh, bt, s_len, s_len, wo, bo, mask_add)

    def cross_mha(key2d, query2d, value2d, bt, sq, sk, wk, wq, wv, wo, bo):
        kh = jnp.dot(split_heads(key2d), wk,
                     preferred_element_type=jnp.float32).astype(jnp.bfloat16)
        qh = jnp.dot(split_heads(query2d), wq,
                     preferred_element_type=jnp.float32).astype(jnp.bfloat16)
        vh = jnp.dot(split_heads(value2d), wv,
                     preferred_element_type=jnp.float32).astype(jnp.bfloat16)
        return attention_core(qh, kh, vh, bt, sq, sk, wo, bo, None)

    def kernel(key_ref, query_ref, dec_ref, mask_ref,
               wkqv1_ref, wo1_ref, bo1_ref, gn_ref, bn_ref,
               wk2_ref, wq2_ref, wv2_ref, wo2_ref, bo2_ref, g1_ref, b1_ref,
               wff1_ref, bff1_ref, wff2_ref, bff2_ref, g2_ref, b2_ref,
               out_ref):
        bt, s_len, e = dec_ref.shape
        n = bt * s_len
        dec2d = dec_ref[...].reshape(n, e)
        key2d = key_ref[...].reshape(n, e)
        query2d = query_ref[...].reshape(n, e)
        mask_add = mask_ref[...]                                  # (bt, S, S) additive f32

        # 1) masked self-attention over the decoder positional embeddings
        attn1 = self_mha(dec2d, bt, s_len, wkqv1_ref[...],
                         wo1_ref[...], bo1_ref[...], mask_add)
        value = layer_norm(attn1 + dec2d, gn_ref[...], bn_ref[...])   # dropout -> identity

        # 2) transformer block: cross attention (k <- key, q <- query, v <- value)
        attn2 = cross_mha(key2d, query2d, value, bt, s_len, s_len,
                          wk2_ref[...], wq2_ref[...], wv2_ref[...],
                          wo2_ref[...], bo2_ref[...])
        norm1 = layer_norm(attn2 + value, g1_ref[...], b1_ref[...])

        # 3) feed-forward (bf16 matmuls, f32 accumulation) + residual + norm
        hid = jnp.maximum(
            jnp.dot(norm1.astype(jnp.bfloat16), wff1_ref[...],
                    preferred_element_type=jnp.float32) + bff1_ref[...], 0.0)
        ff = jnp.dot(hid.astype(jnp.bfloat16), wff2_ref[...],
                     preferred_element_type=jnp.float32) + bff2_ref[...]
        out = layer_norm(ff + norm1, g2_ref[...], b2_ref[...])
        out_ref[...] = out.reshape(bt, s_len, e).astype(out_ref.dtype)

    return kernel


def _pick_batch_block(B, S, H):
    # Largest divisor of B giving >= 2 grid steps, while keeping the per-step f32
    # score + prob tensors (2 * H*bt*S*S * 4 bytes) comfortably inside scoped VMEM.
    budget = 8 * 1024 * 1024
    for cand in range(B // 2, 0, -1):
        if B % cand == 0 and 2 * H * cand * S * S * 4 <= budget:
            return cand
    return 1


def decoder_block(key, query, dec_pos_emb, mask, kparams, n_heads, batch_block=None):
    B, S, E = dec_pos_emb.shape
    d = E // n_heads
    bt = _pick_batch_block(B, S, n_heads) if batch_block is None else batch_block
    assert B % bt == 0
    kernel = _make_decoder_block_kernel(n_heads, d)

    # Host-side: drop the broadcast head dim and convert the 0/1 mask to an additive
    # 0 / -1e20 mask so the kernel does a single add (no tile, no compare+select).
    mask3 = mask.reshape(B, S, S)
    mask_add = jnp.where(mask3 == 0, jnp.float32(-1e20), jnp.float32(0.0))

    act_spec = pl.BlockSpec((bt, S, E), lambda b: (b, 0, 0))
    mask_spec = pl.BlockSpec((bt, S, S), lambda b: (b, 0, 0))

    def full_spec(x):
        nd = x.ndim
        return pl.BlockSpec(x.shape, lambda b, nd=nd: (0,) * nd)

    weight_list = [
        kparams["wkqv1"], kparams["wo1"], kparams["bo1"],
        kparams["gn"], kparams["bn"],
        kparams["wk2"], kparams["wq2"], kparams["wv2"], kparams["wo2"], kparams["bo2"],
        kparams["g1"], kparams["b1"],
        kparams["wff1"], kparams["bff1"], kparams["wff2"], kparams["bff2"],
        kparams["g2"], kparams["b2"],
    ]
    in_specs = [act_spec, act_spec, act_spec, mask_spec] + [full_spec(w) for w in weight_list]

    return pl.pallas_call(
        kernel,
        out_shape=jax.ShapeDtypeStruct((B, S, E), jnp.float32),
        grid=(B // bt,),
        in_specs=in_specs,
        out_specs=pl.BlockSpec((bt, S, E), lambda b: (b, 0, 0)),
        compiler_params=pltpu.CompilerParams(
            dimension_semantics=("parallel",),
            vmem_limit_bytes=48 * 1024 * 1024,
        ),
    )(key, query, dec_pos_emb, mask_add, *weight_list)


# ---------------------------------------------------------------------------
# Parameter init (PyTorch (out, in) convention) + conversion for the kernel
# ---------------------------------------------------------------------------
def init_raw_params(rng, embed_dim, n_heads, expansion_factor):
    E = embed_dim
    d = E // n_heads
    Eff = expansion_factor * E
    keys = jax.random.split(rng, 14)

    def nrm(k, shape, scale=0.1):
        return scale * jax.random.normal(k, shape, dtype=jnp.float32)

    return dict(
        Wk1=nrm(keys[0], (d, d)), Wq1=nrm(keys[1], (d, d)), Wv1=nrm(keys[2], (d, d)),
        Wo1=nrm(keys[3], (E, E)), bo1=nrm(keys[4], (E,)),
        gn=jnp.ones((E,), jnp.float32), bn=jnp.zeros((E,), jnp.float32),
        Wk2=nrm(keys[5], (d, d)), Wq2=nrm(keys[6], (d, d)), Wv2=nrm(keys[7], (d, d)),
        Wo2=nrm(keys[8], (E, E)), bo2=nrm(keys[9], (E,)),
        g1=jnp.ones((E,), jnp.float32), b1=jnp.zeros((E,), jnp.float32),
        Wff1=nrm(keys[10], (Eff, E)), bff1=nrm(keys[11], (Eff,)),
        Wff2=nrm(keys[12], (E, Eff)), bff2=nrm(keys[13], (E,)),
        g2=jnp.ones((E,), jnp.float32), b2=jnp.zeros((E,), jnp.float32),
    )


def to_kernel_params(raw, n_heads):
    d = raw["Wk1"].shape[0]
    scale = 1.0 / math.sqrt(d)                  # folded into wq (one-time, off-kernel)
    bf = lambda W: W.astype(jnp.bfloat16)       # matmul weights -> bf16
    row = lambda v: v.reshape(1, -1).astype(jnp.float32)
    # Fused self-attention k/q/v projection: (d, 3d), query columns pre-scaled.
    wkqv1 = jnp.concatenate(
        [raw["Wk1"].T, raw["Wq1"].T * scale, raw["Wv1"].T], axis=1)
    return dict(
        wkqv1=bf(wkqv1),
        wo1=bf(raw["Wo1"].T), bo1=row(raw["bo1"]),
        gn=row(raw["gn"]), bn=row(raw["bn"]),
        wk2=bf(raw["Wk2"].T), wq2=bf(raw["Wq2"].T * scale), wv2=bf(raw["Wv2"].T),
        wo2=bf(raw["Wo2"].T), bo2=row(raw["bo2"]),
        g1=row(raw["g1"]), b1=row(raw["b1"]),
        wff1=bf(raw["Wff1"].T), bff1=row(raw["bff1"]),
        wff2=bf(raw["Wff2"].T), bff2=row(raw["bff2"]),
        g2=row(raw["g2"]), b2=row(raw["b2"]),
    )


# ---------------------------------------------------------------------------
# Pure-JAX reference, mirroring the PyTorch module structure exactly
# ---------------------------------------------------------------------------
def reference_forward(key, query, dec, mask, raw, n_heads):
    def layer_norm(x, g, b, eps=1e-5):
        mean = jnp.mean(x, axis=-1, keepdims=True)
        var = jnp.mean((x - mean) ** 2, axis=-1, keepdims=True)
        return (x - mean) / jnp.sqrt(var + eps) * g + b

    def mha(key_x, query_x, value_x, Wk, Wq, Wv, Wo, bo, mask):
        B, Sk, E = key_x.shape
        Sq = query_x.shape[1]
        d = E // n_heads
        k = key_x.reshape(B, Sk, n_heads, d) @ Wk.T
        q = query_x.reshape(B, Sq, n_heads, d) @ Wq.T
        v = value_x.reshape(B, Sk, n_heads, d) @ Wv.T
        q, k, v = (t.transpose(0, 2, 1, 3) for t in (q, k, v))
        product = q @ jnp.swapaxes(k, -1, -2)                 # (B, H, Sq, Sk)
        if mask is not None:
            product = jnp.where(mask == 0, -1e20, product)
        product = product / math.sqrt(d)
        scores = jax.nn.softmax(product, axis=-1)
        ctx = (scores @ v).transpose(0, 2, 1, 3).reshape(B, Sq, E)
        return ctx @ Wo.T + bo

    attn1 = mha(dec, dec, dec, raw["Wk1"], raw["Wq1"], raw["Wv1"],
                raw["Wo1"], raw["bo1"], mask)
    value = layer_norm(attn1 + dec, raw["gn"], raw["bn"])
    attn2 = mha(key, query, value, raw["Wk2"], raw["Wq2"], raw["Wv2"],
                raw["Wo2"], raw["bo2"], None)
    norm1 = layer_norm(attn2 + value, raw["g1"], raw["b1"])
    hid = jax.nn.relu(norm1 @ raw["Wff1"].T + raw["bff1"])
    ff = hid @ raw["Wff2"].T + raw["bff2"]
    return layer_norm(ff + norm1, raw["g2"], raw["b2"])


if __name__ == "__main__":
    B, S, E, H, EXP = 2, 8, 64, 8, 4

    rng = jax.random.PRNGKey(0)
    r_in, r_par = jax.random.split(rng)
    rk, rq, rd = jax.random.split(r_in, 3)
    key_v = jax.random.normal(rk, (B, S, E), jnp.float32)
    query_v = jax.random.normal(rq, (B, S, E), jnp.float32)
    dec_v = jax.random.normal(rd, (B, S, E), jnp.float32)
    mask = jnp.broadcast_to(jnp.tril(jnp.ones((S, S), jnp.float32)), (B, 1, S, S))

    raw = init_raw_params(r_par, E, H, EXP)
    kparams = to_kernel_params(raw, H)

    out = decoder_block(key_v, query_v, dec_v, mask, kparams, H)
    out = jax.block_until_ready(out)

    ref = reference_forward(key_v, query_v, dec_v, mask, raw, H)
    np.testing.assert_allclose(np.asarray(out), np.asarray(ref), atol=5e-2, rtol=5e-2)

    print("KERNEL_OK")
</pallas_src>

<mosaic_0001>
module attributes {stable_mosaic.version = 11 : i64} {
  func.func @kernel(%arg0: i32, %arg1: memref<1x8x64xf32, #tpu.memory_space<vmem>>, %arg2: memref<1x8x64xf32, #tpu.memory_space<vmem>>, %arg3: memref<1x8x64xf32, #tpu.memory_space<vmem>>, %arg4: memref<1x8x8xf32, #tpu.memory_space<vmem>>, %arg5: memref<8x24xbf16, #tpu.memory_space<vmem>>, %arg6: memref<64x64xbf16, #tpu.memory_space<vmem>>, %arg7: memref<1x64xf32, #tpu.memory_space<vmem>>, %arg8: memref<1x64xf32, #tpu.memory_space<vmem>>, %arg9: memref<1x64xf32, #tpu.memory_space<vmem>>, %arg10: memref<8x8xbf16, #tpu.memory_space<vmem>>, %arg11: memref<8x8xbf16, #tpu.memory_space<vmem>>, %arg12: memref<8x8xbf16, #tpu.memory_space<vmem>>, %arg13: memref<64x64xbf16, #tpu.memory_space<vmem>>, %arg14: memref<1x64xf32, #tpu.memory_space<vmem>>, %arg15: memref<1x64xf32, #tpu.memory_space<vmem>>, %arg16: memref<1x64xf32, #tpu.memory_space<vmem>>, %arg17: memref<64x256xbf16, #tpu.memory_space<vmem>>, %arg18: memref<1x256xf32, #tpu.memory_space<vmem>>, %arg19: memref<256x64xbf16, #tpu.memory_space<vmem>>, %arg20: memref<1x64xf32, #tpu.memory_space<vmem>>, %arg21: memref<1x64xf32, #tpu.memory_space<vmem>>, %arg22: memref<1x64xf32, #tpu.memory_space<vmem>>, %arg23: memref<1x8x64xf32, #tpu.memory_space<vmem>>) attributes {dimension_semantics = [#tpu.dimension_semantics<parallel>], iteration_bounds = array<i64: 2>, scalar_prefetch = 0 : i64, scratch_operands = 0 : i64, tpu.core_type = #tpu.core_type<tc>, window_params = [{transform_indices = @transform_0, window_bounds = array<i64: 1, 8, 64>}, {transform_indices = @transform_1, window_bounds = array<i64: 1, 8, 64>}, {transform_indices = @transform_2, window_bounds = array<i64: 1, 8, 64>}, {transform_indices = @transform_3, window_bounds = array<i64: 1, 8, 8>}, {pipeline_mode = #tpu.pipeline_mode<synchronous>, transform_indices = @transform_4, window_bounds = array<i64: 8, 24>}, {pipeline_mode = #tpu.pipeline_mode<synchronous>, transform_indices = @transform_5, window_bounds = array<i64: 64, 64>}, {pipeline_mode = #tpu.pipeline_mode<synchronous>, transform_indices = @transform_6, window_bounds = array<i64: 1, 64>}, {pipeline_mode = #tpu.pipeline_mode<synchronous>, transform_indices = @transform_7, window_bounds = array<i64: 1, 64>}, {pipeline_mode = #tpu.pipeline_mode<synchronous>, transform_indices = @transform_8, window_bounds = array<i64: 1, 64>}, {pipeline_mode = #tpu.pipeline_mode<synchronous>, transform_indices = @transform_9, window_bounds = array<i64: 8, 8>}, {pipeline_mode = #tpu.pipeline_mode<synchronous>, transform_indices = @transform_10, window_bounds = array<i64: 8, 8>}, {pipeline_mode = #tpu.pipeline_mode<synchronous>, transform_indices = @transform_11, window_bounds = array<i64: 8, 8>}, {pipeline_mode = #tpu.pipeline_mode<synchronous>, transform_indices = @transform_12, window_bounds = array<i64: 64, 64>}, {pipeline_mode = #tpu.pipeline_mode<synchronous>, transform_indices = @transform_13, window_bounds = array<i64: 1, 64>}, {pipeline_mode = #tpu.pipeline_mode<synchronous>, transform_indices = @transform_14, window_bounds = array<i64: 1, 64>}, {pipeline_mode = #tpu.pipeline_mode<synchronous>, transform_indices = @transform_15, window_bounds = array<i64: 1, 64>}, {pipeline_mode = #tpu.pipeline_mode<synchronous>, transform_indices = @transform_16, window_bounds = array<i64: 64, 256>}, {pipeline_mode = #tpu.pipeline_mode<synchronous>, transform_indices = @transform_17, window_bounds = array<i64: 1, 256>}, {pipeline_mode = #tpu.pipeline_mode<synchronous>, transform_indices = @transform_18, window_bounds = array<i64: 256, 64>}, {pipeline_mode = #tpu.pipeline_mode<synchronous>, transform_indices = @transform_19, window_bounds = array<i64: 1, 64>}, {pipeline_mode = #tpu.pipeline_mode<synchronous>, transform_indices = @transform_20, window_bounds = array<i64: 1, 64>}, {pipeline_mode = #tpu.pipeline_mode<synchronous>, transform_indices = @transform_21, window_bounds = array<i64: 1, 64>}, {transform_indices = @transform_22, window_bounds = array<i64: 1, 8, 64>}]} {
    %c0 = arith.constant 0 : index
    %c0_0 = arith.constant 0 : index
    %c0_1 = arith.constant 0 : index
    %0 = vector.load %arg3[%c0, %c0_0, %c0_1] : memref<1x8x64xf32, #tpu.memory_space<vmem>>, vector<1x8x64xf32>
    %1 = vector.shape_cast %0 : vector<1x8x64xf32> to vector<8x64xf32>
    %c0_2 = arith.constant 0 : index
    %c0_3 = arith.constant 0 : index
    %c0_4 = arith.constant 0 : index
    %2 = vector.load %arg1[%c0_2, %c0_3, %c0_4] : memref<1x8x64xf32, #tpu.memory_space<vmem>>, vector<1x8x64xf32>
    %3 = vector.shape_cast %2 : vector<1x8x64xf32> to vector<8x64xf32>
    %c0_5 = arith.constant 0 : index
    %c0_6 = arith.constant 0 : index
    %c0_7 = arith.constant 0 : index
    %4 = vector.load %arg2[%c0_5, %c0_6, %c0_7] : memref<1x8x64xf32, #tpu.memory_space<vmem>>, vector<1x8x64xf32>
    %5 = vector.shape_cast %4 : vector<1x8x64xf32> to vector<8x64xf32>
    %c0_8 = arith.constant 0 : index
    %c0_9 = arith.constant 0 : index
    %c0_10 = arith.constant 0 : index
    %6 = vector.load %arg4[%c0_8, %c0_9, %c0_10] : memref<1x8x8xf32, #tpu.memory_space<vmem>>, vector<1x8x8xf32>
    %c0_11 = arith.constant 0 : index
    %c0_12 = arith.constant 0 : index
    %7 = vector.load %arg5[%c0_11, %c0_12] : memref<8x24xbf16, #tpu.memory_space<vmem>>, vector<8x24xbf16>
    %c0_13 = arith.constant 0 : index
    %c0_14 = arith.constant 0 : index
    %8 = vector.load %arg6[%c0_13, %c0_14] : memref<64x64xbf16, #tpu.memory_space<vmem>>, vector<64x64xbf16>
    %c0_15 = arith.constant 0 : index
    %c0_16 = arith.constant 0 : index
    %9 = vector.load %arg7[%c0_15, %c0_16] : memref<1x64xf32, #tpu.memory_space<vmem>>, vector<1x64xf32>
    %10 = arith.truncf %1 : vector<8x64xf32> to vector<8x64xbf16>
    %11 = vector.extract_strided_slice %10 {offsets = [0, 0], sizes = [8, 8], strides = [1, 1]} : vector<8x64xbf16> to vector<8x8xbf16>
    %12 = vector.extract_strided_slice %10 {offsets = [0, 8], sizes = [8, 8], strides = [1, 1]} : vector<8x64xbf16> to vector<8x8xbf16>
    %13 = vector.extract_strided_slice %10 {offsets = [0, 16], sizes = [8, 8], strides = [1, 1]} : vector<8x64xbf16> to vector<8x8xbf16>
    %14 = vector.extract_strided_slice %10 {offsets = [0, 24], sizes = [8, 8], strides = [1, 1]} : vector<8x64xbf16> to vector<8x8xbf16>
    %15 = vector.extract_strided_slice %10 {offsets = [0, 32], sizes = [8, 8], strides = [1, 1]} : vector<8x64xbf16> to vector<8x8xbf16>
    %16 = vector.extract_strided_slice %10 {offsets = [0, 40], sizes = [8, 8], strides = [1, 1]} : vector<8x64xbf16> to vector<8x8xbf16>
    %17 = vector.extract_strided_slice %10 {offsets = [0, 48], sizes = [8, 8], strides = [1, 1]} : vector<8x64xbf16> to vector<8x8xbf16>
    %18 = vector.extract_strided_slice %10 {offsets = [0, 56], sizes = [8, 8], strides = [1, 1]} : vector<8x64xbf16> to vector<8x8xbf16>
    %19 = tpu.concatenate %11, %12, %13, %14, %15, %16, %17, %18 in 0 : vector<8x8xbf16>, vector<8x8xbf16>, vector<8x8xbf16>, vector<8x8xbf16>, vector<8x8xbf16>, vector<8x8xbf16>, vector<8x8xbf16>, vector<8x8xbf16> -> vector<64x8xbf16>
    %cst = arith.constant dense<0.000000e+00> : vector<64x24xf32>
    %20 = tpu.matmul %19, %7, %cst {dimension_numbers = #tpu.dot_dimension_numbers<[1], [0], [0], [1], [0, 0, 1, 1], [], []>} : vector<64x8xbf16>, vector<8x24xbf16>, vector<64x24xf32> -> vector<64x24xf32>
    %21 = arith.truncf %20 : vector<64x24xf32> to vector<64x24xbf16>
    %22 = vector.extract_strided_slice %21 {offsets = [0, 0], sizes = [64, 8], strides = [1, 1]} : vector<64x24xbf16> to vector<64x8xbf16>
    %23 = vector.extract_strided_slice %21 {offsets = [0, 8], sizes = [64, 8], strides = [1, 1]} : vector<64x24xbf16> to vector<64x8xbf16>
    %24 = vector.extract_strided_slice %21 {offsets = [0, 16], sizes = [64, 8], strides = [1, 1]} : vector<64x24xbf16> to vector<64x8xbf16>
    %25 = vector.shape_cast %23 : vector<64x8xbf16> to vector<8x8x8xbf16>
    %26 = vector.shape_cast %22 : vector<64x8xbf16> to vector<8x8x8xbf16>
    %27 = vector.shape_cast %24 : vector<64x8xbf16> to vector<8x8x8xbf16>
    "tpu.trace_start"() <{level = 10 : i32, message = "gqd,gkd->gqk"}> : () -> ()
    %cst_17 = arith.constant dense<0.000000e+00> : vector<8x8x8xf32>
    %28 = tpu.matmul %25, %26, %cst_17 {dimension_numbers = #tpu.dot_dimension_numbers<[2], [2], [1], [1], [0, 0, 0, 1, 1, 1], [0], [0]>} : vector<8x8x8xbf16>, vector<8x8x8xbf16>, vector<8x8x8xf32> -> vector<8x8x8xf32>
    "tpu.trace_stop"() : () -> ()
    %29 = vector.shape_cast %28 : vector<8x8x8xf32> to vector<8x1x8x8xf32>
    %30 = vector.shape_cast %6 : vector<1x8x8xf32> to vector<1x1x8x8xf32>
    %31 = vector.broadcast %30 : vector<1x1x8x8xf32> to vector<8x1x8x8xf32>
    %32 = arith.addf %29, %31 : vector<8x1x8x8xf32>
    %33 = vector.shape_cast %32 : vector<8x1x8x8xf32> to vector<8x8x8xf32>
    %cst_18 = arith.constant dense<0xFF800000> : vector<8x8xf32>
    %34 = vector.multi_reduction <maximumf>, %33, %cst_18 [2] : vector<8x8x8xf32> to vector<8x8xf32>
    %35 = vector.shape_cast %34 : vector<8x8xf32> to vector<8x8x1xf32>
    %36 = vector.broadcast %35 : vector<8x8x1xf32> to vector<8x8x8xf32>
    %37 = arith.subf %33, %36 : vector<8x8x8xf32>
    %38 = math.exp %37 : vector<8x8x8xf32>
    %cst_19 = arith.constant dense<0.000000e+00> : vector<8x8xf32>
    %39 = vector.multi_reduction <add>, %38, %cst_19 [2] : vector<8x8x8xf32> to vector<8x8xf32>
    %40 = vector.shape_cast %39 : vector<8x8xf32> to vector<8x8x1xf32>
    %41 = vector.broadcast %40 : vector<8x8x1xf32> to vector<8x8x8xf32>
    %42 = arith.divf %38, %41 : vector<8x8x8xf32>
    %43 = arith.truncf %42 : vector<8x8x8xf32> to vector<8x8x8xbf16>
    "tpu.trace_start"() <{level = 10 : i32, message = "gqk,gkd->gqd"}> : () -> ()
    %cst_20 = arith.constant dense<0.000000e+00> : vector<8x8x8xf32>
    %44 = tpu.matmul %43, %27, %cst_20 {dimension_numbers = #tpu.dot_dimension_numbers<[2], [1], [1], [2], [0, 0, 0, 1, 1, 2], [0], [0]>} : vector<8x8x8xbf16>, vector<8x8x8xbf16>, vector<8x8x8xf32> -> vector<8x8x8xf32>
    "tpu.trace_stop"() : () -> ()
    %45 = arith.truncf %44 : vector<8x8x8xf32> to vector<8x8x8xbf16>
    %46 = vector.extract_strided_slice %45 {offsets = [0, 0, 0], sizes = [1, 8, 8], strides = [1, 1, 1]} : vector<8x8x8xbf16> to vector<1x8x8xbf16>
    %47 = vector.shape_cast %46 : vector<1x8x8xbf16> to vector<8x8xbf16>
    %48 = vector.extract_strided_slice %45 {offsets = [1, 0, 0], sizes = [1, 8, 8], strides = [1, 1, 1]} : vector<8x8x8xbf16> to vector<1x8x8xbf16>
    %49 = vector.shape_cast %48 : vector<1x8x8xbf16> to vector<8x8xbf16>
    %50 = vector.extract_strided_slice %45 {offsets = [2, 0, 0], sizes = [1, 8, 8], strides = [1, 1, 1]} : vector<8x8x8xbf16> to vector<1x8x8xbf16>
    %51 = vector.shape_cast %50 : vector<1x8x8xbf16> to vector<8x8xbf16>
    %52 = vector.extract_strided_slice %45 {offsets = [3, 0, 0], sizes = [1, 8, 8], strides = [1, 1, 1]} : vector<8x8x8xbf16> to vector<1x8x8xbf16>
    %53 = vector.shape_cast %52 : vector<1x8x8xbf16> to vector<8x8xbf16>
    %54 = vector.extract_strided_slice %45 {offsets = [4, 0, 0], sizes = [1, 8, 8], strides = [1, 1, 1]} : vector<8x8x8xbf16> to vector<1x8x8xbf16>
    %55 = vector.shape_cast %54 : vector<1x8x8xbf16> to vector<8x8xbf16>
    %56 = vector.extract_strided_slice %45 {offsets = [5, 0, 0], sizes = [1, 8, 8], strides = [1, 1, 1]} : vector<8x8x8xbf16> to vector<1x8x8xbf16>
    %57 = vector.shape_cast %56 : vector<1x8x8xbf16> to vector<8x8xbf16>
    %58 = vector.extract_strided_slice %45 {offsets = [6, 0, 0], sizes = [1, 8, 8], strides = [1, 1, 1]} : vector<8x8x8xbf16> to vector<1x8x8xbf16>
    %59 = vector.shape_cast %58 : vector<1x8x8xbf16> to vector<8x8xbf16>
    %60 = vector.extract_strided_slice %45 {offsets = [7, 0, 0], sizes = [1, 8, 8], strides = [1, 1, 1]} : vector<8x8x8xbf16> to vector<1x8x8xbf16>
    %61 = vector.shape_cast %60 : vector<1x8x8xbf16> to vector<8x8xbf16>
    %62 = tpu.concatenate %47, %49, %51, %53, %55, %57, %59, %61 in 1 : vector<8x8xbf16>, vector<8x8xbf16>, vector<8x8xbf16>, vector<8x8xbf16>, vector<8x8xbf16>, vector<8x8xbf16>, vector<8x8xbf16>, vector<8x8xbf16> -> vector<8x64xbf16>
    %cst_21 = arith.constant dense<0.000000e+00> : vector<8x64xf32>
    %63 = tpu.matmul %62, %8, %cst_21 {dimension_numbers = #tpu.dot_dimension_numbers<[1], [0], [0], [1], [0, 0, 1, 1], [], []>} : vector<8x64xbf16>, vector<64x64xbf16>, vector<8x64xf32> -> vector<8x64xf32>
    %64 = vector.broadcast %9 : vector<1x64xf32> to vector<8x64xf32>
    %65 = arith.addf %63, %64 : vector<8x64xf32>
    %66 = arith.addf %65, %1 : vector<8x64xf32>
    %c0_22 = arith.constant 0 : index
    %c0_23 = arith.constant 0 : index
    %67 = vector.load %arg8[%c0_22, %c0_23] : memref<1x64xf32, #tpu.memory_space<vmem>>, vector<1x64xf32>
    %c0_24 = arith.constant 0 : index
    %c0_25 = arith.constant 0 : index
    %68 = vector.load %arg9[%c0_24, %c0_25] : memref<1x64xf32, #tpu.memory_space<vmem>>, vector<1x64xf32>
    %cst_26 = arith.constant dense<0.000000e+00> : vector<8xf32>
    %69 = vector.multi_reduction <add>, %66, %cst_26 [1] : vector<8x64xf32> to vector<8xf32>
    %70 = vector.shape_cast %69 : vector<8xf32> to vector<8x1xf32>
    %cst_27 = arith.constant 6.400000e+01 : f32
    %71 = vector.broadcast %cst_27 : f32 to vector<8x1xf32>
    %72 = arith.divf %70, %71 : vector<8x1xf32>
    %73 = vector.broadcast %72 : vector<8x1xf32> to vector<8x64xf32>
    %74 = arith.subf %66, %73 : vector<8x64xf32>
    %75 = arith.mulf %74, %74 : vector<8x64xf32>
    %cst_28 = arith.constant dense<0.000000e+00> : vector<8xf32>
    %76 = vector.multi_reduction <add>, %75, %cst_28 [1] : vector<8x64xf32> to vector<8xf32>
    %77 = vector.shape_cast %76 : vector<8xf32> to vector<8x1xf32>
    %cst_29 = arith.constant 6.400000e+01 : f32
    %78 = vector.broadcast %cst_29 : f32 to vector<8x1xf32>
    %79 = arith.divf %77, %78 : vector<8x1xf32>
    %80 = vector.broadcast %72 : vector<8x1xf32> to vector<8x64xf32>
    %81 = arith.subf %66, %80 : vector<8x64xf32>
    %cst_30 = arith.constant 9.99999974E-6 : f32
    %82 = vector.broadcast %cst_30 : f32 to vector<8x1xf32>
    %83 = arith.addf %79, %82 : vector<8x1xf32>
    %84 = math.rsqrt %83 : vector<8x1xf32>
    %85 = vector.broadcast %84 : vector<8x1xf32> to vector<8x64xf32>
    %86 = arith.mulf %81, %85 : vector<8x64xf32>
    %87 = vector.broadcast %67 : vector<1x64xf32> to vector<8x64xf32>
    %88 = arith.mulf %86, %87 : vector<8x64xf32>
    %89 = vector.broadcast %68 : vector<1x64xf32> to vector<8x64xf32>
    %90 = arith.addf %88, %89 : vector<8x64xf32>
    %c0_31 = arith.constant 0 : index
    %c0_32 = arith.constant 0 : index
    %91 = vector.load %arg10[%c0_31, %c0_32] : memref<8x8xbf16, #tpu.memory_space<vmem>>, vector<8x8xbf16>
    %c0_33 = arith.constant 0 : index
    %c0_34 = arith.constant 0 : index
    %92 = vector.load %arg11[%c0_33, %c0_34] : memref<8x8xbf16, #tpu.memory_space<vmem>>, vector<8x8xbf16>
    %c0_35 = arith.constant 0 : index
    %c0_36 = arith.constant 0 : index
    %93 = vector.load %arg12[%c0_35, %c0_36] : memref<8x8xbf16, #tpu.memory_space<vmem>>, vector<8x8xbf16>
    %c0_37 = arith.constant 0 : index
    %c0_38 = arith.constant 0 : index
    %94 = vector.load %arg13[%c0_37, %c0_38] : memref<64x64xbf16, #tpu.memory_space<vmem>>, vector<64x64xbf16>
    %c0_39 = arith.constant 0 : index
    %c0_40 = arith.constant 0 : index
    %95 = vector.load %arg14[%c0_39, %c0_40] : memref<1x64xf32, #tpu.memory_space<vmem>>, vector<1x64xf32>
    %96 = arith.truncf %3 : vector<8x64xf32> to vector<8x64xbf16>
    %97 = vector.extract_strided_slice %96 {offsets = [0, 0], sizes = [8, 8], strides = [1, 1]} : vector<8x64xbf16> to vector<8x8xbf16>
    %98 = vector.extract_strided_slice %96 {offsets = [0, 8], sizes = [8, 8], strides = [1, 1]} : vector<8x64xbf16> to vector<8x8xbf16>
    %99 = vector.extract_strided_slice %96 {offsets = [0, 16], sizes = [8, 8], strides = [1, 1]} : vector<8x64xbf16> to vector<8x8xbf16>
    %100 = vector.extract_strided_slice %96 {offsets = [0, 24], sizes = [8, 8], strides = [1, 1]} : vector<8x64xbf16> to vector<8x8xbf16>
    %101 = vector.extract_strided_slice %96 {offsets = [0, 32], sizes = [8, 8], strides = [1, 1]} : vector<8x64xbf16> to vector<8x8xbf16>
    %102 = vector.extract_strided_slice %96 {offsets = [0, 40], sizes = [8, 8], strides = [1, 1]} : vector<8x64xbf16> to vector<8x8xbf16>
    %103 = vector.extract_strided_slice %96 {offsets = [0, 48], sizes = [8, 8], strides = [1, 1]} : vector<8x64xbf16> to vector<8x8xbf16>
    %104 = vector.extract_strided_slice %96 {offsets = [0, 56], sizes = [8, 8], strides = [1, 1]} : vector<8x64xbf16> to vector<8x8xbf16>
    %105 = tpu.concatenate %97, %98, %99, %100, %101, %102, %103, %104 in 0 : vector<8x8xbf16>, vector<8x8xbf16>, vector<8x8xbf16>, vector<8x8xbf16>, vector<8x8xbf16>, vector<8x8xbf16>, vector<8x8xbf16>, vector<8x8xbf16> -> vector<64x8xbf16>
    %cst_41 = arith.constant dense<0.000000e+00> : vector<64x8xf32>
    %106 = tpu.matmul %105, %91, %cst_41 {dimension_numbers = #tpu.dot_dimension_numbers<[1], [0], [0], [1], [0, 0, 1, 1], [], []>} : vector<64x8xbf16>, vector<8x8xbf16>, vector<64x8xf32> -> vector<64x8xf32>
    %107 = arith.truncf %106 : vector<64x8xf32> to vector<64x8xbf16>
    %108 = arith.truncf %5 : vector<8x64xf32> to vector<8x64xbf16>
    %109 = vector.extract_strided_slice %108 {offsets = [0, 0], sizes = [8, 8], strides = [1, 1]} : vector<8x64xbf16> to vector<8x8xbf16>
    %110 = vector.extract_strided_slice %108 {offsets = [0, 8], sizes = [8, 8], strides = [1, 1]} : vector<8x64xbf16> to vector<8x8xbf16>
    %111 = vector.extract_strided_slice %108 {offsets = [0, 16], sizes = [8, 8], strides = [1, 1]} : vector<8x64xbf16> to vector<8x8xbf16>
    %112 = vector.extract_strided_slice %108 {offsets = [0, 24], sizes = [8, 8], strides = [1, 1]} : vector<8x64xbf16> to vector<8x8xbf16>
    %113 = vector.extract_strided_slice %108 {offsets = [0, 32], sizes = [8, 8], strides = [1, 1]} : vector<8x64xbf16> to vector<8x8xbf16>
    %114 = vector.extract_strided_slice %108 {offsets = [0, 40], sizes = [8, 8], strides = [1, 1]} : vector<8x64xbf16> to vector<8x8xbf16>
    %115 = vector.extract_strided_slice %108 {offsets = [0, 48], sizes = [8, 8], strides = [1, 1]} : vector<8x64xbf16> to vector<8x8xbf16>
    %116 = vector.extract_strided_slice %108 {offsets = [0, 56], sizes = [8, 8], strides = [1, 1]} : vector<8x64xbf16> to vector<8x8xbf16>
    %117 = tpu.concatenate %109, %110, %111, %112, %113, %114, %115, %116 in 0 : vector<8x8xbf16>, vector<8x8xbf16>, vector<8x8xbf16>, vector<8x8xbf16>, vector<8x8xbf16>, vector<8x8xbf16>, vector<8x8xbf16>, vector<8x8xbf16> -> vector<64x8xbf16>
    %cst_42 = arith.constant dense<0.000000e+00> : vector<64x8xf32>
    %118 = tpu.matmul %117, %92, %cst_42 {dimension_numbers = #tpu.dot_dimension_numbers<[1], [0], [0], [1], [0, 0, 1, 1], [], []>} : vector<64x8xbf16>, vector<8x8xbf16>, vector<64x8xf32> -> vector<64x8xf32>
    %119 = arith.truncf %118 : vector<64x8xf32> to vector<64x8xbf16>
    %120 = arith.truncf %90 : vector<8x64xf32> to vector<8x64xbf16>
    %121 = vector.extract_strided_slice %120 {offsets = [0, 0], sizes = [8, 8], strides = [1, 1]} : vector<8x64xbf16> to vector<8x8xbf16>
    %122 = vector.extract_strided_slice %120 {offsets = [0, 8], sizes = [8, 8], strides = [1, 1]} : vector<8x64xbf16> to vector<8x8xbf16>
    %123 = vector.extract_strided_slice %120 {offsets = [0, 16], sizes = [8, 8], strides = [1, 1]} : vector<8x64xbf16> to vector<8x8xbf16>
    %124 = vector.extract_strided_slice %120 {offsets = [0, 24], sizes = [8, 8], strides = [1, 1]} : vector<8x64xbf16> to vector<8x8xbf16>
    %125 = vector.extract_strided_slice %120 {offsets = [0, 32], sizes = [8, 8], strides = [1, 1]} : vector<8x64xbf16> to vector<8x8xbf16>
    %126 = vector.extract_strided_slice %120 {offsets = [0, 40], sizes = [8, 8], strides = [1, 1]} : vector<8x64xbf16> to vector<8x8xbf16>
    %127 = vector.extract_strided_slice %120 {offsets = [0, 48], sizes = [8, 8], strides = [1, 1]} : vector<8x64xbf16> to vector<8x8xbf16>
    %128 = vector.extract_strided_slice %120 {offsets = [0, 56], sizes = [8, 8], strides = [1, 1]} : vector<8x64xbf16> to vector<8x8xbf16>
    %129 = tpu.concatenate %121, %122, %123, %124, %125, %126, %127, %128 in 0 : vector<8x8xbf16>, vector<8x8xbf16>, vector<8x8xbf16>, vector<8x8xbf16>, vector<8x8xbf16>, vector<8x8xbf16>, vector<8x8xbf16>, vector<8x8xbf16> -> vector<64x8xbf16>
    %cst_43 = arith.constant dense<0.000000e+00> : vector<64x8xf32>
    %130 = tpu.matmul %129, %93, %cst_43 {dimension_numbers = #tpu.dot_dimension_numbers<[1], [0], [0], [1], [0, 0, 1, 1], [], []>} : vector<64x8xbf16>, vector<8x8xbf16>, vector<64x8xf32> -> vector<64x8xf32>
    %131 = arith.truncf %130 : vector<64x8xf32> to vector<64x8xbf16>
    %132 = vector.shape_cast %119 : vector<64x8xbf16> to vector<8x8x8xbf16>
    %133 = vector.shape_cast %107 : vector<64x8xbf16> to vector<8x8x8xbf16>
    %134 = vector.shape_cast %131 : vector<64x8xbf16> to vector<8x8x8xbf16>
    "tpu.trace_start"() <{level = 10 : i32, message = "gqd,gkd->gqk"}> : () -> ()
    %cst_44 = arith.constant dense<0.000000e+00> : vector<8x8x8xf32>
    %135 = tpu.matmul %132, %133, %cst_44 {dimension_numbers = #tpu.dot_dimension_numbers<[2], [2], [1], [1], [0, 0, 0, 1, 1, 1], [0], [0]>} : vector<8x8x8xbf16>, vector<8x8x8xbf16>, vector<8x8x8xf32> -> vector<8x8x8xf32>
    "tpu.trace_stop"() : () -> ()
    %cst_45 = arith.constant dense<0xFF800000> : vector<8x8xf32>
    %136 = vector.multi_reduction <maximumf>, %135, %cst_45 [2] : vector<8x8x8xf32> to vector<8x8xf32>
    %137 = vector.shape_cast %136 : vector<8x8xf32> to vector<8x8x1xf32>
    %138 = vector.broadcast %137 : vector<8x8x1xf32> to vector<8x8x8xf32>
    %139 = arith.subf %135, %138 : vector<8x8x8xf32>
    %140 = math.exp %139 : vector<8x8x8xf32>
    %cst_46 = arith.constant dense<0.000000e+00> : vector<8x8xf32>
    %141 = vector.multi_reduction <add>, %140, %cst_46 [2] : vector<8x8x8xf32> to vector<8x8xf32>
    %142 = vector.shape_cast %141 : vector<8x8xf32> to vector<8x8x1xf32>
    %143 = vector.broadcast %142 : vector<8x8x1xf32> to vector<8x8x8xf32>
    %144 = arith.divf %140, %143 : vector<8x8x8xf32>
    %145 = arith.truncf %144 : vector<8x8x8xf32> to vector<8x8x8xbf16>
    "tpu.trace_start"() <{level = 10 : i32, message = "gqk,gkd->gqd"}> : () -> ()
    %cst_47 = arith.constant dense<0.000000e+00> : vector<8x8x8xf32>
    %146 = tpu.matmul %145, %134, %cst_47 {dimension_numbers = #tpu.dot_dimension_numbers<[2], [1], [1], [2], [0, 0, 0, 1, 1, 2], [0], [0]>} : vector<8x8x8xbf16>, vector<8x8x8xbf16>, vector<8x8x8xf32> -> vector<8x8x8xf32>
    "tpu.trace_stop"() : () -> ()
    %147 = arith.truncf %146 : vector<8x8x8xf32> to vector<8x8x8xbf16>
    %148 = vector.extract_strided_slice %147 {offsets = [0, 0, 0], sizes = [1, 8, 8], strides = [1, 1, 1]} : vector<8x8x8xbf16> to vector<1x8x8xbf16>
    %149 = vector.shape_cast %148 : vector<1x8x8xbf16> to vector<8x8xbf16>
    %150 = vector.extract_strided_slice %147 {offsets = [1, 0, 0], sizes = [1, 8, 8], strides = [1, 1, 1]} : vector<8x8x8xbf16> to vector<1x8x8xbf16>
    %151 = vector.shape_cast %150 : vector<1x8x8xbf16> to vector<8x8xbf16>
    %152 = vector.extract_strided_slice %147 {offsets = [2, 0, 0], sizes = [1, 8, 8], strides = [1, 1, 1]} : vector<8x8x8xbf16> to vector<1x8x8xbf16>
    %153 = vector.shape_cast %152 : vector<1x8x8xbf16> to vector<8x8xbf16>
    %154 = vector.extract_strided_slice %147 {offsets = [3, 0, 0], sizes = [1, 8, 8], strides = [1, 1, 1]} : vector<8x8x8xbf16> to vector<1x8x8xbf16>
    %155 = vector.shape_cast %154 : vector<1x8x8xbf16> to vector<8x8xbf16>
    %156 = vector.extract_strided_slice %147 {offsets = [4, 0, 0], sizes = [1, 8, 8], strides = [1, 1, 1]} : vector<8x8x8xbf16> to vector<1x8x8xbf16>
    %157 = vector.shape_cast %156 : vector<1x8x8xbf16> to vector<8x8xbf16>
    %158 = vector.extract_strided_slice %147 {offsets = [5, 0, 0], sizes = [1, 8, 8], strides = [1, 1, 1]} : vector<8x8x8xbf16> to vector<1x8x8xbf16>
    %159 = vector.shape_cast %158 : vector<1x8x8xbf16> to vector<8x8xbf16>
    %160 = vector.extract_strided_slice %147 {offsets = [6, 0, 0], sizes = [1, 8, 8], strides = [1, 1, 1]} : vector<8x8x8xbf16> to vector<1x8x8xbf16>
    %161 = vector.shape_cast %160 : vector<1x8x8xbf16> to vector<8x8xbf16>
    %162 = vector.extract_strided_slice %147 {offsets = [7, 0, 0], sizes = [1, 8, 8], strides = [1, 1, 1]} : vector<8x8x8xbf16> to vector<1x8x8xbf16>
    %163 = vector.shape_cast %162 : vector<1x8x8xbf16> to vector<8x8xbf16>
    %164 = tpu.concatenate %149, %151, %153, %155, %157, %159, %161, %163 in 1 : vector<8x8xbf16>, vector<8x8xbf16>, vector<8x8xbf16>, vector<8x8xbf16>, vector<8x8xbf16>, vector<8x8xbf16>, vector<8x8xbf16>, vector<8x8xbf16> -> vector<8x64xbf16>
    %cst_48 = arith.constant dense<0.000000e+00> : vector<8x64xf32>
    %165 = tpu.matmul %164, %94, %cst_48 {dimension_numbers = #tpu.dot_dimension_numbers<[1], [0], [0], [1], [0, 0, 1, 1], [], []>} : vector<8x64xbf16>, vector<64x64xbf16>, vector<8x64xf32> -> vector<8x64xf32>
    %166 = vector.broadcast %95 : vector<1x64xf32> to vector<8x64xf32>
    %167 = arith.addf %165, %166 : vector<8x64xf32>
    %168 = arith.addf %167, %90 : vector<8x64xf32>
    %c0_49 = arith.constant 0 : index
    %c0_50 = arith.constant 0 : index
    %169 = vector.load %arg15[%c0_49, %c0_50] : memref<1x64xf32, #tpu.memory_space<vmem>>, vector<1x64xf32>
    %c0_51 = arith.constant 0 : index
    %c0_52 = arith.constant 0 : index
    %170 = vector.load %arg16[%c0_51, %c0_52] : memref<1x64xf32, #tpu.memory_space<vmem>>, vector<1x64xf32>
    %cst_53 = arith.constant dense<0.000000e+00> : vector<8xf32>
    %171 = vector.multi_reduction <add>, %168, %cst_53 [1] : vector<8x64xf32> to vector<8xf32>
    %172 = vector.shape_cast %171 : vector<8xf32> to vector<8x1xf32>
    %cst_54 = arith.constant 6.400000e+01 : f32
    %173 = vector.broadcast %cst_54 : f32 to vector<8x1xf32>
    %174 = arith.divf %172, %173 : vector<8x1xf32>
    %175 = vector.broadcast %174 : vector<8x1xf32> to vector<8x64xf32>
    %176 = arith.subf %168, %175 : vector<8x64xf32>
    %177 = arith.mulf %176, %176 : vector<8x64xf32>
    %cst_55 = arith.constant dense<0.000000e+00> : vector<8xf32>
    %178 = vector.multi_reduction <add>, %177, %cst_55 [1] : vector<8x64xf32> to vector<8xf32>
    %179 = vector.shape_cast %178 : vector<8xf32> to vector<8x1xf32>
    %cst_56 = arith.constant 6.400000e+01 : f32
    %180 = vector.broadcast %cst_56 : f32 to vector<8x1xf32>
    %181 = arith.divf %179, %180 : vector<8x1xf32>
    %182 = vector.broadcast %174 : vector<8x1xf32> to vector<8x64xf32>
    %183 = arith.subf %168, %182 : vector<8x64xf32>
    %cst_57 = arith.constant 9.99999974E-6 : f32
    %184 = vector.broadcast %cst_57 : f32 to vector<8x1xf32>
    %185 = arith.addf %181, %184 : vector<8x1xf32>
    %186 = math.rsqrt %185 : vector<8x1xf32>
    %187 = vector.broadcast %186 : vector<8x1xf32> to vector<8x64xf32>
    %188 = arith.mulf %183, %187 : vector<8x64xf32>
    %189 = vector.broadcast %169 : vector<1x64xf32> to vector<8x64xf32>
    %190 = arith.mulf %188, %189 : vector<8x64xf32>
    %191 = vector.broadcast %170 : vector<1x64xf32> to vector<8x64xf32>
    %192 = arith.addf %190, %191 : vector<8x64xf32>
    %193 = arith.truncf %192 : vector<8x64xf32> to vector<8x64xbf16>
    %c0_58 = arith.constant 0 : index
    %c0_59 = arith.constant 0 : index
    %194 = vector.load %arg17[%c0_58, %c0_59] : memref<64x256xbf16, #tpu.memory_space<vmem>>, vector<64x256xbf16>
    %cst_60 = arith.constant dense<0.000000e+00> : vector<8x256xf32>
    %195 = tpu.matmul %193, %194, %cst_60 {dimension_numbers = #tpu.dot_dimension_numbers<[1], [0], [0], [1], [0, 0, 1, 1], [], []>} : vector<8x64xbf16>, vector<64x256xbf16>, vector<8x256xf32> -> vector<8x256xf32>
    %c0_61 = arith.constant 0 : index
    %c0_62 = arith.constant 0 : index
    %196 = vector.load %arg18[%c0_61, %c0_62] : memref<1x256xf32, #tpu.memory_space<vmem>>, vector<1x256xf32>
    %197 = vector.broadcast %196 : vector<1x256xf32> to vector<8x256xf32>
    %198 = arith.addf %195, %197 : vector<8x256xf32>
    %cst_63 = arith.constant 0.000000e+00 : f32
    %199 = vector.broadcast %cst_63 : f32 to vector<8x256xf32>
    %200 = arith.maximumf %198, %199 : vector<8x256xf32>
    %201 = arith.truncf %200 : vector<8x256xf32> to vector<8x256xbf16>
    %c0_64 = arith.constant 0 : index
    %c0_65 = arith.constant 0 : index
    %202 = vector.load %arg19[%c0_64, %c0_65] : memref<256x64xbf16, #tpu.memory_space<vmem>>, vector<256x64xbf16>
    %cst_66 = arith.constant dense<0.000000e+00> : vector<8x64xf32>
    %203 = tpu.matmul %201, %202, %cst_66 {dimension_numbers = #tpu.dot_dimension_numbers<[1], [0], [0], [1], [0, 0, 1, 1], [], []>} : vector<8x256xbf16>, vector<256x64xbf16>, vector<8x64xf32> -> vector<8x64xf32>
    %c0_67 = arith.constant 0 : index
    %c0_68 = arith.constant 0 : index
    %204 = vector.load %arg20[%c0_67, %c0_68] : memref<1x64xf32, #tpu.memory_space<vmem>>, vector<1x64xf32>
    %205 = vector.broadcast %204 : vector<1x64xf32> to vector<8x64xf32>
    %206 = arith.addf %203, %205 : vector<8x64xf32>
    %207 = arith.addf %206, %192 : vector<8x64xf32>
    %c0_69 = arith.constant 0 : index
    %c0_70 = arith.constant 0 : index
    %208 = vector.load %arg21[%c0_69, %c0_70] : memref<1x64xf32, #tpu.memory_space<vmem>>, vector<1x64xf32>
    %c0_71 = arith.constant 0 : index
    %c0_72 = arith.constant 0 : index
    %209 = vector.load %arg22[%c0_71, %c0_72] : memref<1x64xf32, #tpu.memory_space<vmem>>, vector<1x64xf32>
    %cst_73 = arith.constant dense<0.000000e+00> : vector<8xf32>
    %210 = vector.multi_reduction <add>, %207, %cst_73 [1] : vector<8x64xf32> to vector<8xf32>
    %211 = vector.shape_cast %210 : vector<8xf32> to vector<8x1xf32>
    %cst_74 = arith.constant 6.400000e+01 : f32
    %212 = vector.broadcast %cst_74 : f32 to vector<8x1xf32>
    %213 = arith.divf %211, %212 : vector<8x1xf32>
    %214 = vector.broadcast %213 : vector<8x1xf32> to vector<8x64xf32>
    %215 = arith.subf %207, %214 : vector<8x64xf32>
    %216 = arith.mulf %215, %215 : vector<8x64xf32>
    %cst_75 = arith.constant dense<0.000000e+00> : vector<8xf32>
    %217 = vector.multi_reduction <add>, %216, %cst_75 [1] : vector<8x64xf32> to vector<8xf32>
    %218 = vector.shape_cast %217 : vector<8xf32> to vector<8x1xf32>
    %cst_76 = arith.constant 6.400000e+01 : f32
    %219 = vector.broadcast %cst_76 : f32 to vector<8x1xf32>
    %220 = arith.divf %218, %219 : vector<8x1xf32>
    %221 = vector.broadcast %213 : vector<8x1xf32> to vector<8x64xf32>
    %222 = arith.subf %207, %221 : vector<8x64xf32>
    %cst_77 = arith.constant 9.99999974E-6 : f32
    %223 = vector.broadcast %cst_77 : f32 to vector<8x1xf32>
    %224 = arith.addf %220, %223 : vector<8x1xf32>
    %225 = math.rsqrt %224 : vector<8x1xf32>
    %226 = vector.broadcast %225 : vector<8x1xf32> to vector<8x64xf32>
    %227 = arith.mulf %222, %226 : vector<8x64xf32>
    %228 = vector.broadcast %208 : vector<1x64xf32> to vector<8x64xf32>
    %229 = arith.mulf %227, %228 : vector<8x64xf32>
    %230 = vector.broadcast %209 : vector<1x64xf32> to vector<8x64xf32>
    %231 = arith.addf %229, %230 : vector<8x64xf32>
    %232 = vector.shape_cast %231 : vector<8x64xf32> to vector<1x8x64xf32>
    %c0_78 = arith.constant 0 : index
    %c0_79 = arith.constant 0 : index
    %c0_80 = arith.constant 0 : index
    %233 = vector.load %arg23[%c0_78, %c0_79, %c0_80] : memref<1x8x64xf32, #tpu.memory_space<vmem>>, vector<1x8x64xf32>
    tpu.vector_store %arg23[%c0_78, %c0_79, %c0_80], %232 {strides = array<i32>} : memref<1x8x64xf32, #tpu.memory_space<vmem>>, vector<1x8x64xf32>,
    return
  }
  func.func @transform_0(%arg0: i32) -> (i32, i32, i32) {
    %c0_i32 = arith.constant 0 : i32
    %c0_i32_0 = arith.constant 0 : i32
    %c0_i32_1 = arith.constant 0 : i32
    return %arg0, %c0_i32, %c0_i32_0 : i32, i32, i32
  }
  func.func @transform_1(%arg0: i32) -> (i32, i32, i32) {
    %c0_i32 = arith.constant 0 : i32
    %c0_i32_0 = arith.constant 0 : i32
    %c0_i32_1 = arith.constant 0 : i32
    return %arg0, %c0_i32, %c0_i32_0 : i32, i32, i32
  }
  func.func @transform_2(%arg0: i32) -> (i32, i32, i32) {
    %c0_i32 = arith.constant 0 : i32
    %c0_i32_0 = arith.constant 0 : i32
    %c0_i32_1 = arith.constant 0 : i32
    return %arg0, %c0_i32, %c0_i32_0 : i32, i32, i32
  }
  func.func @transform_3(%arg0: i32) -> (i32, i32, i32) {
    %c0_i32 = arith.constant 0 : i32
    %c0_i32_0 = arith.constant 0 : i32
    %c0_i32_1 = arith.constant 0 : i32
    return %arg0, %c0_i32, %c0_i32_0 : i32, i32, i32
  }
  func.func @transform_4(%arg0: i32) -> (i32, i32) {
    %c0_i32 = arith.constant 0 : i32
    %c0_i32_0 = arith.constant 0 : i32
    %c0_i32_1 = arith.constant 0 : i32
    return %c0_i32, %c0_i32_0 : i32, i32
  }
  func.func @transform_5(%arg0: i32) -> (i32, i32) {
    %c0_i32 = arith.constant 0 : i32
    %c0_i32_0 = arith.constant 0 : i32
    %c0_i32_1 = arith.constant 0 : i32
    return %c0_i32, %c0_i32_0 : i32, i32
  }
  func.func @transform_6(%arg0: i32) -> (i32, i32) {
    %c0_i32 = arith.constant 0 : i32
    %c0_i32_0 = arith.constant 0 : i32
    %c0_i32_1 = arith.constant 0 : i32
    return %c0_i32, %c0_i32_0 : i32, i32
  }
  func.func @transform_7(%arg0: i32) -> (i32, i32) {
    %c0_i32 = arith.constant 0 : i32
    %c0_i32_0 = arith.constant 0 : i32
    %c0_i32_1 = arith.constant 0 : i32
    return %c0_i32, %c0_i32_0 : i32, i32
  }
  func.func @transform_8(%arg0: i32) -> (i32, i32) {
    %c0_i32 = arith.constant 0 : i32
    %c0_i32_0 = arith.constant 0 : i32
    %c0_i32_1 = arith.constant 0 : i32
    return %c0_i32, %c0_i32_0 : i32, i32
  }
  func.func @transform_9(%arg0: i32) -> (i32, i32) {
    %c0_i32 = arith.constant 0 : i32
    %c0_i32_0 = arith.constant 0 : i32
    %c0_i32_1 = arith.constant 0 : i32
    return %c0_i32, %c0_i32_0 : i32, i32
  }
  func.func @transform_10(%arg0: i32) -> (i32, i32) {
    %c0_i32 = arith.constant 0 : i32
    %c0_i32_0 = arith.constant 0 : i32
    %c0_i32_1 = arith.constant 0 : i32
    return %c0_i32, %c0_i32_0 : i32, i32
  }
  func.func @transform_11(%arg0: i32) -> (i32, i32) {
    %c0_i32 = arith.constant 0 : i32
    %c0_i32_0 = arith.constant 0 : i32
    %c0_i32_1 = arith.constant 0 : i32
    return %c0_i32, %c0_i32_0 : i32, i32
  }
  func.func @transform_12(%arg0: i32) -> (i32, i32) {
    %c0_i32 = arith.constant 0 : i32
    %c0_i32_0 = arith.constant 0 : i32
    %c0_i32_1 = arith.constant 0 : i32
    return %c0_i32, %c0_i32_0 : i32, i32
  }
  func.func @transform_13(%arg0: i32) -> (i32, i32) {
    %c0_i32 = arith.constant 0 : i32
    %c0_i32_0 = arith.constant 0 : i32
    %c0_i32_1 = arith.constant 0 : i32
    return %c0_i32, %c0_i32_0 : i32, i32
  }
  func.func @transform_14(%arg0: i32) -> (i32, i32) {
    %c0_i32 = arith.constant 0 : i32
    %c0_i32_0 = arith.constant 0 : i32
    %c0_i32_1 = arith.constant 0 : i32
    return %c0_i32, %c0_i32_0 : i32, i32
  }
  func.func @transform_15(%arg0: i32) -> (i32, i32) {
    %c0_i32 = arith.constant 0 : i32
    %c0_i32_0 = arith.constant 0 : i32
    %c0_i32_1 = arith.constant 0 : i32
    return %c0_i32, %c0_i32_0 : i32, i32
  }
  func.func @transform_16(%arg0: i32) -> (i32, i32) {
    %c0_i32 = arith.constant 0 : i32
    %c0_i32_0 = arith.constant 0 : i32
    %c0_i32_1 = arith.constant 0 : i32
    return %c0_i32, %c0_i32_0 : i32, i32
  }
  func.func @transform_17(%arg0: i32) -> (i32, i32) {
    %c0_i32 = arith.constant 0 : i32
    %c0_i32_0 = arith.constant 0 : i32
    %c0_i32_1 = arith.constant 0 : i32
    return %c0_i32, %c0_i32_0 : i32, i32
  }
  func.func @transform_18(%arg0: i32) -> (i32, i32) {
    %c0_i32 = arith.constant 0 : i32
    %c0_i32_0 = arith.constant 0 : i32
    %c0_i32_1 = arith.constant 0 : i32
    return %c0_i32, %c0_i32_0 : i32, i32
  }
  func.func @transform_19(%arg0: i32) -> (i32, i32) {
    %c0_i32 = arith.constant 0 : i32
    %c0_i32_0 = arith.constant 0 : i32
    %c0_i32_1 = arith.constant 0 : i32
    return %c0_i32, %c0_i32_0 : i32, i32
  }
  func.func @transform_20(%arg0: i32) -> (i32, i32) {
    %c0_i32 = arith.constant 0 : i32
    %c0_i32_0 = arith.constant 0 : i32
    %c0_i32_1 = arith.constant 0 : i32
    return %c0_i32, %c0_i32_0 : i32, i32
  }
  func.func @transform_21(%arg0: i32) -> (i32, i32) {
    %c0_i32 = arith.constant 0 : i32
    %c0_i32_0 = arith.constant 0 : i32
    %c0_i32_1 = arith.constant 0 : i32
    return %c0_i32, %c0_i32_0 : i32, i32
  }
  func.func @transform_22(%arg0: i32) -> (i32, i32, i32) {
    %c0_i32 = arith.constant 0 : i32
    %c0_i32_0 = arith.constant 0 : i32
    %c0_i32_1 = arith.constant 0 : i32
    return %arg0, %c0_i32, %c0_i32_0 : i32, i32, i32
  }
}

</mosaic_0001>

<llo_original>
// kernel: tpu_custom_call.1
$region0: #{tpu_custom_call.1}
  #allocation0 [shape = 'u32[]', space=smem, size = 0x4, offset = 0x4, fixed_abs, tag = 'smem constant byte address 0x4 - core index']
  #allocation1 [shape = 'u32[144,128]{1,0:T(1,128)}', space=vmem, size = 0x12000, scoped, tag = 'internal scratch']
  %s0 = inlined_call_operand.vmem [shape: f32[2,8,64], index: 0, kind: input, shape index: {}]
  %s1 = inlined_call_operand.vmem [shape: f32[2,8,64], index: 1, kind: input, shape index: {}]
  %s2 = inlined_call_operand.vmem [shape: f32[2,8,64], index: 2, kind: input, shape index: {}]
  %s3 = inlined_call_operand.vmem [shape: f32[2,8,8], index: 3, kind: input, shape index: {}]
  %s4 = inlined_call_operand.vmem [shape: bf16[8,24], index: 4, kind: input, shape index: {}]
  %s5 = inlined_call_operand.vmem [shape: bf16[64,64], index: 5, kind: input, shape index: {}]
  %s6 = inlined_call_operand.hbm [shape: f32[1,64], index: 6, kind: input, shape index: {}]
  %s7 = inlined_call_operand.hbm [shape: f32[1,64], index: 7, kind: input, shape index: {}]
  %s8 = inlined_call_operand.hbm [shape: f32[1,64], index: 8, kind: input, shape index: {}]
  %s9 = inlined_call_operand.hbm [shape: bf16[8,8], index: 9, kind: input, shape index: {}]
  %s10 = inlined_call_operand.hbm [shape: bf16[8,8], index: 10, kind: input, shape index: {}]
  %s11 = inlined_call_operand.hbm [shape: bf16[8,8], index: 11, kind: input, shape index: {}]
  %s12 = inlined_call_operand.vmem [shape: bf16[64,64], index: 12, kind: input, shape index: {}]
  %s13 = inlined_call_operand.hbm [shape: f32[1,64], index: 13, kind: input, shape index: {}]
  %s14 = inlined_call_operand.hbm [shape: f32[1,64], index: 14, kind: input, shape index: {}]
  %s15 = inlined_call_operand.hbm [shape: f32[1,64], index: 15, kind: input, shape index: {}]
  %s16 = inlined_call_operand.vmem [shape: bf16[64,256], index: 16, kind: input, shape index: {}]
  %s17 = inlined_call_operand.hbm [shape: f32[1,256], index: 17, kind: input, shape index: {}]
  %s18 = inlined_call_operand.vmem [shape: bf16[256,64], index: 18, kind: input, shape index: {}]
  %s19 = inlined_call_operand.vmem [shape: f32[1,64], index: 19, kind: input, shape index: {}]
  %s20 = inlined_call_operand.vmem [shape: f32[1,64], index: 20, kind: input, shape index: {}]
  %s21 = inlined_call_operand.vmem [shape: f32[1,64], index: 21, kind: input, shape index: {}]
  %s22 = inlined_call_operand.hbm [shape: f32[2,8,64], index: 22, kind: output, shape index: {}]
  %s23 = sld [smem:[#allocation0]]
  $region161: #{tpu_custom_call.1} parent=0
    _
  %s25 = ssub.s32 1, %s23
  %s26 = scalar_select 0, %s25, %s23
  $region1: #{tpu_custom_call.1} parent=0
    #allocation2 [shape = 'u8[512]{0}', space=vmem, size = 0x400, scoped, tag = 'input window, operand 6, single buffered']
    #allocation3 [shape = 's32[2]{0}', space=sflag, size = 0x8, scoped, tag = 'scoped memory for tpu_custom_call.1']
    #allocation4 [shape = 's32[2]{0}', space=sflag, size = 0x8, scoped, tag = 'scoped memory for tpu_custom_call.1']
    #allocation5 [shape = 'u8[512]{0}', space=vmem, size = 0x400, scoped, tag = 'input window, operand 7, single buffered']
    #allocation6 [shape = 's32[1]{0}', space=sflag, size = 0x4, scoped, tag = 'scoped memory for tpu_custom_call.1']
    #allocation7 [shape = 'u8[512]{0}', space=vmem, size = 0x400, scoped, tag = 'input window, operand 8, single buffered']
    #allocation8 [shape = 'u8[2048]{0}', space=vmem, size = 0x800, scoped, tag = 'input window, operand 9, single buffered']
    #allocation9 [shape = 's32[1]{0}', space=sflag, size = 0x4, scoped, tag = 'scoped memory for tpu_custom_call.1']
    #allocation10 [shape = 'u8[2048]{0}', space=vmem, size = 0x800, scoped, tag = 'input window, operand 10, single buffered']
    #allocation11 [shape = 'u8[2048]{0}', space=vmem, size = 0x800, scoped, tag = 'input window, operand 11, single buffered']
    #allocation12 [shape = 's32[1]{0}', space=sflag, size = 0x4, scoped, tag = 'scoped memory for tpu_custom_call.1']
    #allocation13 [shape = 'u8[512]{0}', space=vmem, size = 0x400, scoped, tag = 'input window, operand 13, single buffered']
    #allocation14 [shape = 'u8[512]{0}', space=vmem, size = 0x400, scoped, tag = 'input window, operand 14, single buffered']
    #allocation15 [shape = 's32[1]{0}', space=sflag, size = 0x4, scoped, tag = 'scoped memory for tpu_custom_call.1']
    #allocation16 [shape = 'u8[512]{0}', space=vmem, size = 0x400, scoped, tag = 'input window, operand 15, single buffered']
    #allocation17 [shape = 'u8[1024]{0}', space=vmem, size = 0x400, scoped, tag = 'input window, operand 17, single buffered']
    #allocation18 [shape = 's32[1]{0}', space=sflag, size = 0x4, scoped, tag = 'scoped memory for tpu_custom_call.1']
    #allocation19 [shape = 'u8[8192]{0}', space=vmem, size = 0x2000, scoped, tag = 'output window, operand 0']
    %27 = vsyncpa [#allocation3], 0
    %28 = vsyncpa [#allocation6], 0
    %29 = vsyncpa [#allocation9], 0
    %30 = vsyncpa [#allocation12], 0
    %31 = vsyncpa [#allocation15], 0
    %32 = vsyncpa [#allocation18], 0
    %33 = vsyncpa [#allocation4], 0
    %s34 = scalar_lea.sflag [#allocation4], 1
    %35 = vsyncpa %s34, 0
    loop: start=0, step=1, limit=4
    $region2: #{tpu_custom_call.1} parent=1 // loop_pre_header
      _
    $region3: #{tpu_custom_call.1} parent=1 // loop_header
      %s37 = sphi 0, %s41
      %p38 = scmp.ge.s32.totalorder %s37, 4
      %s47 = sphi 0, %s49
      %s50 = sphi 0, %s47
      %s51 = sphi 0, %s50
      %s67 = sphi 0, %s51
      %s73 = sphi 0, %s75
      %s76 = sphi 0, %s73
      %s77 = sphi 0, %s76
      %s93 = sphi 0, %s77
      %s99 = sphi 0, %s101
      %s102 = sphi 0, %s99
      %s103 = sphi 0, %s102
      %s119 = sphi 0, %s103
      %s125 = sphi 0, %s127
      %s128 = sphi 0, %s125
      %s129 = sphi 0, %s128
      %s145 = sphi 0, %s129
      %s149 = sphi 0, %s149
      %s151 = sphi 0, %s149
      %s152 = sphi 0, %s151
      %s166 = sphi 0, %s152
      %s170 = sphi 0, %s170
      %s172 = sphi 0, %s170
      %s173 = sphi 0, %s172
      %s187 = sphi 0, %s173
      %s191 = sphi 0, %s191
      %s193 = sphi 0, %s191
      %s194 = sphi 0, %s193
      %s208 = sphi 0, %s194
      %s212 = sphi 0, %s212
      %s214 = sphi 0, %s212
      %s215 = sphi 0, %s214
      %s229 = sphi 0, %s215
      %s233 = sphi 0, %s233
      %s235 = sphi 0, %s233
      %s236 = sphi 0, %s235
      %s250 = sphi 0, %s236
      %s254 = sphi 0, %s254
      %s256 = sphi 0, %s254
      %s257 = sphi 0, %s256
      %s271 = sphi 0, %s257
      %s275 = sphi 0, %s275
      %s277 = sphi 0, %s275
      %s278 = sphi 0, %s277
      %s292 = sphi 0, %s278
      %s296 = sphi 0, %s296
      %s298 = sphi 0, %s296
      %s299 = sphi 0, %s298
      %s313 = sphi 0, %s299
      %s317 = sphi 0, %s317
      %s319 = sphi 0, %s317
      %s320 = sphi 0, %s319
      %s334 = sphi 0, %s320
      %s338 = sphi 0, %s338
      %s340 = sphi 0, %s338
      %s341 = sphi 0, %s340
      %s355 = sphi 0, %s341
      %s359 = sphi 0, %s359
      %s361 = sphi 0, %s359
      %s362 = sphi 0, %s361
      %s376 = sphi 0, %s362
      %s380 = sphi 0, %s380
      %s382 = sphi 0, %s380
      %s383 = sphi 0, %s382
      %s397 = sphi 0, %s383
      %s401 = sphi 0, %s401
      %s403 = sphi 0, %s401
      %s404 = sphi 0, %s403
      %s418 = sphi 0, %s404
      %s422 = sphi 0, %s422
      %s424 = sphi 0, %s422
      %s425 = sphi 0, %s424
      %s439 = sphi 0, %s425
      %s443 = sphi 0, %s443
      %s445 = sphi 0, %s443
      %s446 = sphi 0, %s445
      %s460 = sphi 0, %s446
      %s464 = sphi 0, %s464
      %s466 = sphi 0, %s464
      %s467 = sphi 0, %s466
      %s481 = sphi 0, %s467
      %s485 = sphi 0, %s485
      %s487 = sphi 0, %s485
      %s488 = sphi 0, %s487
      %s502 = sphi 0, %s488
      %s506 = sphi 0, %s506
      %s508 = sphi 0, %s506
      %s509 = sphi 0, %s508
      %s523 = sphi 0, %s509
      %s529 = sphi 0, %s531
      %s532 = sphi 0, %s529
      %s533 = sphi 0, %s532
      %s549 = sphi 0, %s533
    $region4: #{tpu_custom_call.1} parent=1 // loop_header_branch
      %40 = sbr.rel (%p38) target = $region8
    $region5: #{tpu_custom_call.1} parent=1 // loop_body
      %s42 = ssub.s32 %s37, 1
      %s43 = ssub.s32 %s37, 2
      %s44 = sadd.s32 %s37, 1
      %s45 = ssub.s32 %s37, %s44
      %p46 = scmp.eq.s32.totalorder %s45, 0
      %s48 = sadd.s32 %s47, 1
      %s49 = scalar_select %p46, %s47, %s48
      %p52 = pneg %p46
      %p53 = scmp.eq.s32.totalorder %s37, 1
      %p54 = por %p52, %p53
      %p55 = scmp.ne.s32.totalorder %s47, %s50
      %p56 = scmp.eq.s32.totalorder %s37, 0
      %p57 = por %p55, %p56
      %p58 = scmp.ne.s32.totalorder %s47, %s50
      %p59 = scmp.eq.s32.totalorder %s42, 1
      %p60 = por %p58, %p59
      %p61 = scmp.ne.s32.totalorder %s50, %s51
      %p62 = scmp.eq.s32.totalorder %s42, 0
      %p63 = por %p61, %p62
      %p64 = scmp.ne.s32.totalorder %s50, %s51
      %p65 = scmp.eq.s32.totalorder %s43, 1
      %p66 = por %p64, %p65
      %p68 = scmp.ne.s32.totalorder %s51, %s67
      %p69 = scmp.eq.s32.totalorder %s43, 0
      %p70 = por %p68, %p69
      %s71 = ssub.s32 %s37, %s44
      %p72 = scmp.eq.s32.totalorder %s71, 0
      %s74 = sadd.s32 %s73, 1
      %s75 = scalar_select %p72, %s73, %s74
      %p78 = pneg %p72
      %p79 = scmp.eq.s32.totalorder %s37, 1
      %p80 = por %p78, %p79
      %p81 = scmp.ne.s32.totalorder %s73, %s76
      %p82 = scmp.eq.s32.totalorder %s37, 0
      %p83 = por %p81, %p82
      %p84 = scmp.ne.s32.totalorder %s73, %s76
      %p85 = scmp.eq.s32.totalorder %s42, 1
      %p86 = por %p84, %p85
      %p87 = scmp.ne.s32.totalorder %s76, %s77
      %p88 = scmp.eq.s32.totalorder %s42, 0
      %p89 = por %p87, %p88
      %p90 = scmp.ne.s32.totalorder %s76, %s77
      %p91 = scmp.eq.s32.totalorder %s43, 1
      %p92 = por %p90, %p91
      %p94 = scmp.ne.s32.totalorder %s77, %s93
      %p95 = scmp.eq.s32.totalorder %s43, 0
      %p96 = por %p94, %p95
      %s97 = ssub.s32 %s37, %s44
      %p98 = scmp.eq.s32.totalorder %s97, 0
      %s100 = sadd.s32 %s99, 1
      %s101 = scalar_select %p98, %s99, %s100
      %p104 = pneg %p98
      %p105 = scmp.eq.s32.totalorder %s37, 1
      %p106 = por %p104, %p105
      %p107 = scmp.ne.s32.totalorder %s99, %s102
      %p108 = scmp.eq.s32.totalorder %s37, 0
      %p109 = por %p107, %p108
      %p110 = scmp.ne.s32.totalorder %s99, %s102
      %p111 = scmp.eq.s32.totalorder %s42, 1
      %p112 = por %p110, %p111
      %p113 = scmp.ne.s32.totalorder %s102, %s103
      %p114 = scmp.eq.s32.totalorder %s42, 0
      %p115 = por %p113, %p114
      %p116 = scmp.ne.s32.totalorder %s102, %s103
      %p117 = scmp.eq.s32.totalorder %s43, 1
      %p118 = por %p116, %p117
      %p120 = scmp.ne.s32.totalorder %s103, %s119
      %p121 = scmp.eq.s32.totalorder %s43, 0
      %p122 = por %p120, %p121
      %s123 = ssub.s32 %s37, %s44
      %p124 = scmp.eq.s32.totalorder %s123, 0
      %s126 = sadd.s32 %s125, 1
      %s127 = scalar_select %p124, %s125, %s126
      %p130 = pneg %p124
      %p131 = scmp.eq.s32.totalorder %s37, 1
      %p132 = por %p130, %p131
      %p133 = scmp.ne.s32.totalorder %s125, %s128
      %p134 = scmp.eq.s32.totalorder %s37, 0
      %p135 = por %p133, %p134
      %p136 = scmp.ne.s32.totalorder %s125, %s128
      %p137 = scmp.eq.s32.totalorder %s42, 1
      %p138 = por %p136, %p137
      %p139 = scmp.ne.s32.totalorder %s128, %s129
      %p140 = scmp.eq.s32.totalorder %s42, 0
      %p141 = por %p139, %p140
      %p142 = scmp.ne.s32.totalorder %s128, %s129
      %p143 = scmp.eq.s32.totalorder %s43, 1
      %p144 = por %p142, %p143
      %p146 = scmp.ne.s32.totalorder %s129, %s145
      %p147 = scmp.eq.s32.totalorder %s43, 0
      %p148 = por %p146, %p147
      %s150 = sadd.s32 %s149, 1
      %p153 = scmp.eq.s32.totalorder %s37, 1
      %p154 = scmp.ne.s32.totalorder %s149, %s151
      %p155 = scmp.eq.s32.totalorder %s37, 0
      %p156 = por %p154, %p155
      %p157 = scmp.ne.s32.totalorder %s149, %s151
      %p158 = scmp.eq.s32.totalorder %s42, 1
      %p159 = por %p157, %p158
      %p160 = scmp.ne.s32.totalorder %s151, %s152
      %p161 = scmp.eq.s32.totalorder %s42, 0
      %p162 = por %p160, %p161
      %p163 = scmp.ne.s32.totalorder %s151, %s152
      %p164 = scmp.eq.s32.totalorder %s43, 1
      %p165 = por %p163, %p164
      %p167 = scmp.ne.s32.totalorder %s152, %s166
      %p168 = scmp.eq.s32.totalorder %s43, 0
      %p169 = por %p167, %p168
      %s171 = sadd.s32 %s170, 1
      %p174 = scmp.eq.s32.totalorder %s37, 1
      %p175 = scmp.ne.s32.totalorder %s170, %s172
      %p176 = scmp.eq.s32.totalorder %s37, 0
      %p177 = por %p175, %p176
      %p178 = scmp.ne.s32.totalorder %s170, %s172
      %p179 = scmp.eq.s32.totalorder %s42, 1
      %p180 = por %p178, %p179
      %p181 = scmp.ne.s32.totalorder %s172, %s173
      %p182 = scmp.eq.s32.totalorder %s42, 0
      %p183 = por %p181, %p182
      %p184 = scmp.ne.s32.totalorder %s172, %s173
      %p185 = scmp.eq.s32.totalorder %s43, 1
      %p186 = por %p184, %p185
      %p188 = scmp.ne.s32.totalorder %s173, %s187
      %p189 = scmp.eq.s32.totalorder %s43, 0
      %p190 = por %p188, %p189
      %s192 = sadd.s32 %s191, 1
      %p195 = scmp.eq.s32.totalorder %s37, 1
      %p196 = scmp.ne.s32.totalorder %s191, %s193
      %p197 = scmp.eq.s32.totalorder %s37, 0
      %p198 = por %p196, %p197
      %p199 = scmp.ne.s32.totalorder %s191, %s193
      %p200 = scmp.eq.s32.totalorder %s42, 1
      %p201 = por %p199, %p200
      %p202 = scmp.ne.s32.totalorder %s193, %s194
      %p203 = scmp.eq.s32.totalorder %s42, 0
      %p204 = por %p202, %p203
      %p205 = scmp.ne.s32.totalorder %s193, %s194
      %p206 = scmp.eq.s32.totalorder %s43, 1
      %p207 = por %p205, %p206
      %p209 = scmp.ne.s32.totalorder %s194, %s208
      %p210 = scmp.eq.s32.totalorder %s43, 0
      %p211 = por %p209, %p210
      %s213 = sadd.s32 %s212, 1
      %p216 = scmp.eq.s32.totalorder %s37, 1
      %p217 = scmp.ne.s32.totalorder %s212, %s214
      %p218 = scmp.eq.s32.totalorder %s37, 0
      %p219 = por %p217, %p218
      %p220 = scmp.ne.s32.totalorder %s212, %s214
      %p221 = scmp.eq.s32.totalorder %s42, 1
      %p222 = por %p220, %p221
      %p223 = scmp.ne.s32.totalorder %s214, %s215
      %p224 = scmp.eq.s32.totalorder %s42, 0
      %p225 = por %p223, %p224
      %p226 = scmp.ne.s32.totalorder %s214, %s215
      %p227 = scmp.eq.s32.totalorder %s43, 1
      %p228 = por %p226, %p227
      %p230 = scmp.ne.s32.totalorder %s215, %s229
      %p231 = scmp.eq.s32.totalorder %s43, 0
      %p232 = por %p230, %p231
      %s234 = sadd.s32 %s233, 1
      %p237 = scmp.eq.s32.totalorder %s37, 1
      %p238 = scmp.ne.s32.totalorder %s233, %s235
      %p239 = scmp.eq.s32.totalorder %s37, 0
      %p240 = por %p238, %p239
      %p241 = scmp.ne.s32.totalorder %s233, %s235
      %p242 = scmp.eq.s32.totalorder %s42, 1
      %p243 = por %p241, %p242
      %p244 = scmp.ne.s32.totalorder %s235, %s236
      %p245 = scmp.eq.s32.totalorder %s42, 0
      %p246 = por %p244, %p245
      %p247 = scmp.ne.s32.totalorder %s235, %s236
      %p248 = scmp.eq.s32.totalorder %s43, 1
      %p249 = por %p247, %p248
      %p251 = scmp.ne.s32.totalorder %s236, %s250
      %p252 = scmp.eq.s32.totalorder %s43, 0
      %p253 = por %p251, %p252
      %s255 = sadd.s32 %s254, 1
      %p258 = scmp.eq.s32.totalorder %s37, 1
      %p259 = scmp.ne.s32.totalorder %s254, %s256
      %p260 = scmp.eq.s32.totalorder %s37, 0
      %p261 = por %p259, %p260
      %p262 = scmp.ne.s32.totalorder %s254, %s256
      %p263 = scmp.eq.s32.totalorder %s42, 1
      %p264 = por %p262, %p263
      %p265 = scmp.ne.s32.totalorder %s256, %s257
      %p266 = scmp.eq.s32.totalorder %s42, 0
      %p267 = por %p265, %p266
      %p268 = scmp.ne.s32.totalorder %s256, %s257
      %p269 = scmp.eq.s32.totalorder %s43, 1
      %p270 = por %p268, %p269
      %p272 = scmp.ne.s32.totalorder %s257, %s271
      %p273 = scmp.eq.s32.totalorder %s43, 0
      %p274 = por %p272, %p273
      %s276 = sadd.s32 %s275, 1
      %p279 = scmp.eq.s32.totalorder %s37, 1
      %p280 = scmp.ne.s32.totalorder %s275, %s277
      %p281 = scmp.eq.s32.totalorder %s37, 0
      %p282 = por %p280, %p281
      %p283 = scmp.ne.s32.totalorder %s275, %s277
      %p284 = scmp.eq.s32.totalorder %s42, 1
      %p285 = por %p283, %p284
      %p286 = scmp.ne.s32.totalorder %s277, %s278
      %p287 = scmp.eq.s32.totalorder %s42, 0
      %p288 = por %p286, %p287
      %p289 = scmp.ne.s32.totalorder %s277, %s278
      %p290 = scmp.eq.s32.totalorder %s43, 1
      %p291 = por %p289, %p290
      %p293 = scmp.ne.s32.totalorder %s278, %s292
      %p294 = scmp.eq.s32.totalorder %s43, 0
      %p295 = por %p293, %p294
      %s297 = sadd.s32 %s296, 1
      %p300 = scmp.eq.s32.totalorder %s37, 1
      %p301 = scmp.ne.s32.totalorder %s296, %s298
      %p302 = scmp.eq.s32.totalorder %s37, 0
      %p303 = por %p301, %p302
      %p304 = scmp.ne.s32.totalorder %s296, %s298
      %p305 = scmp.eq.s32.totalorder %s42, 1
      %p306 = por %p304, %p305
      %p307 = scmp.ne.s32.totalorder %s298, %s299
      %p308 = scmp.eq.s32.totalorder %s42, 0
      %p309 = por %p307, %p308
      %p310 = scmp.ne.s32.totalorder %s298, %s299
      %p311 = scmp.eq.s32.totalorder %s43, 1
      %p312 = por %p310, %p311
      %p314 = scmp.ne.s32.totalorder %s299, %s313
      %p315 = scmp.eq.s32.totalorder %s43, 0
      %p316 = por %p314, %p315
      %s318 = sadd.s32 %s317, 1
      %p321 = scmp.eq.s32.totalorder %s37, 1
      %p322 = scmp.ne.s32.totalorder %s317, %s319
      %p323 = scmp.eq.s32.totalorder %s37, 0
      %p324 = por %p322, %p323
      %p325 = scmp.ne.s32.totalorder %s317, %s319
      %p326 = scmp.eq.s32.totalorder %s42, 1
      %p327 = por %p325, %p326
      %p328 = scmp.ne.s32.totalorder %s319, %s320
      %p329 = scmp.eq.s32.totalorder %s42, 0
      %p330 = por %p328, %p329
      %p331 = scmp.ne.s32.totalorder %s319, %s320
      %p332 = scmp.eq.s32.totalorder %s43, 1
      %p333 = por %p331, %p332
      %p335 = scmp.ne.s32.totalorder %s320, %s334
      %p336 = scmp.eq.s32.totalorder %s43, 0
      %p337 = por %p335, %p336
      %s339 = sadd.s32 %s338, 1
      %p342 = scmp.eq.s32.totalorder %s37, 1
      %p343 = scmp.ne.s32.totalorder %s338, %s340
      %p344 = scmp.eq.s32.totalorder %s37, 0
      %p345 = por %p343, %p344
      %p346 = scmp.ne.s32.totalorder %s338, %s340
      %p347 = scmp.eq.s32.totalorder %s42, 1
      %p348 = por %p346, %p347
      %p349 = scmp.ne.s32.totalorder %s340, %s341
      %p350 = scmp.eq.s32.totalorder %s42, 0
      %p351 = por %p349, %p350
      %p352 = scmp.ne.s32.totalorder %s340, %s341
      %p353 = scmp.eq.s32.totalorder %s43, 1
      %p354 = por %p352, %p353
      %p356 = scmp.ne.s32.totalorder %s341, %s355
      %p357 = scmp.eq.s32.totalorder %s43, 0
      %p358 = por %p356, %p357
      %s360 = sadd.s32 %s359, 1
      %p363 = scmp.eq.s32.totalorder %s37, 1
      %p364 = scmp.ne.s32.totalorder %s359, %s361
      %p365 = scmp.eq.s32.totalorder %s37, 0
      %p366 = por %p364, %p365
      %p367 = scmp.ne.s32.totalorder %s359, %s361
      %p368 = scmp.eq.s32.totalorder %s42, 1
      %p369 = por %p367, %p368
      %p370 = scmp.ne.s32.totalorder %s361, %s362
      %p371 = scmp.eq.s32.totalorder %s42, 0
      %p372 = por %p370, %p371
      %p373 = scmp.ne.s32.totalorder %s361, %s362
      %p374 = scmp.eq.s32.totalorder %s43, 1
      %p375 = por %p373, %p374
      %p377 = scmp.ne.s32.totalorder %s362, %s376
      %p378 = scmp.eq.s32.totalorder %s43, 0
      %p379 = por %p377, %p378
      %s381 = sadd.s32 %s380, 1
      %p384 = scmp.eq.s32.totalorder %s37, 1
      %p385 = scmp.ne.s32.totalorder %s380, %s382
      %p386 = scmp.eq.s32.totalorder %s37, 0
      %p387 = por %p385, %p386
      %p388 = scmp.ne.s32.totalorder %s380, %s382
      %p389 = scmp.eq.s32.totalorder %s42, 1
      %p390 = por %p388, %p389
      %p391 = scmp.ne.s32.totalorder %s382, %s383
      %p392 = scmp.eq.s32.totalorder %s42, 0
      %p393 = por %p391, %p392
      %p394 = scmp.ne.s32.totalorder %s382, %s383
      %p395 = scmp.eq.s32.totalorder %s43, 1
      %p396 = por %p394, %p395
      %p398 = scmp.ne.s32.totalorder %s383, %s397
      %p399 = scmp.eq.s32.totalorder %s43, 0
      %p400 = por %p398, %p399
      %s402 = sadd.s32 %s401, 1
      %p405 = scmp.eq.s32.totalorder %s37, 1
      %p406 = scmp.ne.s32.totalorder %s401, %s403
      %p407 = scmp.eq.s32.totalorder %s37, 0
      %p408 = por %p406, %p407
      %p409 = scmp.ne.s32.totalorder %s401, %s403
      %p410 = scmp.eq.s32.totalorder %s42, 1
      %p411 = por %p409, %p410
      %p412 = scmp.ne.s32.totalorder %s403, %s404
      %p413 = scmp.eq.s32.totalorder %s42, 0
      %p414 = por %p412, %p413
      %p415 = scmp.ne.s32.totalorder %s403, %s404
      %p416 = scmp.eq.s32.totalorder %s43, 1
      %p417 = por %p415, %p416
      %p419 = scmp.ne.s32.totalorder %s404, %s418
      %p420 = scmp.eq.s32.totalorder %s43, 0
      %p421 = por %p419, %p420
      %s423 = sadd.s32 %s422, 1
      %p426 = scmp.eq.s32.totalorder %s37, 1
      %p427 = scmp.ne.s32.totalorder %s422, %s424
      %p428 = scmp.eq.s32.totalorder %s37, 0
      %p429 = por %p427, %p428
      %p430 = scmp.ne.s32.totalorder %s422, %s424
      %p431 = scmp.eq.s32.totalorder %s42, 1
      %p432 = por %p430, %p431
      %p433 = scmp.ne.s32.totalorder %s424, %s425
      %p434 = scmp.eq.s32.totalorder %s42, 0
      %p435 = por %p433, %p434
      %p436 = scmp.ne.s32.totalorder %s424, %s425
      %p437 = scmp.eq.s32.totalorder %s43, 1
      %p438 = por %p436, %p437
      %p440 = scmp.ne.s32.totalorder %s425, %s439
      %p441 = scmp.eq.s32.totalorder %s43, 0
      %p442 = por %p440, %p441
      %s444 = sadd.s32 %s443, 1
      %p447 = scmp.eq.s32.totalorder %s37, 1
      %p448 = scmp.ne.s32.totalorder %s443, %s445
      %p449 = scmp.eq.s32.totalorder %s37, 0
      %p450 = por %p448, %p449
      %p451 = scmp.ne.s32.totalorder %s443, %s445
      %p452 = scmp.eq.s32.totalorder %s42, 1
      %p453 = por %p451, %p452
      %p454 = scmp.ne.s32.totalorder %s445, %s446
      %p455 = scmp.eq.s32.totalorder %s42, 0
      %p456 = por %p454, %p455
      %p457 = scmp.ne.s32.totalorder %s445, %s446
      %p458 = scmp.eq.s32.totalorder %s43, 1
      %p459 = por %p457, %p458
      %p461 = scmp.ne.s32.totalorder %s446, %s460
      %p462 = scmp.eq.s32.totalorder %s43, 0
      %p463 = por %p461, %p462
      %s465 = sadd.s32 %s464, 1
      %p468 = scmp.eq.s32.totalorder %s37, 1
      %p469 = scmp.ne.s32.totalorder %s464, %s466
      %p470 = scmp.eq.s32.totalorder %s37, 0
      %p471 = por %p469, %p470
      %p472 = scmp.ne.s32.totalorder %s464, %s466
      %p473 = scmp.eq.s32.totalorder %s42, 1
      %p474 = por %p472, %p473
      %p475 = scmp.ne.s32.totalorder %s466, %s467
      %p476 = scmp.eq.s32.totalorder %s42, 0
      %p477 = por %p475, %p476
      %p478 = scmp.ne.s32.totalorder %s466, %s467
      %p479 = scmp.eq.s32.totalorder %s43, 1
      %p480 = por %p478, %p479
      %p482 = scmp.ne.s32.totalorder %s467, %s481
      %p483 = scmp.eq.s32.totalorder %s43, 0
      %p484 = por %p482, %p483
      %s486 = sadd.s32 %s485, 1
      %p489 = scmp.eq.s32.totalorder %s37, 1
      %p490 = scmp.ne.s32.totalorder %s485, %s487
      %p491 = scmp.eq.s32.totalorder %s37, 0
      %p492 = por %p490, %p491
      %p493 = scmp.ne.s32.totalorder %s485, %s487
      %p494 = scmp.eq.s32.totalorder %s42, 1
      %p495 = por %p493, %p494
      %p496 = scmp.ne.s32.totalorder %s487, %s488
      %p497 = scmp.eq.s32.totalorder %s42, 0
      %p498 = por %p496, %p497
      %p499 = scmp.ne.s32.totalorder %s487, %s488
      %p500 = scmp.eq.s32.totalorder %s43, 1
      %p501 = por %p499, %p500
      %p503 = scmp.ne.s32.totalorder %s488, %s502
      %p504 = scmp.eq.s32.totalorder %s43, 0
      %p505 = por %p503, %p504
      %s507 = sadd.s32 %s506, 1
      %p510 = scmp.eq.s32.totalorder %s37, 1
      %p511 = scmp.ne.s32.totalorder %s506, %s508
      %p512 = scmp.eq.s32.totalorder %s37, 0
      %p513 = por %p511, %p512
      %p514 = scmp.ne.s32.totalorder %s506, %s508
      %p515 = scmp.eq.s32.totalorder %s42, 1
      %p516 = por %p514, %p515
      %p517 = scmp.ne.s32.totalorder %s508, %s509
      %p518 = scmp.eq.s32.totalorder %s42, 0
      %p519 = por %p517, %p518
      %p520 = scmp.ne.s32.totalorder %s508, %s509
      %p521 = scmp.eq.s32.totalorder %s43, 1
      %p522 = por %p520, %p521
      %p524 = scmp.ne.s32.totalorder %s509, %s523
      %p525 = scmp.eq.s32.totalorder %s43, 0
      %p526 = por %p524, %p525
      %s527 = ssub.s32 %s37, %s44
      %p528 = scmp.eq.s32.totalorder %s527, 0
      %s530 = sadd.s32 %s529, 1
      %s531 = scalar_select %p528, %s529, %s530
      %p534 = pneg %p528
      %p535 = scmp.eq.s32.totalorder %s37, 1
      %p536 = por %p534, %p535
      %p537 = scmp.ne.s32.totalorder %s529, %s532
      %p538 = scmp.eq.s32.totalorder %s37, 0
      %p539 = por %p537, %p538
      %p540 = scmp.ne.s32.totalorder %s529, %s532
      %p541 = scmp.eq.s32.totalorder %s42, 1
      %p542 = por %p540, %p541
      %p543 = scmp.ne.s32.totalorder %s532, %s533
      %p544 = scmp.eq.s32.totalorder %s42, 0
      %p545 = por %p543, %p544
      %p546 = scmp.ne.s32.totalorder %s532, %s533
      %p547 = scmp.eq.s32.totalorder %s43, 1
      %p548 = por %p546, %p547
      %p550 = scmp.ne.s32.totalorder %s533, %s549
      %p551 = scmp.eq.s32.totalorder %s43, 0
      %p552 = por %p550, %p551
      %p553 = scmp.le.s32.totalorder 1, %s37
      %p554 = scmp.lt.s32.totalorder %s37, 3
      %p555 = pnand %p553, %p554
      %p556 = pneg %p555
      // Predicated region
      $region9: #{tpu_custom_call.1} parent=5 // pred_check
        _
      $region10: #{tpu_custom_call.1} parent=5 // pred_check_branch
        %558 = sbr.rel (%p555) target = $region12
      $region11: #{tpu_custom_call.1} parent=5 // pred_region
        %s559 = ssub.s32 %s37, 1
        // Predicated region
        $region13: #{tpu_custom_call.1} parent=11 // pred_check
          %p560 = pneg %p162
        $region14: #{tpu_custom_call.1} parent=11 // pred_check_branch
          %562 = sbr.rel (%p560) target = $region16
        $region15: #{tpu_custom_call.1} parent=11 // pred_region
          _
        $region16: #{tpu_custom_call.1} parent=11 // pred_fallthru
          _
        // Predicated region
        $region17: #{tpu_custom_call.1} parent=11 // pred_check
          %p563 = pneg %p183
        $region18: #{tpu_custom_call.1} parent=11 // pred_check_branch
          %565 = sbr.rel (%p563) target = $region20
        $region19: #{tpu_custom_call.1} parent=11 // pred_region
          _
        $region20: #{tpu_custom_call.1} parent=11 // pred_fallthru
          _
        // Predicated region
        $region21: #{tpu_custom_call.1} parent=11 // pred_check
          %p566 = pneg %p204
        $region22: #{tpu_custom_call.1} parent=11 // pred_check_branch
          %568 = sbr.rel (%p566) target = $region24
        $region23: #{tpu_custom_call.1} parent=11 // pred_region
          %s570 = ssub.s32 16, 16
          %571 = vsyncadd [#allocation3], %s570
          %s573 = sshll.u32 [#allocation2], 4
          %s574 = int_to_ptr.vmem [resolvable:$true] %s573
          %576 = dma.hbm_to_vmem [thread:$0]  %s6, 16, %s574, [#allocation3]
        $region24: #{tpu_custom_call.1} parent=11 // pred_fallthru
          _
        // Predicated region
        $region25: #{tpu_custom_call.1} parent=11 // pred_check
          %p577 = pneg %p225
        $region26: #{tpu_custom_call.1} parent=11 // pred_check_branch
          %579 = sbr.rel (%p577) target = $region28
        $region27: #{tpu_custom_call.1} parent=11 // pred_region
          %s581 = ssub.s32 16, 16
          %582 = vsyncadd [#allocation6], %s581
          %s584 = sshll.u32 [#allocation5], 4
          %s585 = int_to_ptr.vmem [resolvable:$true] %s584
          %587 = dma.hbm_to_vmem [thread:$0]  %s7, 16, %s585, [#allocation6]
        $region28: #{tpu_custom_call.1} parent=11 // pred_fallthru
          _
        // Predicated region
        $region29: #{tpu_custom_call.1} parent=11 // pred_check
          %p588 = pneg %p246
        $region30: #{tpu_custom_call.1} parent=11 // pred_check_branch
          %590 = sbr.rel (%p588) target = $region32
        $region31: #{tpu_custom_call.1} parent=11 // pred_region
          %s592 = ssub.s32 16, 16
          %593 = vsyncadd [#allocation6], %s592
          %s595 = sshll.u32 [#allocation7], 4
          %s596 = int_to_ptr.vmem [resolvable:$true] %s595
          %598 = dma.hbm_to_vmem [thread:$0]  %s8, 16, %s596, [#allocation6]
        $region32: #{tpu_custom_call.1} parent=11 // pred_fallthru
          _
        // Predicated region
        $region33: #{tpu_custom_call.1} parent=11 // pred_check
          %p599 = pneg %p267
        $region34: #{tpu_custom_call.1} parent=11 // pred_check_branch
          %601 = sbr.rel (%p599) target = $region36
        $region35: #{tpu_custom_call.1} parent=11 // pred_region
          %s603 = ssub.s32 64, 64
          %604 = vsyncadd [#allocation9], %s603
          %s606 = sshll.u32 [#allocation8], 4
          %s607 = int_to_ptr.vmem [resolvable:$true] %s606
          %609 = dma.hbm_to_vmem [thread:$0]  %s9, 64, %s607, [#allocation9]
        $region36: #{tpu_custom_call.1} parent=11 // pred_fallthru
          _
        // Predicated region
        $region37: #{tpu_custom_call.1} parent=11 // pred_check
          %p610 = pneg %p288
        $region38: #{tpu_custom_call.1} parent=11 // pred_check_branch
          %612 = sbr.rel (%p610) target = $region40
        $region39: #{tpu_custom_call.1} parent=11 // pred_region
          %s614 = ssub.s32 64, 64
          %615 = vsyncadd [#allocation9], %s614
          %s617 = sshll.u32 [#allocation10], 4
          %s618 = int_to_ptr.vmem [resolvable:$true] %s617
          %620 = dma.hbm_to_vmem [thread:$0]  %s10, 64, %s618, [#allocation9]
        $region40: #{tpu_custom_call.1} parent=11 // pred_fallthru
          _
        // Predicated region
        $region41: #{tpu_custom_call.1} parent=11 // pred_check
          %p621 = pneg %p309
        $region42: #{tpu_custom_call.1} parent=11 // pred_check_branch
          %623 = sbr.rel (%p621) target = $region44
        $region43: #{tpu_custom_call.1} parent=11 // pred_region
          %s625 = ssub.s32 64, 64
          %626 = vsyncadd [#allocation12], %s625
          %s628 = sshll.u32 [#allocation11], 4
          %s629 = int_to_ptr.vmem [resolvable:$true] %s628
          %631 = dma.hbm_to_vmem [thread:$0]  %s11, 64, %s629, [#allocation12]
        $region44: #{tpu_custom_call.1} parent=11 // pred_fallthru
          _
        // Predicated region
        $region45: #{tpu_custom_call.1} parent=11 // pred_check
          %p632 = pneg %p330
        $region46: #{tpu_custom_call.1} parent=11 // pred_check_branch
          %634 = sbr.rel (%p632) target = $region48
        $region47: #{tpu_custom_call.1} parent=11 // pred_region
          _
        $region48: #{tpu_custom_call.1} parent=11 // pred_fallthru
          _
        // Predicated region
        $region49: #{tpu_custom_call.1} parent=11 // pred_check
          %p635 = pneg %p351
        $region50: #{tpu_custom_call.1} parent=11 // pred_check_branch
          %637 = sbr.rel (%p635) target = $region52
        $region51: #{tpu_custom_call.1} parent=11 // pred_region
          %s639 = ssub.s32 16, 16
          %640 = vsyncadd [#allocation12], %s639
          %s642 = sshll.u32 [#allocation13], 4
          %s643 = int_to_ptr.vmem [resolvable:$true] %s642
          %645 = dma.hbm_to_vmem [thread:$0]  %s13, 16, %s643, [#allocation12]
        $region52: #{tpu_custom_call.1} parent=11 // pred_fallthru
          _
        // Predicated region
        $region53: #{tpu_custom_call.1} parent=11 // pred_check
          %p646 = pneg %p372
        $region54: #{tpu_custom_call.1} parent=11 // pred_check_branch
          %648 = sbr.rel (%p646) target = $region56
        $region55: #{tpu_custom_call.1} parent=11 // pred_region
          %s650 = ssub.s32 16, 16
          %651 = vsyncadd [#allocation15], %s650
          %s653 = sshll.u32 [#allocation14], 4
          %s654 = int_to_ptr.vmem [resolvable:$true] %s653
          %656 = dma.hbm_to_vmem [thread:$0]  %s14, 16, %s654, [#allocation15]
        $region56: #{tpu_custom_call.1} parent=11 // pred_fallthru
          _
        // Predicated region
        $region57: #{tpu_custom_call.1} parent=11 // pred_check
          %p657 = pneg %p393
        $region58: #{tpu_custom_call.1} parent=11 // pred_check_branch
          %659 = sbr.rel (%p657) target = $region60
        $region59: #{tpu_custom_call.1} parent=11 // pred_region
          %s661 = ssub.s32 16, 16
          %662 = vsyncadd [#allocation15], %s661
          %s664 = sshll.u32 [#allocation16], 4
          %s665 = int_to_ptr.vmem [resolvable:$true] %s664
          %667 = dma.hbm_to_vmem [thread:$0]  %s15, 16, %s665, [#allocation15]
        $region60: #{tpu_custom_call.1} parent=11 // pred_fallthru
          _
        // Predicated region
        $region61: #{tpu_custom_call.1} parent=11 // pred_check
          %p668 = pneg %p414
        $region62: #{tpu_custom_call.1} parent=11 // pred_check_branch
          %670 = sbr.rel (%p668) target = $region64
        $region63: #{tpu_custom_call.1} parent=11 // pred_region
          _
        $region64: #{tpu_custom_call.1} parent=11 // pred_fallthru
          _
        // Predicated region
        $region65: #{tpu_custom_call.1} parent=11 // pred_check
          %p671 = pneg %p435
        $region66: #{tpu_custom_call.1} parent=11 // pred_check_branch
          %673 = sbr.rel (%p671) target = $region68
        $region67: #{tpu_custom_call.1} parent=11 // pred_region
          %s675 = ssub.s32 32, 32
          %676 = vsyncadd [#allocation18], %s675
          %s678 = sshll.u32 [#allocation17], 4
          %s679 = int_to_ptr.vmem [resolvable:$true] %s678
          %681 = dma.hbm_to_vmem [thread:$0]  %s17, 32, %s679, [#allocation18]
        $region68: #{tpu_custom_call.1} parent=11 // pred_fallthru
          _
        // Predicated region
        $region69: #{tpu_custom_call.1} parent=11 // pred_check
          %p682 = pneg %p456
        $region70: #{tpu_custom_call.1} parent=11 // pred_check_branch
          %684 = sbr.rel (%p682) target = $region72
        $region71: #{tpu_custom_call.1} parent=11 // pred_region
          _
        $region72: #{tpu_custom_call.1} parent=11 // pred_fallthru
          _
        // Predicated region
        $region73: #{tpu_custom_call.1} parent=11 // pred_check
          %p685 = pneg %p477
        $region74: #{tpu_custom_call.1} parent=11 // pred_check_branch
          %687 = sbr.rel (%p685) target = $region76
        $region75: #{tpu_custom_call.1} parent=11 // pred_region
          _
        $region76: #{tpu_custom_call.1} parent=11 // pred_fallthru
          _
        // Predicated region
        $region77: #{tpu_custom_call.1} parent=11 // pred_check
          %p688 = pneg %p498
        $region78: #{tpu_custom_call.1} parent=11 // pred_check_branch
          %690 = sbr.rel (%p688) target = $region80
        $region79: #{tpu_custom_call.1} parent=11 // pred_region
          _
        $region80: #{tpu_custom_call.1} parent=11 // pred_fallthru
          _
        // Predicated region
        $region81: #{tpu_custom_call.1} parent=11 // pred_check
          %p691 = pneg %p519
        $region82: #{tpu_custom_call.1} parent=11 // pred_check_branch
          %693 = sbr.rel (%p691) target = $region84
        $region83: #{tpu_custom_call.1} parent=11 // pred_region
          _
        $region84: #{tpu_custom_call.1} parent=11 // pred_fallthru
          _
      $region12: #{tpu_custom_call.1} parent=5 // pred_fallthru
        _
      %p694 = scmp.lt.s32.totalorder %s37, 2
      // Predicated region
      $region85: #{tpu_custom_call.1} parent=5 // pred_check
        %p695 = pneg %p694
      $region86: #{tpu_custom_call.1} parent=5 // pred_check_branch
        %697 = sbr.rel (%p695) target = $region88
      $region87: #{tpu_custom_call.1} parent=5 // pred_region
        // Predicated region
        $region89: #{tpu_custom_call.1} parent=87 // pred_check
          %p698 = pneg %p57
        $region90: #{tpu_custom_call.1} parent=87 // pred_check_branch
          %700 = sbr.rel (%p698) target = $region92
        $region91: #{tpu_custom_call.1} parent=87 // pred_region
          %p701 = scmp.lt.s32.totalorder %s37, 1
          %s702 = scalar_select %p701, %s37, 1
          %s703 = smul.addr %s702, 8
          %s704 = scalar_lea.vmem %s0, %s703
        $region92: #{tpu_custom_call.1} parent=87 // pred_fallthru
          _
        // Predicated region
        $region93: #{tpu_custom_call.1} parent=87 // pred_check
          %p705 = pneg %p83
        $region94: #{tpu_custom_call.1} parent=87 // pred_check_branch
          %707 = sbr.rel (%p705) target = $region96
        $region95: #{tpu_custom_call.1} parent=87 // pred_region
          %p708 = scmp.lt.s32.totalorder %s37, 1
          %s709 = scalar_select %p708, %s37, 1
          %s710 = smul.addr %s709, 8
          %s711 = scalar_lea.vmem %s1, %s710
        $region96: #{tpu_custom_call.1} parent=87 // pred_fallthru
          _
        // Predicated region
        $region97: #{tpu_custom_call.1} parent=87 // pred_check
          %p712 = pneg %p109
        $region98: #{tpu_custom_call.1} parent=87 // pred_check_branch
          %714 = sbr.rel (%p712) target = $region100
        $region99: #{tpu_custom_call.1} parent=87 // pred_region
          %p715 = scmp.lt.s32.totalorder %s37, 1
          %s716 = scalar_select %p715, %s37, 1
          %s717 = smul.addr %s716, 8
          %s718 = scalar_lea.vmem %s2, %s717
        $region100: #{tpu_custom_call.1} parent=87 // pred_fallthru
          _
        // Predicated region
        $region101: #{tpu_custom_call.1} parent=87 // pred_check
          %p719 = pneg %p135
        $region102: #{tpu_custom_call.1} parent=87 // pred_check_branch
          %721 = sbr.rel (%p719) target = $region104
        $region103: #{tpu_custom_call.1} parent=87 // pred_region
          %p722 = scmp.lt.s32.totalorder %s37, 1
          %s723 = scalar_select %p722, %s37, 1
          %s724 = smul.addr %s723, 8
          %s725 = scalar_lea.vmem %s3, %s724
        $region104: #{tpu_custom_call.1} parent=87 // pred_fallthru
          _
      $region88: #{tpu_custom_call.1} parent=5 // pred_fallthru
        _
      %p726 = scmp.le.s32.totalorder 1, %s37
      %p727 = scmp.lt.s32.totalorder %s37, 3
      %p728 = pnand %p726, %p727
      %p729 = pneg %p728
      // Predicated region
      $region105: #{tpu_custom_call.1} parent=5 // pred_check
        _
      $region106: #{tpu_custom_call.1} parent=5 // pred_check_branch
        %731 = sbr.rel (%p728) target = $region108
      $region107: #{tpu_custom_call.1} parent=5 // pred_region
        %s732 = ssub.s32 %s37, 1
        // Predicated region
        $region109: #{tpu_custom_call.1} parent=107 // pred_check
          %p733 = pneg %p204
        $region110: #{tpu_custom_call.1} parent=107 // pred_check_branch
          %735 = sbr.rel (%p733) target = $region112
        $region111: #{tpu_custom_call.1} parent=107 // pred_region
          %736 = dma.done [#allocation3], 16
        $region112: #{tpu_custom_call.1} parent=107 // pred_fallthru
          _
        // Predicated region
        $region113: #{tpu_custom_call.1} parent=107 // pred_check
          %p737 = pneg %p225
        $region114: #{tpu_custom_call.1} parent=107 // pred_check_branch
          %739 = sbr.rel (%p737) target = $region116
        $region115: #{tpu_custom_call.1} parent=107 // pred_region
          %740 = dma.done [#allocation6], 16
        $region116: #{tpu_custom_call.1} parent=107 // pred_fallthru
          _
        // Predicated region
        $region117: #{tpu_custom_call.1} parent=107 // pred_check
          %p741 = pneg %p246
        $region118: #{tpu_custom_call.1} parent=107 // pred_check_branch
          %743 = sbr.rel (%p741) target = $region120
        $region119: #{tpu_custom_call.1} parent=107 // pred_region
          %744 = dma.done [#allocation6], 16
        $region120: #{tpu_custom_call.1} parent=107 // pred_fallthru
          _
        // Predicated region
        $region121: #{tpu_custom_call.1} parent=107 // pred_check
          %p745 = pneg %p267
        $region122: #{tpu_custom_call.1} parent=107 // pred_check_branch
          %747 = sbr.rel (%p745) target = $region124
        $region123: #{tpu_custom_call.1} parent=107 // pred_region
          %748 = dma.done [#allocation9], 64
        $region124: #{tpu_custom_call.1} parent=107 // pred_fallthru
          _
        // Predicated region
        $region125: #{tpu_custom_call.1} parent=107 // pred_check
          %p749 = pneg %p288
        $region126: #{tpu_custom_call.1} parent=107 // pred_check_branch
          %751 = sbr.rel (%p749) target = $region128
        $region127: #{tpu_custom_call.1} parent=107 // pred_region
          %752 = dma.done [#allocation9], 64
        $region128: #{tpu_custom_call.1} parent=107 // pred_fallthru
          _
        // Predicated region
        $region129: #{tpu_custom_call.1} parent=107 // pred_check
          %p753 = pneg %p309
        $region130: #{tpu_custom_call.1} parent=107 // pred_check_branch
          %755 = sbr.rel (%p753) target = $region132
        $region131: #{tpu_custom_call.1} parent=107 // pred_region
          %756 = dma.done [#allocation12], 64
        $region132: #{tpu_custom_call.1} parent=107 // pred_fallthru
          _
        // Predicated region
        $region133: #{tpu_custom_call.1} parent=107 // pred_check
          %p757 = pneg %p351
        $region134: #{tpu_custom_call.1} parent=107 // pred_check_branch
          %759 = sbr.rel (%p757) target = $region136
        $region135: #{tpu_custom_call.1} parent=107 // pred_region
          %760 = dma.done [#allocation12], 16
        $region136: #{tpu_custom_call.1} parent=107 // pred_fallthru
          _
        // Predicated region
        $region137: #{tpu_custom_call.1} parent=107 // pred_check
          %p761 = pneg %p372
        $region138: #{tpu_custom_call.1} parent=107 // pred_check_branch
          %763 = sbr.rel (%p761) target = $region140
        $region139: #{tpu_custom_call.1} parent=107 // pred_region
          %764 = dma.done [#allocation15], 16
        $region140: #{tpu_custom_call.1} parent=107 // pred_fallthru
          _
        // Predicated region
        $region141: #{tpu_custom_call.1} parent=107 // pred_check
          %p765 = pneg %p393
        $region142: #{tpu_custom_call.1} parent=107 // pred_check_branch
          %767 = sbr.rel (%p765) target = $region144
        $region143: #{tpu_custom_call.1} parent=107 // pred_region
          %768 = dma.done [#allocation15], 16
        $region144: #{tpu_custom_call.1} parent=107 // pred_fallthru
          _
        // Predicated region
        $region145: #{tpu_custom_call.1} parent=107 // pred_check
          %p769 = pneg %p435
        $region146: #{tpu_custom_call.1} parent=107 // pred_check_branch
          %771 = sbr.rel (%p769) target = $region148
        $region147: #{tpu_custom_call.1} parent=107 // pred_region
          %772 = dma.done [#allocation18], 32
        $region148: #{tpu_custom_call.1} parent=107 // pred_fallthru
          _
        %p773 = scmp.lt.s32.totalorder %s42, 1
        %s774 = scalar_select %p773, %s42, 1
        %s775 = smul.addr %s774, 8
        %s776 = scalar_lea.vmem %s0, %s775
        %p777 = pneg %p63
        %p778 = pneg %p60
        %p779 = scmp.lt.s32.totalorder %s42, 1
        %s780 = scalar_select %p779, %s42, 1
        %s781 = smul.addr %s780, 8
        %s782 = scalar_lea.vmem %s1, %s781
        %p783 = pneg %p89
        %p784 = pneg %p86
        %p785 = scmp.lt.s32.totalorder %s42, 1
        %s786 = scalar_select %p785, %s42, 1
        %s787 = smul.addr %s786, 8
        %s788 = scalar_lea.vmem %s2, %s787
        %p789 = pneg %p115
        %p790 = pneg %p112
        %p791 = scmp.lt.s32.totalorder %s42, 1
        %s792 = scalar_select %p791, %s42, 1
        %s793 = smul.addr %s792, 8
        %s794 = scalar_lea.vmem %s3, %s793
        %p795 = pneg %p141
        %p796 = pneg %p138
        %p797 = pneg %p162
        %p798 = pneg %p159
        %p799 = pneg %p183
        %p800 = pneg %p180
        %p801 = pneg %p204
        %p802 = pneg %p201
        %p803 = pneg %p225
        %p804 = pneg %p222
        %p805 = pneg %p246
        %p806 = pneg %p243
        %p807 = pneg %p267
        %p808 = pneg %p264
        %p809 = pneg %p288
        %p810 = pneg %p285
        %p811 = pneg %p309
        %p812 = pneg %p306
        %p813 = pneg %p330
        %p814 = pneg %p327
        %p815 = pneg %p351
        %p816 = pneg %p348
        %p817 = pneg %p372
        %p818 = pneg %p369
        %p819 = pneg %p393
        %p820 = pneg %p390
        %p821 = pneg %p414
        %p822 = pneg %p411
        %p823 = pneg %p435
        %p824 = pneg %p432
        %p825 = pneg %p456
        %p826 = pneg %p453
        %p827 = pneg %p477
        %p828 = pneg %p474
        %p829 = pneg %p498
        %p830 = pneg %p495
        %p831 = pneg %p519
        %p832 = pneg %p516
        %p833 = pneg %p545
        %p834 = pneg %p542
        %s835 = sand.u32 %s532, 1
        %s836 = scalar_lea.sflag [#allocation4], %s835
        %s837 = sand.u32 %s532, 1
        %s838 = smul.addr %s837, 8
        %s839 = scalar_lea.vmem [#allocation19], %s838
        %p840 = scmp.lt.s32.totalorder %s42, 1
        %s841 = scalar_select %p840, %s42, 1
        %s842 = smul.addr %s841, 8
        %s843 = scalar_lea.vmem %s0, %s842
        %p844 = scmp.lt.s32.totalorder %s42, 1
        %s845 = scalar_select %p844, %s42, 1
        %s846 = smul.addr %s845, 8
        %s847 = scalar_lea.vmem %s1, %s846
        %p848 = scmp.lt.s32.totalorder %s42, 1
        %s849 = scalar_select %p848, %s42, 1
        %s850 = smul.addr %s849, 8
        %s851 = scalar_lea.vmem %s2, %s850
        %p852 = scmp.lt.s32.totalorder %s42, 1
        %s853 = scalar_select %p852, %s42, 1
        %s854 = smul.addr %s853, 8
        %s855 = scalar_lea.vmem %s3, %s854
        %v857 = vld [vmem:[%s851] sm:$0xff]
        %v858 = vld [vmem:[%s843] sm:$0xff]
        %v859 = vld [vmem:[%s847] sm:$0xff]
        %v860 = vld [vmem:[%s855] sm:$0xff]
        %v861 = vld [vmem:[%s4] sm:$0xf]
        %v862 = vld [vmem:[%s5] sm:$0xf]
        %v863 = vld [vmem:[%s5 + $0x4] sm:$0xf]
        %v864 = vld [vmem:[%s5 + $0x8] sm:$0xf]
        %v865 = vld [vmem:[%s5 + $0xc] sm:$0xf]
        %v866 = vld [vmem:[%s5 + $0x10] sm:$0xf]
        %v867 = vld [vmem:[%s5 + $0x14] sm:$0xf]
        %v868 = vld [vmem:[%s5 + $0x18] sm:$0xf]
        %v869 = vld [vmem:[%s5 + $0x1c] sm:$0xf]
        %v870 = vld [vmem:[#allocation2] sm:$0x1]
        %v871 = vpack.c.bf16 %v857, %v857
        %v873 = vrot.slane %v871, 4
        %874 = vrot.lane.b32.xlu0 %v873, 120
        %v875 = vpop.permute.xlu0 %874
        %876 = vrot.lane.b32.xlu0 %v871, 112
        %v877 = vpop.permute.xlu0 %876
        %878 = vrot.lane.b32.xlu0 %v873, 104
        %v879 = vpop.permute.xlu0 %878
        %880 = vrot.lane.b32.xlu0 %v871, 96
        %v881 = vpop.permute.xlu0 %880
        %882 = vrot.lane.b32.xlu0 %v873, 88
        %v883 = vpop.permute.xlu0 %882
        %884 = vrot.lane.b32.xlu0 %v871, 80
        %v885 = vpop.permute.xlu0 %884
        %886 = vrot.lane.b32.xlu0 %v873, 72
        %v887 = vpop.permute.xlu0 %886
        %vm888 = vcmask 1043456
        %v891 = vsel %vm888, %v871, %v875
        %v894 = vsel %vm888, %v877, %v879
        %v897 = vsel %vm888, %v881, %v883
        %v900 = vsel %vm888, %v885, %v887
        %vm901 = vcmask 64512
        %v902 = vsel %vm901, %v891, 0
        %v904 = vsel %vm901, %v894, 0
        %v906 = vsel %vm901, %v897, 0
        %v908 = vsel %vm901, %v900, 0
        %v911 = vsel %vm888, %v861, 0
        %913 = vmatprep.subr.bf16.mxu0 0
        %914 = vmatpush1.bf16.msra.mxu0 %v911
        %915 = vmatprep.subr.bf16.mxu0 0
        %916 = vmatpush1.bf16.msra.mxu0 0
        %917 = vmatprep.subr.bf16.mxu0 0
        %918 = vmatpush1.bf16.msra.mxu0 0
        %919 = vmatprep.subr.bf16.mxu0 0
        %920 = vmatpush1.bf16.msra.mxu0 0
        %921 = vmatprep.subr.bf16.mxu0 0
        %922 = vmatpush1.bf16.msra.mxu0 0
        %923 = vmatprep.subr.bf16.mxu0 0
        %924 = vmatpush1.bf16.msra.mxu0 0
        %925 = vmatprep.subr.bf16.mxu0 0
        %926 = vmatpush1.bf16.msra.mxu0 0
        %927 = vmatprep.subr.bf16.mxu0 0
        %928 = vmatpush1.bf16.msra.mxu0 0
        %929 = vmatprep.subr.bf16.mxu0 0
        %930 = vmatpush1.bf16.msra.mxu0 0
        %931 = vmatprep.subr.bf16.mxu0 0
        %932 = vmatpush1.bf16.msra.mxu0 0
        %933 = vmatprep.subr.bf16.mxu0 0
        %934 = vmatpush1.bf16.msra.mxu0 0
        %935 = vmatprep.subr.bf16.mxu0 0
        %936 = vmatpush1.bf16.msra.mxu0 0
        %937 = vmatprep.subr.bf16.mxu0 0
        %938 = vmatpush1.bf16.msra.mxu0 0
        %939 = vmatprep.subr.bf16.mxu0 0
        %940 = vmatpush1.bf16.msra.mxu0 0
        %941 = vmatprep.subr.bf16.mxu0 0
        %942 = vmatpush1.bf16.msra.mxu0 0
        %943 = vmatprep.subr.bf16.mxu0 0
        %944 = vmatpush1.bf16.msra.mxu0 0
        %945 = vmatprep.mubr.bf16.mxu0 0
        %946 = vmatmul.mubr.bf16.gmra.mrb[0].mxu0 %v902
        %v947 = vpop.f32.mrb[0].mxu0
        %v948 = vadd.f32 0.0, %v947
        %v949 = vpop.f32.mrb[0].mxu0
        %v950 = vpop.f32.mrb[0].mxu0
        %v951 = vadd.f32 0.0, %v950
        %v952 = vpop.f32.mrb[0].mxu0
        %953 = vmatprep.mubr.bf16.mxu0 0
        %954 = vmatmul.mubr.bf16.gmra.mrb[0].mxu0 %v904
        %v955 = vpop.f32.mrb[0].mxu0
        %v956 = vadd.f32 0.0, %v955
        %v957 = vpop.f32.mrb[0].mxu0
        %v958 = vpop.f32.mrb[0].mxu0
        %v959 = vadd.f32 0.0, %v958
        %v960 = vpop.f32.mrb[0].mxu0
        %961 = vmatprep.mubr.bf16.mxu0 0
        %962 = vmatmul.mubr.bf16.gmra.mrb[0].mxu0 %v906
        %v963 = vpop.f32.mrb[0].mxu0
        %v964 = vadd.f32 0.0, %v963
        %v965 = vpop.f32.mrb[0].mxu0
        %v966 = vpop.f32.mrb[0].mxu0
        %v967 = vadd.f32 0.0, %v966
        %v968 = vpop.f32.mrb[0].mxu0
        %969 = vmatprep.mubr.bf16.mxu0 0
        %970 = vmatmul.mubr.bf16.gmra.mrb[0].mxu0 %v908
        %v971 = vpop.f32.mrb[0].mxu0
        %v972 = vadd.f32 0.0, %v971
        %v973 = vpop.f32.mrb[0].mxu0
        %v974 = vpop.f32.mrb[0].mxu0
        %v975 = vadd.f32 0.0, %v974
        %v976 = vpop.f32.mrb[0].mxu0
        %977 = vdwg.mxu0
        %v978 = vpack.c.bf16 %v951, %v948
        %v979 = vpack.c.bf16 %v959, %v956
        %v980 = vpack.c.bf16 %v967, %v964
        %v981 = vpack.c.bf16 %v975, %v972
        %v986 = vunpack.c.l.b16 %v978
        %v987 = vunpack.c.h.b16 %v978
        %v988 = vunpack.c.l.b16 %v979
        %v989 = vunpack.c.h.b16 %v979
        %v990 = vunpack.c.l.b16 %v980
        %v991 = vunpack.c.h.b16 %v980
        %v992 = vunpack.c.l.b16 %v981
        %v993 = vunpack.c.h.b16 %v981
        %v994 = vpack.c.b16 %v986, %v986
        %v995 = vpack.c.b16 %v987, %v987
        %v996 = vpack.c.b16 %v988, %v988
        %v997 = vpack.c.b16 %v989, %v989
        %v998 = vpack.c.b16 %v990, %v990
        %v999 = vpack.c.b16 %v991, %v991
        %v1000 = vpack.c.b16 %v992, %v992
        %v1001 = vpack.c.b16 %v993, %v993
        %1002 = vrot.lane.b32.xlu0 %v994, 120
        %v1003 = vpop.permute.xlu0 %1002
        %v1005 = vsel %vm901, %v1003, 0
        %v1008 = vsel %vm901, %v994, 0
        %1010 = vmatprep.subr.bf16.mxu0 0
        %1011 = vmatpush1.bf16.xpose.msra.mxu0 %v1008
        %1012 = vmatprep.subr.bf16.mxu0 0
        %1013 = vmatpush1.bf16.xpose.msra.mxu0 0
        %1014 = vmatprep.subr.bf16.mxu0 0
        %1015 = vmatpush1.bf16.xpose.msra.mxu0 0
        %1016 = vmatprep.subr.bf16.mxu0 0
        %1017 = vmatpush1.bf16.xpose.msra.mxu0 0
        %1018 = vmatprep.subr.bf16.mxu0 0
        %1019 = vmatpush1.bf16.xpose.msra.mxu0 0
        %1020 = vmatprep.subr.bf16.mxu0 0
        %1021 = vmatpush1.bf16.xpose.msra.mxu0 0
        %1022 = vmatprep.subr.bf16.mxu0 0
        %1023 = vmatpush1.bf16.xpose.msra.mxu0 0
        %1024 = vmatprep.subr.bf16.mxu0 0
        %1025 = vmatpush1.bf16.xpose.msra.mxu0 0
        %1026 = vmatprep.subr.bf16.mxu0 0
        %1027 = vmatpush1.bf16.xpose.msra.mxu0 0
        %1028 = vmatprep.subr.bf16.mxu0 0
        %1029 = vmatpush1.bf16.xpose.msra.mxu0 0
        %1030 = vmatprep.subr.bf16.mxu0 0
        %1031 = vmatpush1.bf16.xpose.msra.mxu0 0
        %1032 = vmatprep.subr.bf16.mxu0 0
        %1033 = vmatpush1.bf16.xpose.msra.mxu0 0
        %1034 = vmatprep.subr.bf16.mxu0 0
        %1035 = vmatpush1.bf16.xpose.msra.mxu0 0
        %1036 = vmatprep.subr.bf16.mxu0 0
        %1037 = vmatpush1.bf16.xpose.msra.mxu0 0
        %1038 = vmatprep.subr.bf16.mxu0 0
        %1039 = vmatpush1.bf16.xpose.msra.mxu0 0
        %1040 = vmatprep.subr.bf16.mxu0 0
        %1041 = vmatpush1.bf16.xpose.msra.mxu0 0
        %1042 = vmatprep.mubr.bf16.mxu0 0
        %1043 = vmatmul.mubr.bf16.gmra.mrb[0].mxu0 %v1005
        %v1044 = vpop.f32.mrb[0].mxu0
        %v1045 = vadd.f32 0.0, %v1044
        %v1046 = vpop.f32.mrb[0].mxu0
        %v1047 = vpop.f32.mrb[0].mxu0
        %v1048 = vpop.f32.mrb[0].mxu0
        %1049 = vdwg.mxu0
        %1050 = vrot.lane.b32.xlu0 %v995, 120
        %v1051 = vpop.permute.xlu0 %1050
        %v1053 = vsel %vm901, %v1051, 0
        %v1056 = vsel %vm901, %v995, 0
        %1058 = vmatprep.subr.bf16.mxu0 0
        %1059 = vmatpush1.bf16.xpose.msra.mxu0 %v1056
        %1060 = vmatprep.subr.bf16.mxu0 0
        %1061 = vmatpush1.bf16.xpose.msra.mxu0 0
        %1062 = vmatprep.subr.bf16.mxu0 0
        %1063 = vmatpush1.bf16.xpose.msra.mxu0 0
        %1064 = vmatprep.subr.bf16.mxu0 0
        %1065 = vmatpush1.bf16.xpose.msra.mxu0 0
        %1066 = vmatprep.subr.bf16.mxu0 0
        %1067 = vmatpush1.bf16.xpose.msra.mxu0 0
        %1068 = vmatprep.subr.bf16.mxu0 0
        %1069 = vmatpush1.bf16.xpose.msra.mxu0 0
        %1070 = vmatprep.subr.bf16.mxu0 0
        %1071 = vmatpush1.bf16.xpose.msra.mxu0 0
        %1072 = vmatprep.subr.bf16.mxu0 0
        %1073 = vmatpush1.bf16.xpose.msra.mxu0 0
        %1074 = vmatprep.subr.bf16.mxu0 0
        %1075 = vmatpush1.bf16.xpose.msra.mxu0 0
        %1076 = vmatprep.subr.bf16.mxu0 0
        %1077 = vmatpush1.bf16.xpose.msra.mxu0 0
        %1078 = vmatprep.subr.bf16.mxu0 0
        %1079 = vmatpush1.bf16.xpose.msra.mxu0 0
        %1080 = vmatprep.subr.bf16.mxu0 0
        %1081 = vmatpush1.bf16.xpose.msra.mxu0 0
        %1082 = vmatprep.subr.bf16.mxu0 0
        %1083 = vmatpush1.bf16.xpose.msra.mxu0 0
        %1084 = vmatprep.subr.bf16.mxu0 0
        %1085 = vmatpush1.bf16.xpose.msra.mxu0 0
        %1086 = vmatprep.subr.bf16.mxu0 0
        %1087 = vmatpush1.bf16.xpose.msra.mxu0 0
        %1088 = vmatprep.subr.bf16.mxu0 0
        %1089 = vmatpush1.bf16.xpose.msra.mxu0 0
        %1090 = vmatprep.mubr.bf16.mxu0 0
        %1091 = vmatmul.mubr.bf16.gmra.mrb[0].mxu0 %v1053
        %v1092 = vpop.f32.mrb[0].mxu0
        %v1093 = vadd.f32 0.0, %v1092
        %v1094 = vpop.f32.mrb[0].mxu0
        %v1095 = vpop.f32.mrb[0].mxu0
        %v1096 = vpop.f32.mrb[0].mxu0
        %1097 = vdwg.mxu0
        %1098 = vrot.lane.b32.xlu0 %v996, 120
        %v1099 = vpop.permute.xlu0 %1098
        %v1101 = vsel %vm901, %v1099, 0
        %v1104 = vsel %vm901, %v996, 0
        %1106 = vmatprep.subr.bf16.mxu0 0
        %1107 = vmatpush1.bf16.xpose.msra.mxu0 %v1104
        %1108 = vmatprep.subr.bf16.mxu0 0
        %1109 = vmatpush1.bf16.xpose.msra.mxu0 0
        %1110 = vmatprep.subr.bf16.mxu0 0
        %1111 = vmatpush1.bf16.xpose.msra.mxu0 0
        %1112 = vmatprep.subr.bf16.mxu0 0
        %1113 = vmatpush1.bf16.xpose.msra.mxu0 0
        %1114 = vmatprep.subr.bf16.mxu0 0
        %1115 = vmatpush1.bf16.xpose.msra.mxu0 0
        %1116 = vmatprep.subr.bf16.mxu0 0
        %1117 = vmatpush1.bf16.xpose.msra.mxu0 0
        %1118 = vmatprep.subr.bf16.mxu0 0
        %1119 = vmatpush1.bf16.xpose.msra.mxu0 0
        %1120 = vmatprep.subr.bf16.mxu0 0
        %1121 = vmatpush1.bf16.xpose.msra.mxu0 0
        %1122 = vmatprep.subr.bf16.mxu0 0
        %1123 = vmatpush1.bf16.xpose.msra.mxu0 0
        %1124 = vmatprep.subr.bf16.mxu0 0
        %1125 = vmatpush1.bf16.xpose.msra.mxu0 0
        %1126 = vmatprep.subr.bf16.mxu0 0
        %1127 = vmatpush1.bf16.xpose.msra.mxu0 0
        %1128 = vmatprep.subr.bf16.mxu0 0
        %1129 = vmatpush1.bf16.xpose.msra.mxu0 0
        %1130 = vmatprep.subr.bf16.mxu0 0
        %1131 = vmatpush1.bf16.xpose.msra.mxu0 0
        %1132 = vmatprep.subr.bf16.mxu0 0
        %1133 = vmatpush1.bf16.xpose.msra.mxu0 0
        %1134 = vmatprep.subr.bf16.mxu0 0
        %1135 = vmatpush1.bf16.xpose.msra.mxu0 0
        %1136 = vmatprep.subr.bf16.mxu0 0
        %1137 = vmatpush1.bf16.xpose.msra.mxu0 0
        %1138 = vmatprep.mubr.bf16.mxu0 0
        %1139 = vmatmul.mubr.bf16.gmra.mrb[0].mxu0 %v1101
        %v1140 = vpop.f32.mrb[0].mxu0
        %v1141 = vadd.f32 0.0, %v1140
        %v1142 = vpop.f32.mrb[0].mxu0
        %v1143 = vpop.f32.mrb[0].mxu0
        %v1144 = vpop.f32.mrb[0].mxu0
        %1145 = vdwg.mxu0
        %1146 = vrot.lane.b32.xlu0 %v997, 120
        %v1147 = vpop.permute.xlu0 %1146
        %v1149 = vsel %vm901, %v1147, 0
        %v1152 = vsel %vm901, %v997, 0
        %1154 = vmatprep.subr.bf16.mxu0 0
        %1155 = vmatpush1.bf16.xpose.msra.mxu0 %v1152
        %1156 = vmatprep.subr.bf16.mxu0 0
        %1157 = vmatpush1.bf16.xpose.msra.mxu0 0
        %1158 = vmatprep.subr.bf16.mxu0 0
        %1159 = vmatpush1.bf16.xpose.msra.mxu0 0
        %1160 = vmatprep.subr.bf16.mxu0 0
        %1161 = vmatpush1.bf16.xpose.msra.mxu0 0
        %1162 = vmatprep.subr.bf16.mxu0 0
        %1163 = vmatpush1.bf16.xpose.msra.mxu0 0
        %1164 = vmatprep.subr.bf16.mxu0 0
        %1165 = vmatpush1.bf16.xpose.msra.mxu0 0
        %1166 = vmatprep.subr.bf16.mxu0 0
        %1167 = vmatpush1.bf16.xpose.msra.mxu0 0
        %1168 = vmatprep.subr.bf16.mxu0 0
        %1169 = vmatpush1.bf16.xpose.msra.mxu0 0
        %1170 = vmatprep.subr.bf16.mxu0 0
        %1171 = vmatpush1.bf16.xpose.msra.mxu0 0
        %1172 = vmatprep.subr.bf16.mxu0 0
        %1173 = vmatpush1.bf16.xpose.msra.mxu0 0
        %1174 = vmatprep.subr.bf16.mxu0 0
        %1175 = vmatpush1.bf16.xpose.msra.mxu0 0
        %1176 = vmatprep.subr.bf16.mxu0 0
        %1177 = vmatpush1.bf16.xpose.msra.mxu0 0
        %1178 = vmatprep.subr.bf16.mxu0 0
        %1179 = vmatpush1.bf16.xpose.msra.mxu0 0
        %1180 = vmatprep.subr.bf16.mxu0 0
        %1181 = vmatpush1.bf16.xpose.msra.mxu0 0
        %1182 = vmatprep.subr.bf16.mxu0 0
        %1183 = vmatpush1.bf16.xpose.msra.mxu0 0
        %1184 = vmatprep.subr.bf16.mxu0 0
        %1185 = vmatpush1.bf16.xpose.msra.mxu0 0
        %1186 = vmatprep.mubr.bf16.mxu0 0
        %1187 = vmatmul.mubr.bf16.gmra.mrb[0].mxu0 %v1149
        %v1188 = vpop.f32.mrb[0].mxu0
        %v1189 = vadd.f32 0.0, %v1188
        %v1190 = vpop.f32.mrb[0].mxu0
        %v1191 = vpop.f32.mrb[0].mxu0
        %v1192 = vpop.f32.mrb[0].mxu0
        %1193 = vdwg.mxu0
        %1194 = vrot.lane.b32.xlu0 %v998, 120
        %v1195 = vpop.permute.xlu0 %1194
        %v1197 = vsel %vm901, %v1195, 0
        %v1200 = vsel %vm901, %v998, 0
        %1202 = vmatprep.subr.bf16.mxu0 0
        %1203 = vmatpush1.bf16.xpose.msra.mxu0 %v1200
        %1204 = vmatprep.subr.bf16.mxu0 0
        %1205 = vmatpush1.bf16.xpose.msra.mxu0 0
        %1206 = vmatprep.subr.bf16.mxu0 0
        %1207 = vmatpush1.bf16.xpose.msra.mxu0 0
        %1208 = vmatprep.subr.bf16.mxu0 0
        %1209 = vmatpush1.bf16.xpose.msra.mxu0 0
        %1210 = vmatprep.subr.bf16.mxu0 0
        %1211 = vmatpush1.bf16.xpose.msra.mxu0 0
        %1212 = vmatprep.subr.bf16.mxu0 0
        %1213 = vmatpush1.bf16.xpose.msra.mxu0 0
        %1214 = vmatprep.subr.bf16.mxu0 0
        %1215 = vmatpush1.bf16.xpose.msra.mxu0 0
        %1216 = vmatprep.subr.bf16.mxu0 0
        %1217 = vmatpush1.bf16.xpose.msra.mxu0 0
        %1218 = vmatprep.subr.bf16.mxu0 0
        %1219 = vmatpush1.bf16.xpose.msra.mxu0 0
        %1220 = vmatprep.subr.bf16.mxu0 0
        %1221 = vmatpush1.bf16.xpose.msra.mxu0 0
        %1222 = vmatprep.subr.bf16.mxu0 0
        %1223 = vmatpush1.bf16.xpose.msra.mxu0 0
        %1224 = vmatprep.subr.bf16.mxu0 0
        %1225 = vmatpush1.bf16.xpose.msra.mxu0 0
        %1226 = vmatprep.subr.bf16.mxu0 0
        %1227 = vmatpush1.bf16.xpose.msra.mxu0 0
        %1228 = vmatprep.subr.bf16.mxu0 0
        %1229 = vmatpush1.bf16.xpose.msra.mxu0 0
        %1230 = vmatprep.subr.bf16.mxu0 0
        %1231 = vmatpush1.bf16.xpose.msra.mxu0 0
        %1232 = vmatprep.subr.bf16.mxu0 0
        %1233 = vmatpush1.bf16.xpose.msra.mxu0 0
        %1234 = vmatprep.mubr.bf16.mxu0 0
        %1235 = vmatmul.mubr.bf16.gmra.mrb[0].mxu0 %v1197
        %v1236 = vpop.f32.mrb[0].mxu0
        %v1237 = vadd.f32 0.0, %v1236
        %v1238 = vpop.f32.mrb[0].mxu0
        %v1239 = vpop.f32.mrb[0].mxu0
        %v1240 = vpop.f32.mrb[0].mxu0
        %1241 = vdwg.mxu0
        %1242 = vrot.lane.b32.xlu0 %v999, 120
        %v1243 = vpop.permute.xlu0 %1242
        %v1245 = vsel %vm901, %v1243, 0
        %v1248 = vsel %vm901, %v999, 0
        %1250 = vmatprep.subr.bf16.mxu0 0
        %1251 = vmatpush1.bf16.xpose.msra.mxu0 %v1248
        %1252 = vmatprep.subr.bf16.mxu0 0
        %1253 = vmatpush1.bf16.xpose.msra.mxu0 0
        %1254 = vmatprep.subr.bf16.mxu0 0
        %1255 = vmatpush1.bf16.xpose.msra.mxu0 0
        %1256 = vmatprep.subr.bf16.mxu0 0
        %1257 = vmatpush1.bf16.xpose.msra.mxu0 0
        %1258 = vmatprep.subr.bf16.mxu0 0
        %1259 = vmatpush1.bf16.xpose.msra.mxu0 0
        %1260 = vmatprep.subr.bf16.mxu0 0
        %1261 = vmatpush1.bf16.xpose.msra.mxu0 0
        %1262 = vmatprep.subr.bf16.mxu0 0
        %1263 = vmatpush1.bf16.xpose.msra.mxu0 0
        %1264 = vmatprep.subr.bf16.mxu0 0
        %1265 = vmatpush1.bf16.xpose.msra.mxu0 0
        %1266 = vmatprep.subr.bf16.mxu0 0
        %1267 = vmatpush1.bf16.xpose.msra.mxu0 0
        %1268 = vmatprep.subr.bf16.mxu0 0
        %1269 = vmatpush1.bf16.xpose.msra.mxu0 0
        %1270 = vmatprep.subr.bf16.mxu0 0
        %1271 = vmatpush1.bf16.xpose.msra.mxu0 0
        %1272 = vmatprep.subr.bf16.mxu0 0
        %1273 = vmatpush1.bf16.xpose.msra.mxu0 0
        %1274 = vmatprep.subr.bf16.mxu0 0
        %1275 = vmatpush1.bf16.xpose.msra.mxu0 0
        %1276 = vmatprep.subr.bf16.mxu0 0
        %1277 = vmatpush1.bf16.xpose.msra.mxu0 0
        %1278 = vmatprep.subr.bf16.mxu0 0
        %1279 = vmatpush1.bf16.xpose.msra.mxu0 0
        %1280 = vmatprep.subr.bf16.mxu0 0
        %1281 = vmatpush1.bf16.xpose.msra.mxu0 0
        %1282 = vmatprep.mubr.bf16.mxu0 0
        %1283 = vmatmul.mubr.bf16.gmra.mrb[0].mxu0 %v1245
        %v1284 = vpop.f32.mrb[0].mxu0
        %v1285 = vadd.f32 0.0, %v1284
        %v1286 = vpop.f32.mrb[0].mxu0
        %v1287 = vpop.f32.mrb[0].mxu0
        %v1288 = vpop.f32.mrb[0].mxu0
        %1289 = vdwg.mxu0
        %1290 = vrot.lane.b32.xlu0 %v1000, 120
        %v1291 = vpop.permute.xlu0 %1290
        %v1293 = vsel %vm901, %v1291, 0
        %v1296 = vsel %vm901, %v1000, 0
        %1298 = vmatprep.subr.bf16.mxu0 0
        %1299 = vmatpush1.bf16.xpose.msra.mxu0 %v1296
        %1300 = vmatprep.subr.bf16.mxu0 0
        %1301 = vmatpush1.bf16.xpose.msra.mxu0 0
        %1302 = vmatprep.subr.bf16.mxu0 0
        %1303 = vmatpush1.bf16.xpose.msra.mxu0 0
        %1304 = vmatprep.subr.bf16.mxu0 0
        %1305 = vmatpush1.bf16.xpose.msra.mxu0 0
        %1306 = vmatprep.subr.bf16.mxu0 0
        %1307 = vmatpush1.bf16.xpose.msra.mxu0 0
        %1308 = vmatprep.subr.bf16.mxu0 0
        %1309 = vmatpush1.bf16.xpose.msra.mxu0 0
        %1310 = vmatprep.subr.bf16.mxu0 0
        %1311 = vmatpush1.bf16.xpose.msra.mxu0 0
        %1312 = vmatprep.subr.bf16.mxu0 0
        %1313 = vmatpush1.bf16.xpose.msra.mxu0 0
        %1314 = vmatprep.subr.bf16.mxu0 0
        %1315 = vmatpush1.bf16.xpose.msra.mxu0 0
        %1316 = vmatprep.subr.bf16.mxu0 0
        %1317 = vmatpush1.bf16.xpose.msra.mxu0 0
        %1318 = vmatprep.subr.bf16.mxu0 0
        %1319 = vmatpush1.bf16.xpose.msra.mxu0 0
        %1320 = vmatprep.subr.bf16.mxu0 0
        %1321 = vmatpush1.bf16.xpose.msra.mxu0 0
        %1322 = vmatprep.subr.bf16.mxu0 0
        %1323 = vmatpush1.bf16.xpose.msra.mxu0 0
        %1324 = vmatprep.subr.bf16.mxu0 0
        %1325 = vmatpush1.bf16.xpose.msra.mxu0 0
        %1326 = vmatprep.subr.bf16.mxu0 0
        %1327 = vmatpush1.bf16.xpose.msra.mxu0 0
        %1328 = vmatprep.subr.bf16.mxu0 0
        %1329 = vmatpush1.bf16.xpose.msra.mxu0 0
        %1330 = vmatprep.mubr.bf16.mxu0 0
        %1331 = vmatmul.mubr.bf16.gmra.mrb[0].mxu0 %v1293
        %v1332 = vpop.f32.mrb[0].mxu0
        %v1333 = vadd.f32 0.0, %v1332
        %v1334 = vpop.f32.mrb[0].mxu0
        %v1335 = vpop.f32.mrb[0].mxu0
        %v1336 = vpop.f32.mrb[0].mxu0
        %1337 = vdwg.mxu0
        %1338 = vrot.lane.b32.xlu0 %v1001, 120
        %v1339 = vpop.permute.xlu0 %1338
        %v1341 = vsel %vm901, %v1339, 0
        %v1344 = vsel %vm901, %v1001, 0
        %1346 = vmatprep.subr.bf16.mxu0 0
        %1347 = vmatpush1.bf16.xpose.msra.mxu0 %v1344
        %1348 = vmatprep.subr.bf16.mxu0 0
        %1349 = vmatpush1.bf16.xpose.msra.mxu0 0
        %1350 = vmatprep.subr.bf16.mxu0 0
        %1351 = vmatpush1.bf16.xpose.msra.mxu0 0
        %1352 = vmatprep.subr.bf16.mxu0 0
        %1353 = vmatpush1.bf16.xpose.msra.mxu0 0
        %1354 = vmatprep.subr.bf16.mxu0 0
        %1355 = vmatpush1.bf16.xpose.msra.mxu0 0
        %1356 = vmatprep.subr.bf16.mxu0 0
        %1357 = vmatpush1.bf16.xpose.msra.mxu0 0
        %1358 = vmatprep.subr.bf16.mxu0 0
        %1359 = vmatpush1.bf16.xpose.msra.mxu0 0
        %1360 = vmatprep.subr.bf16.mxu0 0
        %1361 = vmatpush1.bf16.xpose.msra.mxu0 0
        %1362 = vmatprep.subr.bf16.mxu0 0
        %1363 = vmatpush1.bf16.xpose.msra.mxu0 0
        %1364 = vmatprep.subr.bf16.mxu0 0
        %1365 = vmatpush1.bf16.xpose.msra.mxu0 0
        %1366 = vmatprep.subr.bf16.mxu0 0
        %1367 = vmatpush1.bf16.xpose.msra.mxu0 0
        %1368 = vmatprep.subr.bf16.mxu0 0
        %1369 = vmatpush1.bf16.xpose.msra.mxu0 0
        %1370 = vmatprep.subr.bf16.mxu0 0
        %1371 = vmatpush1.bf16.xpose.msra.mxu0 0
        %1372 = vmatprep.subr.bf16.mxu0 0
        %1373 = vmatpush1.bf16.xpose.msra.mxu0 0
        %1374 = vmatprep.subr.bf16.mxu0 0
        %1375 = vmatpush1.bf16.xpose.msra.mxu0 0
        %1376 = vmatprep.subr.bf16.mxu0 0
        %1377 = vmatpush1.bf16.xpose.msra.mxu0 0
        %1378 = vmatprep.mubr.bf16.mxu0 0
        %1379 = vmatmul.mubr.bf16.gmra.mrb[0].mxu0 %v1341
        %v1380 = vpop.f32.mrb[0].mxu0
        %v1381 = vadd.f32 0.0, %v1380
        %v1382 = vpop.f32.mrb[0].mxu0
        %v1383 = vpop.f32.mrb[0].mxu0
        %v1384 = vpop.f32.mrb[0].mxu0
        %1385 = vdwg.mxu0
        %v1386 = vadd.f32 %v1045, %v860
        %v1387 = vadd.f32 %v1093, %v860
        %v1388 = vadd.f32 %v1141, %v860
        %v1389 = vadd.f32 %v1189, %v860
        %v1390 = vadd.f32 %v1237, %v860
        %v1391 = vadd.f32 %v1285, %v860
        %v1392 = vadd.f32 %v1333, %v860
        %v1393 = vadd.f32 %v1381, %v860
        %v1394 = vsel %vm901, %v1386, -inf
        %1395 = vmax.xlane.f32.xlu0 %v1394
        %v1396 = vpop.xlane.xlu0 %1395
        %v1397 = vsel %vm901, %v1387, -inf
        %1398 = vmax.xlane.f32.xlu0 %v1397
        %v1399 = vpop.xlane.xlu0 %1398
        %v1400 = vsel %vm901, %v1388, -inf
        %1401 = vmax.xlane.f32.xlu0 %v1400
        %v1402 = vpop.xlane.xlu0 %1401
        %v1403 = vsel %vm901, %v1389, -inf
        %1404 = vmax.xlane.f32.xlu0 %v1403
        %v1405 = vpop.xlane.xlu0 %1404
        %v1406 = vsel %vm901, %v1390, -inf
        %1407 = vmax.xlane.f32.xlu0 %v1406
        %v1408 = vpop.xlane.xlu0 %1407
        %v1409 = vsel %vm901, %v1391, -inf
        %1410 = vmax.xlane.f32.xlu0 %v1409
        %v1411 = vpop.xlane.xlu0 %1410
        %v1412 = vsel %vm901, %v1392, -inf
        %1413 = vmax.xlane.f32.xlu0 %v1412
        %v1414 = vpop.xlane.xlu0 %1413
        %v1415 = vsel %vm901, %v1393, -inf
        %1416 = vmax.xlane.f32.xlu0 %v1415
        %v1417 = vpop.xlane.xlu0 %1416
        %v1418 = vsub.f32 %v1386, %v1396
        %v1419 = vsub.f32 %v1387, %v1399
        %v1420 = vsub.f32 %v1388, %v1402
        %v1421 = vsub.f32 %v1389, %v1405
        %v1422 = vsub.f32 %v1390, %v1408
        %v1423 = vsub.f32 %v1391, %v1411
        %v1424 = vsub.f32 %v1392, %v1414
        %v1425 = vsub.f32 %v1393, %v1417
        %v1426 = vmul.f32 %v1418, 1.442695
        %v1427 = vpow.pop %v1426
        %v1428 = vmul.f32 %v1419, 1.442695
        %v1429 = vpow.pop %v1428
        %v1430 = vmul.f32 %v1420, 1.442695
        %v1431 = vpow.pop %v1430
        %v1432 = vmul.f32 %v1421, 1.442695
        %v1433 = vpow.pop %v1432
        %v1434 = vmul.f32 %v1422, 1.442695
        %v1435 = vpow.pop %v1434
        %v1436 = vmul.f32 %v1423, 1.442695
        %v1437 = vpow.pop %v1436
        %v1438 = vmul.f32 %v1424, 1.442695
        %v1439 = vpow.pop %v1438
        %v1440 = vmul.f32 %v1425, 1.442695
        %v1441 = vpow.pop %v1440
        %v1442 = vsel %vm901, %v1427, 0.0
        %1443 = vadd.xlane.f32.xlu0 %v1442
        %v1444 = vpop.xlane.xlu0 %1443
        %v1445 = vsel %vm901, %v1429, 0.0
        %1446 = vadd.xlane.f32.xlu0 %v1445
        %v1447 = vpop.xlane.xlu0 %1446
        %v1448 = vsel %vm901, %v1431, 0.0
        %1449 = vadd.xlane.f32.xlu0 %v1448
        %v1450 = vpop.xlane.xlu0 %1449
        %v1451 = vsel %vm901, %v1433, 0.0
        %1452 = vadd.xlane.f32.xlu0 %v1451
        %v1453 = vpop.xlane.xlu0 %1452
        %v1454 = vsel %vm901, %v1435, 0.0
        %1455 = vadd.xlane.f32.xlu0 %v1454
        %v1456 = vpop.xlane.xlu0 %1455
        %v1457 = vsel %vm901, %v1437, 0.0
        %1458 = vadd.xlane.f32.xlu0 %v1457
        %v1459 = vpop.xlane.xlu0 %1458
        %v1460 = vsel %vm901, %v1439, 0.0
        %1461 = vadd.xlane.f32.xlu0 %v1460
        %v1462 = vpop.xlane.xlu0 %1461
        %v1463 = vsel %vm901, %v1441, 0.0
        %1464 = vadd.xlane.f32.xlu0 %v1463
        %v1465 = vpop.xlane.xlu0 %1464
        %v1466 = vrcp.pop %v1444
        %v1467 = vmul.f32 %v1427, %v1466
        %v1468 = vrcp.pop %v1447
        %v1469 = vmul.f32 %v1429, %v1468
        %v1470 = vrcp.pop %v1450
        %v1471 = vmul.f32 %v1431, %v1470
        %v1472 = vrcp.pop %v1453
        %v1473 = vmul.f32 %v1433, %v1472
        %v1474 = vrcp.pop %v1456
        %v1475 = vmul.f32 %v1435, %v1474
        %v1476 = vrcp.pop %v1459
        %v1477 = vmul.f32 %v1437, %v1476
        %v1478 = vrcp.pop %v1462
        %v1479 = vmul.f32 %v1439, %v1478
        %v1480 = vrcp.pop %v1465
        %v1481 = vmul.f32 %v1441, %v1480
        %v1482 = vpack.c.bf16 %v1467, %v1467
        %v1483 = vpack.c.bf16 %v1469, %v1469
        %v1484 = vpack.c.bf16 %v1471, %v1471
        %v1485 = vpack.c.bf16 %v1473, %v1473
        %v1486 = vpack.c.bf16 %v1475, %v1475
        %v1487 = vpack.c.bf16 %v1477, %v1477
        %v1488 = vpack.c.bf16 %v1479, %v1479
        %v1489 = vpack.c.bf16 %v1481, %v1481
        %1490 = vrot.lane.b32.xlu0 %v994, 112
        %v1491 = vpop.permute.xlu0 %1490
        %v1493 = vsel %vm901, %v1482, 0
        %v1496 = vsel %vm888, %v1491, 0
        %1498 = vmatprep.subr.bf16.mxu0 0
        %1499 = vmatpush1.bf16.msra.mxu0 %v1496
        %1500 = vmatprep.subr.bf16.mxu0 0
        %1501 = vmatpush1.bf16.msra.mxu0 0
        %1502 = vmatprep.subr.bf16.mxu0 0
        %1503 = vmatpush1.bf16.msra.mxu0 0
        %1504 = vmatprep.subr.bf16.mxu0 0
        %1505 = vmatpush1.bf16.msra.mxu0 0
        %1506 = vmatprep.subr.bf16.mxu0 0
        %1507 = vmatpush1.bf16.msra.mxu0 0
        %1508 = vmatprep.subr.bf16.mxu0 0
        %1509 = vmatpush1.bf16.msra.mxu0 0
        %1510 = vmatprep.subr.bf16.mxu0 0
        %1511 = vmatpush1.bf16.msra.mxu0 0
        %1512 = vmatprep.subr.bf16.mxu0 0
        %1513 = vmatpush1.bf16.msra.mxu0 0
        %1514 = vmatprep.subr.bf16.mxu0 0
        %1515 = vmatpush1.bf16.msra.mxu0 0
        %1516 = vmatprep.subr.bf16.mxu0 0
        %1517 = vmatpush1.bf16.msra.mxu0 0
        %1518 = vmatprep.subr.bf16.mxu0 0
        %1519 = vmatpush1.bf16.msra.mxu0 0
        %1520 = vmatprep.subr.bf16.mxu0 0
        %1521 = vmatpush1.bf16.msra.mxu0 0
        %1522 = vmatprep.subr.bf16.mxu0 0
        %1523 = vmatpush1.bf16.msra.mxu0 0
        %1524 = vmatprep.subr.bf16.mxu0 0
        %1525 = vmatpush1.bf16.msra.mxu0 0
        %1526 = vmatprep.subr.bf16.mxu0 0
        %1527 = vmatpush1.bf16.msra.mxu0 0
        %1528 = vmatprep.subr.bf16.mxu0 0
        %1529 = vmatpush1.bf16.msra.mxu0 0
        %1530 = vmatprep.mubr.bf16.mxu0 0
        %1531 = vmatmul.mubr.bf16.gmra.mrb[0].mxu0 %v1493
        %v1532 = vpop.f32.mrb[0].mxu0
        %v1533 = vadd.f32 0.0, %v1532
        %v1534 = vpop.f32.mrb[0].mxu0
        %v1535 = vpop.f32.mrb[0].mxu0
        %v1536 = vpop.f32.mrb[0].mxu0
        %1537 = vdwg.mxu0
        %1538 = vrot.lane.b32.xlu0 %v995, 112
        %v1539 = vpop.permute.xlu0 %1538
        %v1541 = vsel %vm901, %v1483, 0
        %v1544 = vsel %vm888, %v1539, 0
        %1546 = vmatprep.subr.bf16.mxu0 0
        %1547 = vmatpush1.bf16.msra.mxu0 %v1544
        %1548 = vmatprep.subr.bf16.mxu0 0
        %1549 = vmatpush1.bf16.msra.mxu0 0
        %1550 = vmatprep.subr.bf16.mxu0 0
        %1551 = vmatpush1.bf16.msra.mxu0 0
        %1552 = vmatprep.subr.bf16.mxu0 0
        %1553 = vmatpush1.bf16.msra.mxu0 0
        %1554 = vmatprep.subr.bf16.mxu0 0
        %1555 = vmatpush1.bf16.msra.mxu0 0
        %1556 = vmatprep.subr.bf16.mxu0 0
        %1557 = vmatpush1.bf16.msra.mxu0 0
        %1558 = vmatprep.subr.bf16.mxu0 0
        %1559 = vmatpush1.bf16.msra.mxu0 0
        %1560 = vmatprep.subr.bf16.mxu0 0
        %1561 = vmatpush1.bf16.msra.mxu0 0
        %1562 = vmatprep.subr.bf16.mxu0 0
        %1563 = vmatpush1.bf16.msra.mxu0 0
        %1564 = vmatprep.subr.bf16.mxu0 0
        %1565 = vmatpush1.bf16.msra.mxu0 0
        %1566 = vmatprep.subr.bf16.mxu0 0
        %1567 = vmatpush1.bf16.msra.mxu0 0
        %1568 = vmatprep.subr.bf16.mxu0 0
        %1569 = vmatpush1.bf16.msra.mxu0 0
        %1570 = vmatprep.subr.bf16.mxu0 0
        %1571 = vmatpush1.bf16.msra.mxu0 0
        %1572 = vmatprep.subr.bf16.mxu0 0
        %1573 = vmatpush1.bf16.msra.mxu0 0
        %1574 = vmatprep.subr.bf16.mxu0 0
        %1575 = vmatpush1.bf16.msra.mxu0 0
        %1576 = vmatprep.subr.bf16.mxu0 0
        %1577 = vmatpush1.bf16.msra.mxu0 0
        %1578 = vmatprep.mubr.bf16.mxu0 0
        %1579 = vmatmul.mubr.bf16.gmra.mrb[0].mxu0 %v1541
        %v1580 = vpop.f32.mrb[0].mxu0
        %v1581 = vadd.f32 0.0, %v1580
        %v1582 = vpop.f32.mrb[0].mxu0
        %v1583 = vpop.f32.mrb[0].mxu0
        %v1584 = vpop.f32.mrb[0].mxu0
        %1585 = vdwg.mxu0
        %1586 = vrot.lane.b32.xlu0 %v996, 112
        %v1587 = vpop.permute.xlu0 %1586
        %v1589 = vsel %vm901, %v1484, 0
        %v1592 = vsel %vm888, %v1587, 0
        %1594 = vmatprep.subr.bf16.mxu0 0
        %1595 = vmatpush1.bf16.msra.mxu0 %v1592
        %1596 = vmatprep.subr.bf16.mxu0 0
        %1597 = vmatpush1.bf16.msra.mxu0 0
        %1598 = vmatprep.subr.bf16.mxu0 0
        %1599 = vmatpush1.bf16.msra.mxu0 0
        %1600 = vmatprep.subr.bf16.mxu0 0
        %1601 = vmatpush1.bf16.msra.mxu0 0
        %1602 = vmatprep.subr.bf16.mxu0 0
        %1603 = vmatpush1.bf16.msra.mxu0 0
        %1604 = vmatprep.subr.bf16.mxu0 0
        %1605 = vmatpush1.bf16.msra.mxu0 0
        %1606 = vmatprep.subr.bf16.mxu0 0
        %1607 = vmatpush1.bf16.msra.mxu0 0
        %1608 = vmatprep.subr.bf16.mxu0 0
        %1609 = vmatpush1.bf16.msra.mxu0 0
        %1610 = vmatprep.subr.bf16.mxu0 0
        %1611 = vmatpush1.bf16.msra.mxu0 0
        %1612 = vmatprep.subr.bf16.mxu0 0
        %1613 = vmatpush1.bf16.msra.mxu0 0
        %1614 = vmatprep.subr.bf16.mxu0 0
        %1615 = vmatpush1.bf16.msra.mxu0 0
        %1616 = vmatprep.subr.bf16.mxu0 0
        %1617 = vmatpush1.bf16.msra.mxu0 0
        %1618 = vmatprep.subr.bf16.mxu0 0
        %1619 = vmatpush1.bf16.msra.mxu0 0
        %1620 = vmatprep.subr.bf16.mxu0 0
        %1621 = vmatpush1.bf16.msra.mxu0 0
        %1622 = vmatprep.subr.bf16.mxu0 0
        %1623 = vmatpush1.bf16.msra.mxu0 0
        %1624 = vmatprep.subr.bf16.mxu0 0
        %1625 = vmatpush1.bf16.msra.mxu0 0
        %1626 = vmatprep.mubr.bf16.mxu0 0
        %1627 = vmatmul.mubr.bf16.gmra.mrb[0].mxu0 %v1589
        %v1628 = vpop.f32.mrb[0].mxu0
        %v1629 = vadd.f32 0.0, %v1628
        %v1630 = vpop.f32.mrb[0].mxu0
        %v1631 = vpop.f32.mrb[0].mxu0
        %v1632 = vpop.f32.mrb[0].mxu0
        %1633 = vdwg.mxu0
        %1634 = vrot.lane.b32.xlu0 %v997, 112
        %v1635 = vpop.permute.xlu0 %1634
        %v1637 = vsel %vm901, %v1485, 0
        %v1640 = vsel %vm888, %v1635, 0
        %1642 = vmatprep.subr.bf16.mxu0 0
        %1643 = vmatpush1.bf16.msra.mxu0 %v1640
        %1644 = vmatprep.subr.bf16.mxu0 0
        %1645 = vmatpush1.bf16.msra.mxu0 0
        %1646 = vmatprep.subr.bf16.mxu0 0
        %1647 = vmatpush1.bf16.msra.mxu0 0
        %1648 = vmatprep.subr.bf16.mxu0 0
        %1649 = vmatpush1.bf16.msra.mxu0 0
        %1650 = vmatprep.subr.bf16.mxu0 0
        %1651 = vmatpush1.bf16.msra.mxu0 0
        %1652 = vmatprep.subr.bf16.mxu0 0
        %1653 = vmatpush1.bf16.msra.mxu0 0
        %1654 = vmatprep.subr.bf16.mxu0 0
        %1655 = vmatpush1.bf16.msra.mxu0 0
        %1656 = vmatprep.subr.bf16.mxu0 0
        %1657 = vmatpush1.bf16.msra.mxu0 0
        %1658 = vmatprep.subr.bf16.mxu0 0
        %1659 = vmatpush1.bf16.msra.mxu0 0
        %1660 = vmatprep.subr.bf16.mxu0 0
        %1661 = vmatpush1.bf16.msra.mxu0 0
        %1662 = vmatprep.subr.bf16.mxu0 0
        %1663 = vmatpush1.bf16.msra.mxu0 0
        %1664 = vmatprep.subr.bf16.mxu0 0
        %1665 = vmatpush1.bf16.msra.mxu0 0
        %1666 = vmatprep.subr.bf16.mxu0 0
        %1667 = vmatpush1.bf16.msra.mxu0 0
        %1668 = vmatprep.subr.bf16.mxu0 0
        %1669 = vmatpush1.bf16.msra.mxu0 0
        %1670 = vmatprep.subr.bf16.mxu0 0
        %1671 = vmatpush1.bf16.msra.mxu0 0
        %1672 = vmatprep.subr.bf16.mxu0 0
        %1673 = vmatpush1.bf16.msra.mxu0 0
        %1674 = vmatprep.mubr.bf16.mxu0 0
        %1675 = vmatmul.mubr.bf16.gmra.mrb[0].mxu0 %v1637
        %v1676 = vpop.f32.mrb[0].mxu0
        %v1677 = vadd.f32 0.0, %v1676
        %v1678 = vpop.f32.mrb[0].mxu0
        %v1679 = vpop.f32.mrb[0].mxu0
        %v1680 = vpop.f32.mrb[0].mxu0
        %1681 = vdwg.mxu0
        %1682 = vrot.lane.b32.xlu0 %v998, 112
        %v1683 = vpop.permute.xlu0 %1682
        %v1685 = vsel %vm901, %v1486, 0
        %v1688 = vsel %vm888, %v1683, 0
        %1690 = vmatprep.subr.bf16.mxu0 0
        %1691 = vmatpush1.bf16.msra.mxu0 %v1688
        %1692 = vmatprep.subr.bf16.mxu0 0
        %1693 = vmatpush1.bf16.msra.mxu0 0
        %1694 = vmatprep.subr.bf16.mxu0 0
        %1695 = vmatpush1.bf16.msra.mxu0 0
        %1696 = vmatprep.subr.bf16.mxu0 0
        %1697 = vmatpush1.bf16.msra.mxu0 0
        %1698 = vmatprep.subr.bf16.mxu0 0
        %1699 = vmatpush1.bf16.msra.mxu0 0
        %1700 = vmatprep.subr.bf16.mxu0 0
        %1701 = vmatpush1.bf16.msra.mxu0 0
        %1702 = vmatprep.subr.bf16.mxu0 0
        %1703 = vmatpush1.bf16.msra.mxu0 0
        %1704 = vmatprep.subr.bf16.mxu0 0
        %1705 = vmatpush1.bf16.msra.mxu0 0
        %1706 = vmatprep.subr.bf16.mxu0 0
        %1707 = vmatpush1.bf16.msra.mxu0 0
        %1708 = vmatprep.subr.bf16.mxu0 0
        %1709 = vmatpush1.bf16.msra.mxu0 0
        %1710 = vmatprep.subr.bf16.mxu0 0
        %1711 = vmatpush1.bf16.msra.mxu0 0
        %1712 = vmatprep.subr.bf16.mxu0 0
        %1713 = vmatpush1.bf16.msra.mxu0 0
        %1714 = vmatprep.subr.bf16.mxu0 0
        %1715 = vmatpush1.bf16.msra.mxu0 0
        %1716 = vmatprep.subr.bf16.mxu0 0
        %1717 = vmatpush1.bf16.msra.mxu0 0
        %1718 = vmatprep.subr.bf16.mxu0 0
        %1719 = vmatpush1.bf16.msra.mxu0 0
        %1720 = vmatprep.subr.bf16.mxu0 0
        %1721 = vmatpush1.bf16.msra.mxu0 0
        %1722 = vmatprep.mubr.bf16.mxu0 0
        %1723 = vmatmul.mubr.bf16.gmra.mrb[0].mxu0 %v1685
        %v1724 = vpop.f32.mrb[0].mxu0
        %v1725 = vadd.f32 0.0, %v1724
        %v1726 = vpop.f32.mrb[0].mxu0
        %v1727 = vpop.f32.mrb[0].mxu0
        %v1728 = vpop.f32.mrb[0].mxu0
        %1729 = vdwg.mxu0
        %1730 = vrot.lane.b32.xlu0 %v999, 112
        %v1731 = vpop.permute.xlu0 %1730
        %v1733 = vsel %vm901, %v1487, 0
        %v1736 = vsel %vm888, %v1731, 0
        %1738 = vmatprep.subr.bf16.mxu0 0
        %1739 = vmatpush1.bf16.msra.mxu0 %v1736
        %1740 = vmatprep.subr.bf16.mxu0 0
        %1741 = vmatpush1.bf16.msra.mxu0 0
        %1742 = vmatprep.subr.bf16.mxu0 0
        %1743 = vmatpush1.bf16.msra.mxu0 0
        %1744 = vmatprep.subr.bf16.mxu0 0
        %1745 = vmatpush1.bf16.msra.mxu0 0
        %1746 = vmatprep.subr.bf16.mxu0 0
        %1747 = vmatpush1.bf16.msra.mxu0 0
        %1748 = vmatprep.subr.bf16.mxu0 0
        %1749 = vmatpush1.bf16.msra.mxu0 0
        %1750 = vmatprep.subr.bf16.mxu0 0
        %1751 = vmatpush1.bf16.msra.mxu0 0
        %1752 = vmatprep.subr.bf16.mxu0 0
        %1753 = vmatpush1.bf16.msra.mxu0 0
        %1754 = vmatprep.subr.bf16.mxu0 0
        %1755 = vmatpush1.bf16.msra.mxu0 0
        %1756 = vmatprep.subr.bf16.mxu0 0
        %1757 = vmatpush1.bf16.msra.mxu0 0
        %1758 = vmatprep.subr.bf16.mxu0 0
        %1759 = vmatpush1.bf16.msra.mxu0 0
        %1760 = vmatprep.subr.bf16.mxu0 0
        %1761 = vmatpush1.bf16.msra.mxu0 0
        %1762 = vmatprep.subr.bf16.mxu0 0
        %1763 = vmatpush1.bf16.msra.mxu0 0
        %1764 = vmatprep.subr.bf16.mxu0 0
        %1765 = vmatpush1.bf16.msra.mxu0 0
        %1766 = vmatprep.subr.bf16.mxu0 0
        %1767 = vmatpush1.bf16.msra.mxu0 0
        %1768 = vmatprep.subr.bf16.mxu0 0
        %1769 = vmatpush1.bf16.msra.mxu0 0
        %1770 = vmatprep.mubr.bf16.mxu0 0
        %1771 = vmatmul.mubr.bf16.gmra.mrb[0].mxu0 %v1733
        %v1772 = vpop.f32.mrb[0].mxu0
        %v1773 = vadd.f32 0.0, %v1772
        %v1774 = vpop.f32.mrb[0].mxu0
        %v1775 = vpop.f32.mrb[0].mxu0
        %v1776 = vpop.f32.mrb[0].mxu0
        %1777 = vdwg.mxu0
        %1778 = vrot.lane.b32.xlu0 %v1000, 112
        %v1779 = vpop.permute.xlu0 %1778
        %v1781 = vsel %vm901, %v1488, 0
        %v1784 = vsel %vm888, %v1779, 0
        %1786 = vmatprep.subr.bf16.mxu0 0
        %1787 = vmatpush1.bf16.msra.mxu0 %v1784
        %1788 = vmatprep.subr.bf16.mxu0 0
        %1789 = vmatpush1.bf16.msra.mxu0 0
        %1790 = vmatprep.subr.bf16.mxu0 0
        %1791 = vmatpush1.bf16.msra.mxu0 0
        %1792 = vmatprep.subr.bf16.mxu0 0
        %1793 = vmatpush1.bf16.msra.mxu0 0
        %1794 = vmatprep.subr.bf16.mxu0 0
        %1795 = vmatpush1.bf16.msra.mxu0 0
        %1796 = vmatprep.subr.bf16.mxu0 0
        %1797 = vmatpush1.bf16.msra.mxu0 0
        %1798 = vmatprep.subr.bf16.mxu0 0
        %1799 = vmatpush1.bf16.msra.mxu0 0
        %1800 = vmatprep.subr.bf16.mxu0 0
        %1801 = vmatpush1.bf16.msra.mxu0 0
        %1802 = vmatprep.subr.bf16.mxu0 0
        %1803 = vmatpush1.bf16.msra.mxu0 0
        %1804 = vmatprep.subr.bf16.mxu0 0
        %1805 = vmatpush1.bf16.msra.mxu0 0
        %1806 = vmatprep.subr.bf16.mxu0 0
        %1807 = vmatpush1.bf16.msra.mxu0 0
        %1808 = vmatprep.subr.bf16.mxu0 0
        %1809 = vmatpush1.bf16.msra.mxu0 0
        %1810 = vmatprep.subr.bf16.mxu0 0
        %1811 = vmatpush1.bf16.msra.mxu0 0
        %1812 = vmatprep.subr.bf16.mxu0 0
        %1813 = vmatpush1.bf16.msra.mxu0 0
        %1814 = vmatprep.subr.bf16.mxu0 0
        %1815 = vmatpush1.bf16.msra.mxu0 0
        %1816 = vmatprep.subr.bf16.mxu0 0
        %1817 = vmatpush1.bf16.msra.mxu0 0
        %1818 = vmatprep.mubr.bf16.mxu0 0
        %1819 = vmatmul.mubr.bf16.gmra.mrb[0].mxu0 %v1781
        %v1820 = vpop.f32.mrb[0].mxu0
        %v1821 = vadd.f32 0.0, %v1820
        %v1822 = vpop.f32.mrb[0].mxu0
        %v1823 = vpop.f32.mrb[0].mxu0
        %v1824 = vpop.f32.mrb[0].mxu0
        %1825 = vdwg.mxu0
        %1826 = vrot.lane.b32.xlu0 %v1001, 112
        %v1827 = vpop.permute.xlu0 %1826
        %v1829 = vsel %vm901, %v1489, 0
        %v1832 = vsel %vm888, %v1827, 0
        %1834 = vmatprep.subr.bf16.mxu0 0
        %1835 = vmatpush1.bf16.msra.mxu0 %v1832
        %1836 = vmatprep.subr.bf16.mxu0 0
        %1837 = vmatpush1.bf16.msra.mxu0 0
        %1838 = vmatprep.subr.bf16.mxu0 0
        %1839 = vmatpush1.bf16.msra.mxu0 0
        %1840 = vmatprep.subr.bf16.mxu0 0
        %1841 = vmatpush1.bf16.msra.mxu0 0
        %1842 = vmatprep.subr.bf16.mxu0 0
        %1843 = vmatpush1.bf16.msra.mxu0 0
        %1844 = vmatprep.subr.bf16.mxu0 0
        %1845 = vmatpush1.bf16.msra.mxu0 0
        %1846 = vmatprep.subr.bf16.mxu0 0
        %1847 = vmatpush1.bf16.msra.mxu0 0
        %1848 = vmatprep.subr.bf16.mxu0 0
        %1849 = vmatpush1.bf16.msra.mxu0 0
        %1850 = vmatprep.subr.bf16.mxu0 0
        %1851 = vmatpush1.bf16.msra.mxu0 0
        %1852 = vmatprep.subr.bf16.mxu0 0
        %1853 = vmatpush1.bf16.msra.mxu0 0
        %1854 = vmatprep.subr.bf16.mxu0 0
        %1855 = vmatpush1.bf16.msra.mxu0 0
        %1856 = vmatprep.subr.bf16.mxu0 0
        %1857 = vmatpush1.bf16.msra.mxu0 0
        %1858 = vmatprep.subr.bf16.mxu0 0
        %1859 = vmatpush1.bf16.msra.mxu0 0
        %1860 = vmatprep.subr.bf16.mxu0 0
        %1861 = vmatpush1.bf16.msra.mxu0 0
        %1862 = vmatprep.subr.bf16.mxu0 0
        %1863 = vmatpush1.bf16.msra.mxu0 0
        %1864 = vmatprep.subr.bf16.mxu0 0
        %1865 = vmatpush1.bf16.msra.mxu0 0
        %1866 = vmatprep.mubr.bf16.mxu0 0
        %1867 = vmatmul.mubr.bf16.gmra.mrb[0].mxu0 %v1829
        %v1868 = vpop.f32.mrb[0].mxu0
        %v1869 = vadd.f32 0.0, %v1868
        %v1870 = vpop.f32.mrb[0].mxu0
        %v1871 = vpop.f32.mrb[0].mxu0
        %v1872 = vpop.f32.mrb[0].mxu0
        %1873 = vdwg.mxu0
        %v1874 = vpack.c.bf16 %v1533, %v1533
        %v1875 = vpack.c.bf16 %v1581, %v1581
        %v1876 = vpack.c.bf16 %v1629, %v1629
        %v1877 = vpack.c.bf16 %v1677, %v1677
        %v1878 = vpack.c.bf16 %v1725, %v1725
        %v1879 = vpack.c.bf16 %v1773, %v1773
        %v1880 = vpack.c.bf16 %v1821, %v1821
        %v1881 = vpack.c.bf16 %v1869, %v1869
        %1883 = vrot.lane.b32.xlu0 %v1875, 8
        %v1884 = vpop.permute.xlu0 %1883
        %1886 = vrot.lane.b32.xlu0 %v1876, 16
        %v1887 = vpop.permute.xlu0 %1886
        %1889 = vrot.lane.b32.xlu0 %v1877, 24
        %v1890 = vpop.permute.xlu0 %1889
        %1892 = vrot.lane.b32.xlu0 %v1878, 32
        %v1893 = vpop.permute.xlu0 %1892
        %1895 = vrot.lane.b32.xlu0 %v1879, 40
        %v1896 = vpop.permute.xlu0 %1895
        %1898 = vrot.lane.b32.xlu0 %v1880, 48
        %v1899 = vpop.permute.xlu0 %1898
        %1901 = vrot.lane.b32.xlu0 %v1881, 56
        %v1902 = vpop.permute.xlu0 %1901
        %v1905 = vsel %vm901, %v1874, %v1884
        %vm1906 = vcmask 130048
        %v1908 = vsel %vm1906, %v1905, %v1887
        %vm1909 = vcmask 195584
        %v1911 = vsel %vm1909, %v1908, %v1890
        %vm1912 = vcmask 261120
        %v1914 = vsel %vm1912, %v1911, %v1893
        %vm1915 = vcmask 326656
        %v1917 = vsel %vm1915, %v1914, %v1896
        %vm1918 = vcmask 392192
        %v1920 = vsel %vm1918, %v1917, %v1899
        %vm1921 = vcmask 457728
        %v1923 = vsel %vm1921, %v1920, %v1902
        %v1925 = vlaneseq
        %v1926 = vshrl.u32 %v1925, 7
        %v1927 = vsub.s32 0, %v1926
        %v1928 = vrot.slane %v870, %v1927
        %v1938 = vunpack.c.l.b16 %v862
        %v1939 = vunpack.c.l.b16 %v863
        %v1940 = vunpack.c.l.b16 %v864
        %v1941 = vunpack.c.l.b16 %v865
        %v1942 = vunpack.c.l.b16 %v866
        %v1943 = vunpack.c.l.b16 %v867
        %v1944 = vunpack.c.l.b16 %v868
        %v1945 = vunpack.c.l.b16 %v869
        %v1946 = vpack.c.b16 %v1939, %v1938
        %v1947 = vpack.c.b16 %v1941, %v1940
        %v1948 = vpack.c.b16 %v1943, %v1942
        %v1949 = vpack.c.b16 %v1945, %v1944
        %vm1954 = vcmask 523264
        %v1955 = vsel %vm1954, %v1923, 0
        %1957 = vmatprep.subr.bf16.mxu0 0
        %1958 = vmatpush1.bf16.msra.mxu0 %v1946
        %1959 = vmatprep.subr.bf16.mxu0 0
        %1960 = vmatpush1.bf16.msra.mxu0 %v1947
        %1961 = vmatprep.subr.bf16.mxu0 0
        %1962 = vmatpush1.bf16.msra.mxu0 %v1948
        %1963 = vmatprep.subr.bf16.mxu0 0
        %1964 = vmatpush1.bf16.msra.mxu0 %v1949
        %1965 = vmatprep.subr.bf16.mxu0 0
        %1966 = vmatpush1.bf16.msra.mxu0 0
        %1967 = vmatprep.subr.bf16.mxu0 0
        %1968 = vmatpush1.bf16.msra.mxu0 0
        %1969 = vmatprep.subr.bf16.mxu0 0
        %1970 = vmatpush1.bf16.msra.mxu0 0
        %1971 = vmatprep.subr.bf16.mxu0 0
        %1972 = vmatpush1.bf16.msra.mxu0 0
        %1973 = vmatprep.subr.bf16.mxu0 0
        %1974 = vmatpush1.bf16.msra.mxu0 0
        %1975 = vmatprep.subr.bf16.mxu0 0
        %1976 = vmatpush1.bf16.msra.mxu0 0
        %1977 = vmatprep.subr.bf16.mxu0 0
        %1978 = vmatpush1.bf16.msra.mxu0 0
        %1979 = vmatprep.subr.bf16.mxu0 0
        %1980 = vmatpush1.bf16.msra.mxu0 0
        %1981 = vmatprep.subr.bf16.mxu0 0
        %1982 = vmatpush1.bf16.msra.mxu0 0
        %1983 = vmatprep.subr.bf16.mxu0 0
        %1984 = vmatpush1.bf16.msra.mxu0 0
        %1985 = vmatprep.subr.bf16.mxu0 0
        %1986 = vmatpush1.bf16.msra.mxu0 0
        %1987 = vmatprep.subr.bf16.mxu0 0
        %1988 = vmatpush1.bf16.msra.mxu0 0
        %1989 = vmatprep.mubr.bf16.mxu0 0
        %1990 = vmatmul.mubr.bf16.gmra.mrb[0].mxu0 %v1955
        %v1991 = vpop.f32.mrb[0].mxu0
        %v1992 = vadd.f32 %v1928, %v1991
        %v1993 = vpop.f32.mrb[0].mxu0
        %v1994 = vpop.f32.mrb[0].mxu0
        %v1995 = vpop.f32.mrb[0].mxu0
        %1996 = vdwg.mxu0
        %v1997 = vadd.f32 %v1992, %v857
        %v1998 = vld [vmem:[#allocation5] sm:$0x1]
        %v1999 = vld [vmem:[#allocation7] sm:$0x1]
        %v2000 = vsel %vm1954, %v1997, 0.0
        %2001 = vadd.xlane.f32.xlu0 %v2000
        %v2002 = vpop.xlane.xlu0 %2001
        %v2003 = vrcp.pop 64.0
        %v2004 = vmul.f32 %v2002, %v2003
        %v2005 = vsub.f32 %v1997, %v2004
        %v2006 = vmul.f32 %v2005, %v2005
        %v2007 = vsel %vm1954, %v2006, 0.0
        %2008 = vadd.xlane.f32.xlu0 %v2007
        %v2009 = vpop.xlane.xlu0 %2008
        %v2010 = vmul.f32 %v2009, %v2003
        %v2011 = vadd.f32 %v2010, 1e-05
        %v2012 = vrsqrt.pop %v2011
        %v2013 = vmul.f32 %v2005, %v2012
        %v2015 = vlaneseq
        %v2016 = vshrl.u32 %v2015, 7
        %v2017 = vsub.s32 0, %v2016
        %v2018 = vrot.slane %v1998, %v2017
        %v2020 = vmul.f32 %v2013, %v2018
        %v2022 = vlaneseq
        %v2023 = vshrl.u32 %v2022, 7
        %v2024 = vsub.s32 0, %v2023
        %v2025 = vrot.slane %v1999, %v2024
        %v2027 = vadd.f32 %v2020, %v2025
        %v2028 = vld [vmem:[#allocation8] sm:$0xf]
        %v2029 = vld [vmem:[#allocation10] sm:$0xf]
        %v2030 = vld [vmem:[#allocation11] sm:$0xf]
        %v2031 = vld [vmem:[%s12] sm:$0xf]
        %v2032 = vld [vmem:[%s12 + $0x4] sm:$0xf]
        %v2033 = vld [vmem:[%s12 + $0x8] sm:$0xf]
        %v2034 = vld [vmem:[%s12 + $0xc] sm:$0xf]
        %v2035 = vld [vmem:[%s12 + $0x10] sm:$0xf]
        %v2036 = vld [vmem:[%s12 + $0x14] sm:$0xf]
        %v2037 = vld [vmem:[%s12 + $0x18] sm:$0xf]
        %v2038 = vld [vmem:[%s12 + $0x1c] sm:$0xf]
        %v2039 = vld [vmem:[#allocation13] sm:$0x1]
        %v2040 = vpack.c.bf16 %v858, %v858
        %v2042 = vrot.slane %v2040, 4
        %2043 = vrot.lane.b32.xlu0 %v2042, 120
        %v2044 = vpop.permute.xlu0 %2043
        %2045 = vrot.lane.b32.xlu0 %v2040, 112
        %v2046 = vpop.permute.xlu0 %2045
        %2047 = vrot.lane.b32.xlu0 %v2042, 104
        %v2048 = vpop.permute.xlu0 %2047
        %2049 = vrot.lane.b32.xlu0 %v2040, 96
        %v2050 = vpop.permute.xlu0 %2049
        %2051 = vrot.lane.b32.xlu0 %v2042, 88
        %v2052 = vpop.permute.xlu0 %2051
        %2053 = vrot.lane.b32.xlu0 %v2040, 80
        %v2054 = vpop.permute.xlu0 %2053
        %2055 = vrot.lane.b32.xlu0 %v2042, 72
        %v2056 = vpop.permute.xlu0 %2055
        %v2059 = vsel %vm888, %v2040, %v2044
        %v2062 = vsel %vm888, %v2046, %v2048
        %v2065 = vsel %vm888, %v2050, %v2052
        %v2068 = vsel %vm888, %v2054, %v2056
        %v2069 = vsel %vm901, %v2059, 0
        %v2071 = vsel %vm901, %v2062, 0
        %v2073 = vsel %vm901, %v2065, 0
        %v2075 = vsel %vm901, %v2068, 0
        %v2078 = vsel %vm888, %v2028, 0
        %2080 = vmatprep.subr.bf16.mxu0 0
        %2081 = vmatpush1.bf16.msra.mxu0 %v2078
        %2082 = vmatprep.subr.bf16.mxu0 0
        %2083 = vmatpush1.bf16.msra.mxu0 0
        %2084 = vmatprep.subr.bf16.mxu0 0
        %2085 = vmatpush1.bf16.msra.mxu0 0
        %2086 = vmatprep.subr.bf16.mxu0 0
        %2087 = vmatpush1.bf16.msra.mxu0 0
        %2088 = vmatprep.subr.bf16.mxu0 0
        %2089 = vmatpush1.bf16.msra.mxu0 0
        %2090 = vmatprep.subr.bf16.mxu0 0
        %2091 = vmatpush1.bf16.msra.mxu0 0
        %2092 = vmatprep.subr.bf16.mxu0 0
        %2093 = vmatpush1.bf16.msra.mxu0 0
        %2094 = vmatprep.subr.bf16.mxu0 0
        %2095 = vmatpush1.bf16.msra.mxu0 0
        %2096 = vmatprep.subr.bf16.mxu0 0
        %2097 = vmatpush1.bf16.msra.mxu0 0
        %2098 = vmatprep.subr.bf16.mxu0 0
        %2099 = vmatpush1.bf16.msra.mxu0 0
        %2100 = vmatprep.subr.bf16.mxu0 0
        %2101 = vmatpush1.bf16.msra.mxu0 0
        %2102 = vmatprep.subr.bf16.mxu0 0
        %2103 = vmatpush1.bf16.msra.mxu0 0
        %2104 = vmatprep.subr.bf16.mxu0 0
        %2105 = vmatpush1.bf16.msra.mxu0 0
        %2106 = vmatprep.subr.bf16.mxu0 0
        %2107 = vmatpush1.bf16.msra.mxu0 0
        %2108 = vmatprep.subr.bf16.mxu0 0
        %2109 = vmatpush1.bf16.msra.mxu0 0
        %2110 = vmatprep.subr.bf16.mxu0 0
        %2111 = vmatpush1.bf16.msra.mxu0 0
        %2112 = vmatprep.mubr.bf16.mxu0 0
        %2113 = vmatmul.mubr.bf16.gmra.mrb[0].mxu0 %v2069
        %v2114 = vpop.f32.mrb[0].mxu0
        %v2115 = vadd.f32 0.0, %v2114
        %v2116 = vpop.f32.mrb[0].mxu0
        %v2117 = vpop.f32.mrb[0].mxu0
        %v2118 = vadd.f32 0.0, %v2117
        %v2119 = vpop.f32.mrb[0].mxu0
        %2120 = vmatprep.mubr.bf16.mxu0 0
        %2121 = vmatmul.mubr.bf16.gmra.mrb[0].mxu0 %v2071
        %v2122 = vpop.f32.mrb[0].mxu0
        %v2123 = vadd.f32 0.0, %v2122
        %v2124 = vpop.f32.mrb[0].mxu0
        %v2125 = vpop.f32.mrb[0].mxu0
        %v2126 = vadd.f32 0.0, %v2125
        %v2127 = vpop.f32.mrb[0].mxu0
        %2128 = vmatprep.mubr.bf16.mxu0 0
        %2129 = vmatmul.mubr.bf16.gmra.mrb[0].mxu0 %v2073
        %v2130 = vpop.f32.mrb[0].mxu0
        %v2131 = vadd.f32 0.0, %v2130
        %v2132 = vpop.f32.mrb[0].mxu0
        %v2133 = vpop.f32.mrb[0].mxu0
        %v2134 = vadd.f32 0.0, %v2133
        %v2135 = vpop.f32.mrb[0].mxu0
        %2136 = vmatprep.mubr.bf16.mxu0 0
        %2137 = vmatmul.mubr.bf16.gmra.mrb[0].mxu0 %v2075
        %v2138 = vpop.f32.mrb[0].mxu0
        %v2139 = vadd.f32 0.0, %v2138
        %v2140 = vpop.f32.mrb[0].mxu0
        %v2141 = vpop.f32.mrb[0].mxu0
        %v2142 = vadd.f32 0.0, %v2141
        %v2143 = vpop.f32.mrb[0].mxu0
        %2144 = vdwg.mxu0
        %v2145 = vpack.c.bf16 %v2118, %v2115
        %v2146 = vpack.c.bf16 %v2126, %v2123
        %v2147 = vpack.c.bf16 %v2134, %v2131
        %v2148 = vpack.c.bf16 %v2142, %v2139
        %v2149 = vpack.c.bf16 %v859, %v859
        %v2151 = vrot.slane %v2149, 4
        %2152 = vrot.lane.b32.xlu0 %v2151, 120
        %v2153 = vpop.permute.xlu0 %2152
        %2154 = vrot.lane.b32.xlu0 %v2149, 112
        %v2155 = vpop.permute.xlu0 %2154
        %2156 = vrot.lane.b32.xlu0 %v2151, 104
        %v2157 = vpop.permute.xlu0 %2156
        %2158 = vrot.lane.b32.xlu0 %v2149, 96
        %v2159 = vpop.permute.xlu0 %2158
        %2160 = vrot.lane.b32.xlu0 %v2151, 88
        %v2161 = vpop.permute.xlu0 %2160
        %2162 = vrot.lane.b32.xlu0 %v2149, 80
        %v2163 = vpop.permute.xlu0 %2162
        %2164 = vrot.lane.b32.xlu0 %v2151, 72
        %v2165 = vpop.permute.xlu0 %2164
        %v2168 = vsel %vm888, %v2149, %v2153
        %v2171 = vsel %vm888, %v2155, %v2157
        %v2174 = vsel %vm888, %v2159, %v2161
        %v2177 = vsel %vm888, %v2163, %v2165
        %v2178 = vsel %vm901, %v2168, 0
        %v2180 = vsel %vm901, %v2171, 0
        %v2182 = vsel %vm901, %v2174, 0
        %v2184 = vsel %vm901, %v2177, 0
        %v2187 = vsel %vm888, %v2029, 0
        %2189 = vmatprep.subr.bf16.mxu0 0
        %2190 = vmatpush1.bf16.msra.mxu0 %v2187
        %2191 = vmatprep.subr.bf16.mxu0 0
        %2192 = vmatpush1.bf16.msra.mxu0 0
        %2193 = vmatprep.subr.bf16.mxu0 0
        %2194 = vmatpush1.bf16.msra.mxu0 0
        %2195 = vmatprep.subr.bf16.mxu0 0
        %2196 = vmatpush1.bf16.msra.mxu0 0
        %2197 = vmatprep.subr.bf16.mxu0 0
        %2198 = vmatpush1.bf16.msra.mxu0 0
        %2199 = vmatprep.subr.bf16.mxu0 0
        %2200 = vmatpush1.bf16.msra.mxu0 0
        %2201 = vmatprep.subr.bf16.mxu0 0
        %2202 = vmatpush1.bf16.msra.mxu0 0
        %2203 = vmatprep.subr.bf16.mxu0 0
        %2204 = vmatpush1.bf16.msra.mxu0 0
        %2205 = vmatprep.subr.bf16.mxu0 0
        %2206 = vmatpush1.bf16.msra.mxu0 0
        %2207 = vmatprep.subr.bf16.mxu0 0
        %2208 = vmatpush1.bf16.msra.mxu0 0
        %2209 = vmatprep.subr.bf16.mxu0 0
        %2210 = vmatpush1.bf16.msra.mxu0 0
        %2211 = vmatprep.subr.bf16.mxu0 0
        %2212 = vmatpush1.bf16.msra.mxu0 0
        %2213 = vmatprep.subr.bf16.mxu0 0
        %2214 = vmatpush1.bf16.msra.mxu0 0
        %2215 = vmatprep.subr.bf16.mxu0 0
        %2216 = vmatpush1.bf16.msra.mxu0 0
        %2217 = vmatprep.subr.bf16.mxu0 0
        %2218 = vmatpush1.bf16.msra.mxu0 0
        %2219 = vmatprep.subr.bf16.mxu0 0
        %2220 = vmatpush1.bf16.msra.mxu0 0
        %2221 = vmatprep.mubr.bf16.mxu0 0
        %2222 = vmatmul.mubr.bf16.gmra.mrb[0].mxu0 %v2178
        %v2223 = vpop.f32.mrb[0].mxu0
        %v2224 = vadd.f32 0.0, %v2223
        %v2225 = vpop.f32.mrb[0].mxu0
        %v2226 = vpop.f32.mrb[0].mxu0
        %v2227 = vadd.f32 0.0, %v2226
        %v2228 = vpop.f32.mrb[0].mxu0
        %2229 = vmatprep.mubr.bf16.mxu0 0
        %2230 = vmatmul.mubr.bf16.gmra.mrb[0].mxu0 %v2180
        %v2231 = vpop.f32.mrb[0].mxu0
        %v2232 = vadd.f32 0.0, %v2231
        %v2233 = vpop.f32.mrb[0].mxu0
        %v2234 = vpop.f32.mrb[0].mxu0
        %v2235 = vadd.f32 0.0, %v2234
        %v2236 = vpop.f32.mrb[0].mxu0
        %2237 = vmatprep.mubr.bf16.mxu0 0
        %2238 = vmatmul.mubr.bf16.gmra.mrb[0].mxu0 %v2182
        %v2239 = vpop.f32.mrb[0].mxu0
        %v2240 = vadd.f32 0.0, %v2239
        %v2241 = vpop.f32.mrb[0].mxu0
        %v2242 = vpop.f32.mrb[0].mxu0
        %v2243 = vadd.f32 0.0, %v2242
        %v2244 = vpop.f32.mrb[0].mxu0
        %2245 = vmatprep.mubr.bf16.mxu0 0
        %2246 = vmatmul.mubr.bf16.gmra.mrb[0].mxu0 %v2184
        %v2247 = vpop.f32.mrb[0].mxu0
        %v2248 = vadd.f32 0.0, %v2247
        %v2249 = vpop.f32.mrb[0].mxu0
        %v2250 = vpop.f32.mrb[0].mxu0
        %v2251 = vadd.f32 0.0, %v2250
        %v2252 = vpop.f32.mrb[0].mxu0
        %2253 = vdwg.mxu0
        %v2254 = vpack.c.bf16 %v2227, %v2224
        %v2255 = vpack.c.bf16 %v2235, %v2232
        %v2256 = vpack.c.bf16 %v2243, %v2240
        %v2257 = vpack.c.bf16 %v2251, %v2248
        %v2258 = vpack.c.bf16 %v2027, %v2027
        %v2260 = vrot.slane %v2258, 4
        %2261 = vrot.lane.b32.xlu0 %v2260, 120
        %v2262 = vpop.permute.xlu0 %2261
        %2263 = vrot.lane.b32.xlu0 %v2258, 112
        %v2264 = vpop.permute.xlu0 %2263
        %2265 = vrot.lane.b32.xlu0 %v2260, 104
        %v2266 = vpop.permute.xlu0 %2265
        %2267 = vrot.lane.b32.xlu0 %v2258, 96
        %v2268 = vpop.permute.xlu0 %2267
        %2269 = vrot.lane.b32.xlu0 %v2260, 88
        %v2270 = vpop.permute.xlu0 %2269
        %2271 = vrot.lane.b32.xlu0 %v2258, 80
        %v2272 = vpop.permute.xlu0 %2271
        %2273 = vrot.lane.b32.xlu0 %v2260, 72
        %v2274 = vpop.permute.xlu0 %2273
        %v2277 = vsel %vm888, %v2258, %v2262
        %v2280 = vsel %vm888, %v2264, %v2266
        %v2283 = vsel %vm888, %v2268, %v2270
        %v2286 = vsel %vm888, %v2272, %v2274
        %v2287 = vsel %vm901, %v2277, 0
        %v2289 = vsel %vm901, %v2280, 0
        %v2291 = vsel %vm901, %v2283, 0
        %v2293 = vsel %vm901, %v2286, 0
        %v2296 = vsel %vm888, %v2030, 0
        %2298 = vmatprep.subr.bf16.mxu0 0
        %2299 = vmatpush1.bf16.msra.mxu0 %v2296
        %2300 = vmatprep.subr.bf16.mxu0 0
        %2301 = vmatpush1.bf16.msra.mxu0 0
        %2302 = vmatprep.subr.bf16.mxu0 0
        %2303 = vmatpush1.bf16.msra.mxu0 0
        %2304 = vmatprep.subr.bf16.mxu0 0
        %2305 = vmatpush1.bf16.msra.mxu0 0
        %2306 = vmatprep.subr.bf16.mxu0 0
        %2307 = vmatpush1.bf16.msra.mxu0 0
        %2308 = vmatprep.subr.bf16.mxu0 0
        %2309 = vmatpush1.bf16.msra.mxu0 0
        %2310 = vmatprep.subr.bf16.mxu0 0
        %2311 = vmatpush1.bf16.msra.mxu0 0
        %2312 = vmatprep.subr.bf16.mxu0 0
        %2313 = vmatpush1.bf16.msra.mxu0 0
        %2314 = vmatprep.subr.bf16.mxu0 0
        %2315 = vmatpush1.bf16.msra.mxu0 0
        %2316 = vmatprep.subr.bf16.mxu0 0
        %2317 = vmatpush1.bf16.msra.mxu0 0
        %2318 = vmatprep.subr.bf16.mxu0 0
        %2319 = vmatpush1.bf16.msra.mxu0 0
        %2320 = vmatprep.subr.bf16.mxu0 0
        %2321 = vmatpush1.bf16.msra.mxu0 0
        %2322 = vmatprep.subr.bf16.mxu0 0
        %2323 = vmatpush1.bf16.msra.mxu0 0
        %2324 = vmatprep.subr.bf16.mxu0 0
        %2325 = vmatpush1.bf16.msra.mxu0 0
        %2326 = vmatprep.subr.bf16.mxu0 0
        %2327 = vmatpush1.bf16.msra.mxu0 0
        %2328 = vmatprep.subr.bf16.mxu0 0
        %2329 = vmatpush1.bf16.msra.mxu0 0
        %2330 = vmatprep.mubr.bf16.mxu0 0
        %2331 = vmatmul.mubr.bf16.gmra.mrb[0].mxu0 %v2287
        %v2332 = vpop.f32.mrb[0].mxu0
        %v2333 = vadd.f32 0.0, %v2332
        %v2334 = vpop.f32.mrb[0].mxu0
        %v2335 = vpop.f32.mrb[0].mxu0
        %v2336 = vadd.f32 0.0, %v2335
        %v2337 = vpop.f32.mrb[0].mxu0
        %2338 = vmatprep.mubr.bf16.mxu0 0
        %2339 = vmatmul.mubr.bf16.gmra.mrb[0].mxu0 %v2289
        %v2340 = vpop.f32.mrb[0].mxu0
        %v2341 = vadd.f32 0.0, %v2340
        %v2342 = vpop.f32.mrb[0].mxu0
        %v2343 = vpop.f32.mrb[0].mxu0
        %v2344 = vadd.f32 0.0, %v2343
        %v2345 = vpop.f32.mrb[0].mxu0
        %2346 = vmatprep.mubr.bf16.mxu0 0
        %2347 = vmatmul.mubr.bf16.gmra.mrb[0].mxu0 %v2291
        %v2348 = vpop.f32.mrb[0].mxu0
        %v2349 = vadd.f32 0.0, %v2348
        %v2350 = vpop.f32.mrb[0].mxu0
        %v2351 = vpop.f32.mrb[0].mxu0
        %v2352 = vadd.f32 0.0, %v2351
        %v2353 = vpop.f32.mrb[0].mxu0
        %2354 = vmatprep.mubr.bf16.mxu0 0
        %2355 = vmatmul.mubr.bf16.gmra.mrb[0].mxu0 %v2293
        %v2356 = vpop.f32.mrb[0].mxu0
        %v2357 = vadd.f32 0.0, %v2356
        %v2358 = vpop.f32.mrb[0].mxu0
        %v2359 = vpop.f32.mrb[0].mxu0
        %v2360 = vadd.f32 0.0, %v2359
        %v2361 = vpop.f32.mrb[0].mxu0
        %2362 = vdwg.mxu0
        %v2363 = vpack.c.bf16 %v2336, %v2333
        %v2364 = vpack.c.bf16 %v2344, %v2341
        %v2365 = vpack.c.bf16 %v2352, %v2349
        %v2366 = vpack.c.bf16 %v2360, %v2357
        %v2371 = vunpack.c.l.b16 %v2254
        %v2372 = vunpack.c.h.b16 %v2254
        %v2373 = vunpack.c.l.b16 %v2255
        %v2374 = vunpack.c.h.b16 %v2255
        %v2375 = vunpack.c.l.b16 %v2256
        %v2376 = vunpack.c.h.b16 %v2256
        %v2377 = vunpack.c.l.b16 %v2257
        %v2378 = vunpack.c.h.b16 %v2257
        %v2379 = vpack.c.b16 %v2371, %v2371
        %v2380 = vpack.c.b16 %v2372, %v2372
        %v2381 = vpack.c.b16 %v2373, %v2373
        %v2382 = vpack.c.b16 %v2374, %v2374
        %v2383 = vpack.c.b16 %v2375, %v2375
        %v2384 = vpack.c.b16 %v2376, %v2376
        %v2385 = vpack.c.b16 %v2377, %v2377
        %v2386 = vpack.c.b16 %v2378, %v2378
        %v2391 = vunpack.c.l.b16 %v2145
        %v2392 = vunpack.c.h.b16 %v2145
        %v2393 = vunpack.c.l.b16 %v2146
        %v2394 = vunpack.c.h.b16 %v2146
        %v2395 = vunpack.c.l.b16 %v2147
        %v2396 = vunpack.c.h.b16 %v2147
        %v2397 = vunpack.c.l.b16 %v2148
        %v2398 = vunpack.c.h.b16 %v2148
        %v2399 = vpack.c.b16 %v2391, %v2391
        %v2400 = vpack.c.b16 %v2392, %v2392
        %v2401 = vpack.c.b16 %v2393, %v2393
        %v2402 = vpack.c.b16 %v2394, %v2394
        %v2403 = vpack.c.b16 %v2395, %v2395
        %v2404 = vpack.c.b16 %v2396, %v2396
        %v2405 = vpack.c.b16 %v2397, %v2397
        %v2406 = vpack.c.b16 %v2398, %v2398
        %v2411 = vunpack.c.l.b16 %v2363
        %v2412 = vunpack.c.h.b16 %v2363
        %v2413 = vunpack.c.l.b16 %v2364
        %v2414 = vunpack.c.h.b16 %v2364
        %v2415 = vunpack.c.l.b16 %v2365
        %v2416 = vunpack.c.h.b16 %v2365
        %v2417 = vunpack.c.l.b16 %v2366
        %v2418 = vunpack.c.h.b16 %v2366
        %v2419 = vpack.c.b16 %v2411, %v2411
        %v2420 = vpack.c.b16 %v2412, %v2412
        %v2421 = vpack.c.b16 %v2413, %v2413
        %v2422 = vpack.c.b16 %v2414, %v2414
        %v2423 = vpack.c.b16 %v2415, %v2415
        %v2424 = vpack.c.b16 %v2416, %v2416
        %v2425 = vpack.c.b16 %v2417, %v2417
        %v2426 = vpack.c.b16 %v2418, %v2418
        %v2428 = vsel %vm901, %v2379, 0
        %v2431 = vsel %vm901, %v2399, 0
        %2433 = vmatprep.subr.bf16.mxu0 0
        %2434 = vmatpush1.bf16.xpose.msra.mxu0 %v2431
        %2435 = vmatprep.subr.bf16.mxu0 0
        %2436 = vmatpush1.bf16.xpose.msra.mxu0 0
        %2437 = vmatprep.subr.bf16.mxu0 0
        %2438 = vmatpush1.bf16.xpose.msra.mxu0 0
        %2439 = vmatprep.subr.bf16.mxu0 0
        %2440 = vmatpush1.bf16.xpose.msra.mxu0 0
        %2441 = vmatprep.subr.bf16.mxu0 0
        %2442 = vmatpush1.bf16.xpose.msra.mxu0 0
        %2443 = vmatprep.subr.bf16.mxu0 0
        %2444 = vmatpush1.bf16.xpose.msra.mxu0 0
        %2445 = vmatprep.subr.bf16.mxu0 0
        %2446 = vmatpush1.bf16.xpose.msra.mxu0 0
        %2447 = vmatprep.subr.bf16.mxu0 0
        %2448 = vmatpush1.bf16.xpose.msra.mxu0 0
        %2449 = vmatprep.subr.bf16.mxu0 0
        %2450 = vmatpush1.bf16.xpose.msra.mxu0 0
        %2451 = vmatprep.subr.bf16.mxu0 0
        %2452 = vmatpush1.bf16.xpose.msra.mxu0 0
        %2453 = vmatprep.subr.bf16.mxu0 0
        %2454 = vmatpush1.bf16.xpose.msra.mxu0 0
        %2455 = vmatprep.subr.bf16.mxu0 0
        %2456 = vmatpush1.bf16.xpose.msra.mxu0 0
        %2457 = vmatprep.subr.bf16.mxu0 0
        %2458 = vmatpush1.bf16.xpose.msra.mxu0 0
        %2459 = vmatprep.subr.bf16.mxu0 0
        %2460 = vmatpush1.bf16.xpose.msra.mxu0 0
        %2461 = vmatprep.subr.bf16.mxu0 0
        %2462 = vmatpush1.bf16.xpose.msra.mxu0 0
        %2463 = vmatprep.subr.bf16.mxu0 0
        %2464 = vmatpush1.bf16.xpose.msra.mxu0 0
        %2465 = vmatprep.mubr.bf16.mxu0 0
        %2466 = vmatmul.mubr.bf16.gmra.mrb[0].mxu0 %v2428
        %v2467 = vpop.f32.mrb[0].mxu0
        %v2468 = vadd.f32 0.0, %v2467
        %v2469 = vpop.f32.mrb[0].mxu0
        %v2470 = vpop.f32.mrb[0].mxu0
        %v2471 = vpop.f32.mrb[0].mxu0
        %2472 = vdwg.mxu0
        %v2474 = vsel %vm901, %v2380, 0
        %v2477 = vsel %vm901, %v2400, 0
        %2479 = vmatprep.subr.bf16.mxu0 0
        %2480 = vmatpush1.bf16.xpose.msra.mxu0 %v2477
        %2481 = vmatprep.subr.bf16.mxu0 0
        %2482 = vmatpush1.bf16.xpose.msra.mxu0 0
        %2483 = vmatprep.subr.bf16.mxu0 0
        %2484 = vmatpush1.bf16.xpose.msra.mxu0 0
        %2485 = vmatprep.subr.bf16.mxu0 0
        %2486 = vmatpush1.bf16.xpose.msra.mxu0 0
        %2487 = vmatprep.subr.bf16.mxu0 0
        %2488 = vmatpush1.bf16.xpose.msra.mxu0 0
        %2489 = vmatprep.subr.bf16.mxu0 0
        %2490 = vmatpush1.bf16.xpose.msra.mxu0 0
        %2491 = vmatprep.subr.bf16.mxu0 0
        %2492 = vmatpush1.bf16.xpose.msra.mxu0 0
        %2493 = vmatprep.subr.bf16.mxu0 0
        %2494 = vmatpush1.bf16.xpose.msra.mxu0 0
        %2495 = vmatprep.subr.bf16.mxu0 0
        %2496 = vmatpush1.bf16.xpose.msra.mxu0 0
        %2497 = vmatprep.subr.bf16.mxu0 0
        %2498 = vmatpush1.bf16.xpose.msra.mxu0 0
        %2499 = vmatprep.subr.bf16.mxu0 0
        %2500 = vmatpush1.bf16.xpose.msra.mxu0 0
        %2501 = vmatprep.subr.bf16.mxu0 0
        %2502 = vmatpush1.bf16.xpose.msra.mxu0 0
        %2503 = vmatprep.subr.bf16.mxu0 0
        %2504 = vmatpush1.bf16.xpose.msra.mxu0 0
        %2505 = vmatprep.subr.bf16.mxu0 0
        %2506 = vmatpush1.bf16.xpose.msra.mxu0 0
        %2507 = vmatprep.subr.bf16.mxu0 0
        %2508 = vmatpush1.bf16.xpose.msra.mxu0 0
        %2509 = vmatprep.subr.bf16.mxu0 0
        %2510 = vmatpush1.bf16.xpose.msra.mxu0 0
        %2511 = vmatprep.mubr.bf16.mxu0 0
        %2512 = vmatmul.mubr.bf16.gmra.mrb[0].mxu0 %v2474
        %v2513 = vpop.f32.mrb[0].mxu0
        %v2514 = vadd.f32 0.0, %v2513
        %v2515 = vpop.f32.mrb[0].mxu0
        %v2516 = vpop.f32.mrb[0].mxu0
        %v2517 = vpop.f32.mrb[0].mxu0
        %2518 = vdwg.mxu0
        %v2520 = vsel %vm901, %v2381, 0
        %v2523 = vsel %vm901, %v2401, 0
        %2525 = vmatprep.subr.bf16.mxu0 0
        %2526 = vmatpush1.bf16.xpose.msra.mxu0 %v2523
        %2527 = vmatprep.subr.bf16.mxu0 0
        %2528 = vmatpush1.bf16.xpose.msra.mxu0 0
        %2529 = vmatprep.subr.bf16.mxu0 0
        %2530 = vmatpush1.bf16.xpose.msra.mxu0 0
        %2531 = vmatprep.subr.bf16.mxu0 0
        %2532 = vmatpush1.bf16.xpose.msra.mxu0 0
        %2533 = vmatprep.subr.bf16.mxu0 0
        %2534 = vmatpush1.bf16.xpose.msra.mxu0 0
        %2535 = vmatprep.subr.bf16.mxu0 0
        %2536 = vmatpush1.bf16.xpose.msra.mxu0 0
        %2537 = vmatprep.subr.bf16.mxu0 0
        %2538 = vmatpush1.bf16.xpose.msra.mxu0 0
        %2539 = vmatprep.subr.bf16.mxu0 0
        %2540 = vmatpush1.bf16.xpose.msra.mxu0 0
        %2541 = vmatprep.subr.bf16.mxu0 0
        %2542 = vmatpush1.bf16.xpose.msra.mxu0 0
        %2543 = vmatprep.subr.bf16.mxu0 0
        %2544 = vmatpush1.bf16.xpose.msra.mxu0 0
        %2545 = vmatprep.subr.bf16.mxu0 0
        %2546 = vmatpush1.bf16.xpose.msra.mxu0 0
        %2547 = vmatprep.subr.bf16.mxu0 0
        %2548 = vmatpush1.bf16.xpose.msra.mxu0 0
        %2549 = vmatprep.subr.bf16.mxu0 0
        %2550 = vmatpush1.bf16.xpose.msra.mxu0 0
        %2551 = vmatprep.subr.bf16.mxu0 0
        %2552 = vmatpush1.bf16.xpose.msra.mxu0 0
        %2553 = vmatprep.subr.bf16.mxu0 0
        %2554 = vmatpush1.bf16.xpose.msra.mxu0 0
        %2555 = vmatprep.subr.bf16.mxu0 0
        %2556 = vmatpush1.bf16.xpose.msra.mxu0 0
        %2557 = vmatprep.mubr.bf16.mxu0 0
        %2558 = vmatmul.mubr.bf16.gmra.mrb[0].mxu0 %v2520
        %v2559 = vpop.f32.mrb[0].mxu0
        %v2560 = vadd.f32 0.0, %v2559
        %v2561 = vpop.f32.mrb[0].mxu0
        %v2562 = vpop.f32.mrb[0].mxu0
        %v2563 = vpop.f32.mrb[0].mxu0
        %2564 = vdwg.mxu0
        %v2566 = vsel %vm901, %v2382, 0
        %v2569 = vsel %vm901, %v2402, 0
        %2571 = vmatprep.subr.bf16.mxu0 0
        %2572 = vmatpush1.bf16.xpose.msra.mxu0 %v2569
        %2573 = vmatprep.subr.bf16.mxu0 0
        %2574 = vmatpush1.bf16.xpose.msra.mxu0 0
        %2575 = vmatprep.subr.bf16.mxu0 0
        %2576 = vmatpush1.bf16.xpose.msra.mxu0 0
        %2577 = vmatprep.subr.bf16.mxu0 0
        %2578 = vmatpush1.bf16.xpose.msra.mxu0 0
        %2579 = vmatprep.subr.bf16.mxu0 0
        %2580 = vmatpush1.bf16.xpose.msra.mxu0 0
        %2581 = vmatprep.subr.bf16.mxu0 0
        %2582 = vmatpush1.bf16.xpose.msra.mxu0 0
        %2583 = vmatprep.subr.bf16.mxu0 0
        %2584 = vmatpush1.bf16.xpose.msra.mxu0 0
        %2585 = vmatprep.subr.bf16.mxu0 0
        %2586 = vmatpush1.bf16.xpose.msra.mxu0 0
        %2587 = vmatprep.subr.bf16.mxu0 0
        %2588 = vmatpush1.bf16.xpose.msra.mxu0 0
        %2589 = vmatprep.subr.bf16.mxu0 0
        %2590 = vmatpush1.bf16.xpose.msra.mxu0 0
        %2591 = vmatprep.subr.bf16.mxu0 0
        %2592 = vmatpush1.bf16.xpose.msra.mxu0 0
        %2593 = vmatprep.subr.bf16.mxu0 0
        %2594 = vmatpush1.bf16.xpose.msra.mxu0 0
        %2595 = vmatprep.subr.bf16.mxu0 0
        %2596 = vmatpush1.bf16.xpose.msra.mxu0 0
        %2597 = vmatprep.subr.bf16.mxu0 0
        %2598 = vmatpush1.bf16.xpose.msra.mxu0 0
        %2599 = vmatprep.subr.bf16.mxu0 0
        %2600 = vmatpush1.bf16.xpose.msra.mxu0 0
        %2601 = vmatprep.subr.bf16.mxu0 0
        %2602 = vmatpush1.bf16.xpose.msra.mxu0 0
        %2603 = vmatprep.mubr.bf16.mxu0 0
        %2604 = vmatmul.mubr.bf16.gmra.mrb[0].mxu0 %v2566
        %v2605 = vpop.f32.mrb[0].mxu0
        %v2606 = vadd.f32 0.0, %v2605
        %v2607 = vpop.f32.mrb[0].mxu0
        %v2608 = vpop.f32.mrb[0].mxu0
        %v2609 = vpop.f32.mrb[0].mxu0
        %2610 = vdwg.mxu0
        %v2612 = vsel %vm901, %v2383, 0
        %v2615 = vsel %vm901, %v2403, 0
        %2617 = vmatprep.subr.bf16.mxu0 0
        %2618 = vmatpush1.bf16.xpose.msra.mxu0 %v2615
        %2619 = vmatprep.subr.bf16.mxu0 0
        %2620 = vmatpush1.bf16.xpose.msra.mxu0 0
        %2621 = vmatprep.subr.bf16.mxu0 0
        %2622 = vmatpush1.bf16.xpose.msra.mxu0 0
        %2623 = vmatprep.subr.bf16.mxu0 0
        %2624 = vmatpush1.bf16.xpose.msra.mxu0 0
        %2625 = vmatprep.subr.bf16.mxu0 0
        %2626 = vmatpush1.bf16.xpose.msra.mxu0 0
        %2627 = vmatprep.subr.bf16.mxu0 0
        %2628 = vmatpush1.bf16.xpose.msra.mxu0 0
        %2629 = vmatprep.subr.bf16.mxu0 0
        %2630 = vmatpush1.bf16.xpose.msra.mxu0 0
        %2631 = vmatprep.subr.bf16.mxu0 0
        %2632 = vmatpush1.bf16.xpose.msra.mxu0 0
        %2633 = vmatprep.subr.bf16.mxu0 0
        %2634 = vmatpush1.bf16.xpose.msra.mxu0 0
        %2635 = vmatprep.subr.bf16.mxu0 0
        %2636 = vmatpush1.bf16.xpose.msra.mxu0 0
        %2637 = vmatprep.subr.bf16.mxu0 0
        %2638 = vmatpush1.bf16.xpose.msra.mxu0 0
        %2639 = vmatprep.subr.bf16.mxu0 0
        %2640 = vmatpush1.bf16.xpose.msra.mxu0 0
        %2641 = vmatprep.subr.bf16.mxu0 0
        %2642 = vmatpush1.bf16.xpose.msra.mxu0 0
        %2643 = vmatprep.subr.bf16.mxu0 0
        %2644 = vmatpush1.bf16.xpose.msra.mxu0 0
        %2645 = vmatprep.subr.bf16.mxu0 0
        %2646 = vmatpush1.bf16.xpose.msra.mxu0 0
        %2647 = vmatprep.subr.bf16.mxu0 0
        %2648 = vmatpush1.bf16.xpose.msra.mxu0 0
        %2649 = vmatprep.mubr.bf16.mxu0 0
        %2650 = vmatmul.mubr.bf16.gmra.mrb[0].mxu0 %v2612
        %v2651 = vpop.f32.mrb[0].mxu0
        %v2652 = vadd.f32 0.0, %v2651
        %v2653 = vpop.f32.mrb[0].mxu0
        %v2654 = vpop.f32.mrb[0].mxu0
        %v2655 = vpop.f32.mrb[0].mxu0
        %2656 = vdwg.mxu0
        %v2658 = vsel %vm901, %v2384, 0
        %v2661 = vsel %vm901, %v2404, 0
        %2663 = vmatprep.subr.bf16.mxu0 0
        %2664 = vmatpush1.bf16.xpose.msra.mxu0 %v2661
        %2665 = vmatprep.subr.bf16.mxu0 0
        %2666 = vmatpush1.bf16.xpose.msra.mxu0 0
        %2667 = vmatprep.subr.bf16.mxu0 0
        %2668 = vmatpush1.bf16.xpose.msra.mxu0 0
        %2669 = vmatprep.subr.bf16.mxu0 0
        %2670 = vmatpush1.bf16.xpose.msra.mxu0 0
        %2671 = vmatprep.subr.bf16.mxu0 0
        %2672 = vmatpush1.bf16.xpose.msra.mxu0 0
        %2673 = vmatprep.subr.bf16.mxu0 0
        %2674 = vmatpush1.bf16.xpose.msra.mxu0 0
        %2675 = vmatprep.subr.bf16.mxu0 0
        %2676 = vmatpush1.bf16.xpose.msra.mxu0 0
        %2677 = vmatprep.subr.bf16.mxu0 0
        %2678 = vmatpush1.bf16.xpose.msra.mxu0 0
        %2679 = vmatprep.subr.bf16.mxu0 0
        %2680 = vmatpush1.bf16.xpose.msra.mxu0 0
        %2681 = vmatprep.subr.bf16.mxu0 0
        %2682 = vmatpush1.bf16.xpose.msra.mxu0 0
        %2683 = vmatprep.subr.bf16.mxu0 0
        %2684 = vmatpush1.bf16.xpose.msra.mxu0 0
        %2685 = vmatprep.subr.bf16.mxu0 0
        %2686 = vmatpush1.bf16.xpose.msra.mxu0 0
        %2687 = vmatprep.subr.bf16.mxu0 0
        %2688 = vmatpush1.bf16.xpose.msra.mxu0 0
        %2689 = vmatprep.subr.bf16.mxu0 0
        %2690 = vmatpush1.bf16.xpose.msra.mxu0 0
        %2691 = vmatprep.subr.bf16.mxu0 0
        %2692 = vmatpush1.bf16.xpose.msra.mxu0 0
        %2693 = vmatprep.subr.bf16.mxu0 0
        %2694 = vmatpush1.bf16.xpose.msra.mxu0 0
        %2695 = vmatprep.mubr.bf16.mxu0 0
        %2696 = vmatmul.mubr.bf16.gmra.mrb[0].mxu0 %v2658
        %v2697 = vpop.f32.mrb[0].mxu0
        %v2698 = vadd.f32 0.0, %v2697
        %v2699 = vpop.f32.mrb[0].mxu0
        %v2700 = vpop.f32.mrb[0].mxu0
        %v2701 = vpop.f32.mrb[0].mxu0
        %2702 = vdwg.mxu0
        %v2704 = vsel %vm901, %v2385, 0
        %v2707 = vsel %vm901, %v2405, 0
        %2709 = vmatprep.subr.bf16.mxu0 0
        %2710 = vmatpush1.bf16.xpose.msra.mxu0 %v2707
        %2711 = vmatprep.subr.bf16.mxu0 0
        %2712 = vmatpush1.bf16.xpose.msra.mxu0 0
        %2713 = vmatprep.subr.bf16.mxu0 0
        %2714 = vmatpush1.bf16.xpose.msra.mxu0 0
        %2715 = vmatprep.subr.bf16.mxu0 0
        %2716 = vmatpush1.bf16.xpose.msra.mxu0 0
        %2717 = vmatprep.subr.bf16.mxu0 0
        %2718 = vmatpush1.bf16.xpose.msra.mxu0 0
        %2719 = vmatprep.subr.bf16.mxu0 0
        %2720 = vmatpush1.bf16.xpose.msra.mxu0 0
        %2721 = vmatprep.subr.bf16.mxu0 0
        %2722 = vmatpush1.bf16.xpose.msra.mxu0 0
        %2723 = vmatprep.subr.bf16.mxu0 0
        %2724 = vmatpush1.bf16.xpose.msra.mxu0 0
        %2725 = vmatprep.subr.bf16.mxu0 0
        %2726 = vmatpush1.bf16.xpose.msra.mxu0 0
        %2727 = vmatprep.subr.bf16.mxu0 0
        %2728 = vmatpush1.bf16.xpose.msra.mxu0 0
        %2729 = vmatprep.subr.bf16.mxu0 0
        %2730 = vmatpush1.bf16.xpose.msra.mxu0 0
        %2731 = vmatprep.subr.bf16.mxu0 0
        %2732 = vmatpush1.bf16.xpose.msra.mxu0 0
        %2733 = vmatprep.subr.bf16.mxu0 0
        %2734 = vmatpush1.bf16.xpose.msra.mxu0 0
        %2735 = vmatprep.subr.bf16.mxu0 0
        %2736 = vmatpush1.bf16.xpose.msra.mxu0 0
        %2737 = vmatprep.subr.bf16.mxu0 0
        %2738 = vmatpush1.bf16.xpose.msra.mxu0 0
        %2739 = vmatprep.subr.bf16.mxu0 0
        %2740 = vmatpush1.bf16.xpose.msra.mxu0 0
        %2741 = vmatprep.mubr.bf16.mxu0 0
        %2742 = vmatmul.mubr.bf16.gmra.mrb[0].mxu0 %v2704
        %v2743 = vpop.f32.mrb[0].mxu0
        %v2744 = vadd.f32 0.0, %v2743
        %v2745 = vpop.f32.mrb[0].mxu0
        %v2746 = vpop.f32.mrb[0].mxu0
        %v2747 = vpop.f32.mrb[0].mxu0
        %2748 = vdwg.mxu0
        %v2750 = vsel %vm901, %v2386, 0
        %v2753 = vsel %vm901, %v2406, 0
        %2755 = vmatprep.subr.bf16.mxu0 0
        %2756 = vmatpush1.bf16.xpose.msra.mxu0 %v2753
        %2757 = vmatprep.subr.bf16.mxu0 0
        %2758 = vmatpush1.bf16.xpose.msra.mxu0 0
        %2759 = vmatprep.subr.bf16.mxu0 0
        %2760 = vmatpush1.bf16.xpose.msra.mxu0 0
        %2761 = vmatprep.subr.bf16.mxu0 0
        %2762 = vmatpush1.bf16.xpose.msra.mxu0 0
        %2763 = vmatprep.subr.bf16.mxu0 0
        %2764 = vmatpush1.bf16.xpose.msra.mxu0 0
        %2765 = vmatprep.subr.bf16.mxu0 0
        %2766 = vmatpush1.bf16.xpose.msra.mxu0 0
        %2767 = vmatprep.subr.bf16.mxu0 0
        %2768 = vmatpush1.bf16.xpose.msra.mxu0 0
        %2769 = vmatprep.subr.bf16.mxu0 0
        %2770 = vmatpush1.bf16.xpose.msra.mxu0 0
        %2771 = vmatprep.subr.bf16.mxu0 0
        %2772 = vmatpush1.bf16.xpose.msra.mxu0 0
        %2773 = vmatprep.subr.bf16.mxu0 0
        %2774 = vmatpush1.bf16.xpose.msra.mxu0 0
        %2775 = vmatprep.subr.bf16.mxu0 0
        %2776 = vmatpush1.bf16.xpose.msra.mxu0 0
        %2777 = vmatprep.subr.bf16.mxu0 0
        %2778 = vmatpush1.bf16.xpose.msra.mxu0 0
        %2779 = vmatprep.subr.bf16.mxu0 0
        %2780 = vmatpush1.bf16.xpose.msra.mxu0 0
        %2781 = vmatprep.subr.bf16.mxu0 0
        %2782 = vmatpush1.bf16.xpose.msra.mxu0 0
        %2783 = vmatprep.subr.bf16.mxu0 0
        %2784 = vmatpush1.bf16.xpose.msra.mxu0 0
        %2785 = vmatprep.subr.bf16.mxu0 0
        %2786 = vmatpush1.bf16.xpose.msra.mxu0 0
        %2787 = vmatprep.mubr.bf16.mxu0 0
        %2788 = vmatmul.mubr.bf16.gmra.mrb[0].mxu0 %v2750
        %v2789 = vpop.f32.mrb[0].mxu0
        %v2790 = vadd.f32 0.0, %v2789
        %v2791 = vpop.f32.mrb[0].mxu0
        %v2792 = vpop.f32.mrb[0].mxu0
        %v2793 = vpop.f32.mrb[0].mxu0
        %2794 = vdwg.mxu0
        %v2795 = vsel %vm901, %v2468, -inf
        %2796 = vmax.xlane.f32.xlu0 %v2795
        %v2797 = vpop.xlane.xlu0 %2796
        %v2798 = vsel %vm901, %v2514, -inf
        %2799 = vmax.xlane.f32.xlu0 %v2798
        %v2800 = vpop.xlane.xlu0 %2799
        %v2801 = vsel %vm901, %v2560, -inf
        %2802 = vmax.xlane.f32.xlu0 %v2801
        %v2803 = vpop.xlane.xlu0 %2802
        %v2804 = vsel %vm901, %v2606, -inf
        %2805 = vmax.xlane.f32.xlu0 %v2804
        %v2806 = vpop.xlane.xlu0 %2805
        %v2807 = vsel %vm901, %v2652, -inf
        %2808 = vmax.xlane.f32.xlu0 %v2807
        %v2809 = vpop.xlane.xlu0 %2808
        %v2810 = vsel %vm901, %v2698, -inf
        %2811 = vmax.xlane.f32.xlu0 %v2810
        %v2812 = vpop.xlane.xlu0 %2811
        %v2813 = vsel %vm901, %v2744, -inf
        %2814 = vmax.xlane.f32.xlu0 %v2813
        %v2815 = vpop.xlane.xlu0 %2814
        %v2816 = vsel %vm901, %v2790, -inf
        %2817 = vmax.xlane.f32.xlu0 %v2816
        %v2818 = vpop.xlane.xlu0 %2817
        %v2819 = vsub.f32 %v2468, %v2797
        %v2820 = vsub.f32 %v2514, %v2800
        %v2821 = vsub.f32 %v2560, %v2803
        %v2822 = vsub.f32 %v2606, %v2806
        %v2823 = vsub.f32 %v2652, %v2809
        %v2824 = vsub.f32 %v2698, %v2812
        %v2825 = vsub.f32 %v2744, %v2815
        %v2826 = vsub.f32 %v2790, %v2818
        %v2827 = vmul.f32 %v2819, 1.442695
        %v2828 = vpow.pop %v2827
        %v2829 = vmul.f32 %v2820, 1.442695
        %v2830 = vpow.pop %v2829
        %v2831 = vmul.f32 %v2821, 1.442695
        %v2832 = vpow.pop %v2831
        %v2833 = vmul.f32 %v2822, 1.442695
        %v2834 = vpow.pop %v2833
        %v2835 = vmul.f32 %v2823, 1.442695
        %v2836 = vpow.pop %v2835
        %v2837 = vmul.f32 %v2824, 1.442695
        %v2838 = vpow.pop %v2837
        %v2839 = vmul.f32 %v2825, 1.442695
        %v2840 = vpow.pop %v2839
        %v2841 = vmul.f32 %v2826, 1.442695
        %v2842 = vpow.pop %v2841
        %v2843 = vsel %vm901, %v2828, 0.0
        %2844 = vadd.xlane.f32.xlu0 %v2843
        %v2845 = vpop.xlane.xlu0 %2844
        %v2846 = vsel %vm901, %v2830, 0.0
        %2847 = vadd.xlane.f32.xlu0 %v2846
        %v2848 = vpop.xlane.xlu0 %2847
        %v2849 = vsel %vm901, %v2832, 0.0
        %2850 = vadd.xlane.f32.xlu0 %v2849
        %v2851 = vpop.xlane.xlu0 %2850
        %v2852 = vsel %vm901, %v2834, 0.0
        %2853 = vadd.xlane.f32.xlu0 %v2852
        %v2854 = vpop.xlane.xlu0 %2853
        %v2855 = vsel %vm901, %v2836, 0.0
        %2856 = vadd.xlane.f32.xlu0 %v2855
        %v2857 = vpop.xlane.xlu0 %2856
        %v2858 = vsel %vm901, %v2838, 0.0
        %2859 = vadd.xlane.f32.xlu0 %v2858
        %v2860 = vpop.xlane.xlu0 %2859
        %v2861 = vsel %vm901, %v2840, 0.0
        %2862 = vadd.xlane.f32.xlu0 %v2861
        %v2863 = vpop.xlane.xlu0 %2862
        %v2864 = vsel %vm901, %v2842, 0.0
        %2865 = vadd.xlane.f32.xlu0 %v2864
        %v2866 = vpop.xlane.xlu0 %2865
        %v2867 = vrcp.pop %v2845
        %v2868 = vmul.f32 %v2828, %v2867
        %v2869 = vrcp.pop %v2848
        %v2870 = vmul.f32 %v2830, %v2869
        %v2871 = vrcp.pop %v2851
        %v2872 = vmul.f32 %v2832, %v2871
        %v2873 = vrcp.pop %v2854
        %v2874 = vmul.f32 %v2834, %v2873
        %v2875 = vrcp.pop %v2857
        %v2876 = vmul.f32 %v2836, %v2875
        %v2877 = vrcp.pop %v2860
        %v2878 = vmul.f32 %v2838, %v2877
        %v2879 = vrcp.pop %v2863
        %v2880 = vmul.f32 %v2840, %v2879
        %v2881 = vrcp.pop %v2866
        %v2882 = vmul.f32 %v2842, %v2881
        %v2883 = vpack.c.bf16 %v2868, %v2868
        %v2884 = vpack.c.bf16 %v2870, %v2870
        %v2885 = vpack.c.bf16 %v2872, %v2872
        %v2886 = vpack.c.bf16 %v2874, %v2874
        %v2887 = vpack.c.bf16 %v2876, %v2876
        %v2888 = vpack.c.bf16 %v2878, %v2878
        %v2889 = vpack.c.bf16 %v2880, %v2880
        %v2890 = vpack.c.bf16 %v2882, %v2882
        %v2892 = vsel %vm901, %v2883, 0
        %v2895 = vsel %vm888, %v2419, 0
        %2897 = vmatprep.subr.bf16.mxu0 0
        %2898 = vmatpush1.bf16.msra.mxu0 %v2895
        %2899 = vmatprep.subr.bf16.mxu0 0
        %2900 = vmatpush1.bf16.msra.mxu0 0
        %2901 = vmatprep.subr.bf16.mxu0 0
        %2902 = vmatpush1.bf16.msra.mxu0 0
        %2903 = vmatprep.subr.bf16.mxu0 0
        %2904 = vmatpush1.bf16.msra.mxu0 0
        %2905 = vmatprep.subr.bf16.mxu0 0
        %2906 = vmatpush1.bf16.msra.mxu0 0
        %2907 = vmatprep.subr.bf16.mxu0 0
        %2908 = vmatpush1.bf16.msra.mxu0 0
        %2909 = vmatprep.subr.bf16.mxu0 0
        %2910 = vmatpush1.bf16.msra.mxu0 0
        %2911 = vmatprep.subr.bf16.mxu0 0
        %2912 = vmatpush1.bf16.msra.mxu0 0
        %2913 = vmatprep.subr.bf16.mxu0 0
        %2914 = vmatpush1.bf16.msra.mxu0 0
        %2915 = vmatprep.subr.bf16.mxu0 0
        %2916 = vmatpush1.bf16.msra.mxu0 0
        %2917 = vmatprep.subr.bf16.mxu0 0
        %2918 = vmatpush1.bf16.msra.mxu0 0
        %2919 = vmatprep.subr.bf16.mxu0 0
        %2920 = vmatpush1.bf16.msra.mxu0 0
        %2921 = vmatprep.subr.bf16.mxu0 0
        %2922 = vmatpush1.bf16.msra.mxu0 0
        %2923 = vmatprep.subr.bf16.mxu0 0
        %2924 = vmatpush1.bf16.msra.mxu0 0
        %2925 = vmatprep.subr.bf16.mxu0 0
        %2926 = vmatpush1.bf16.msra.mxu0 0
        %2927 = vmatprep.subr.bf16.mxu0 0
        %2928 = vmatpush1.bf16.msra.mxu0 0
        %2929 = vmatprep.mubr.bf16.mxu0 0
        %2930 = vmatmul.mubr.bf16.gmra.mrb[0].mxu0 %v2892
        %v2931 = vpop.f32.mrb[0].mxu0
        %v2932 = vadd.f32 0.0, %v2931
        %v2933 = vpop.f32.mrb[0].mxu0
        %v2934 = vpop.f32.mrb[0].mxu0
        %v2935 = vpop.f32.mrb[0].mxu0
        %2936 = vdwg.mxu0
        %v2938 = vsel %vm901, %v2884, 0
        %v2941 = vsel %vm888, %v2420, 0
        %2943 = vmatprep.subr.bf16.mxu0 0
        %2944 = vmatpush1.bf16.msra.mxu0 %v2941
        %2945 = vmatprep.subr.bf16.mxu0 0
        %2946 = vmatpush1.bf16.msra.mxu0 0
        %2947 = vmatprep.subr.bf16.mxu0 0
        %2948 = vmatpush1.bf16.msra.mxu0 0
        %2949 = vmatprep.subr.bf16.mxu0 0
        %2950 = vmatpush1.bf16.msra.mxu0 0
        %2951 = vmatprep.subr.bf16.mxu0 0
        %2952 = vmatpush1.bf16.msra.mxu0 0
        %2953 = vmatprep.subr.bf16.mxu0 0
        %2954 = vmatpush1.bf16.msra.mxu0 0
        %2955 = vmatprep.subr.bf16.mxu0 0
        %2956 = vmatpush1.bf16.msra.mxu0 0
        %2957 = vmatprep.subr.bf16.mxu0 0
        %2958 = vmatpush1.bf16.msra.mxu0 0
        %2959 = vmatprep.subr.bf16.mxu0 0
        %2960 = vmatpush1.bf16.msra.mxu0 0
        %2961 = vmatprep.subr.bf16.mxu0 0
        %2962 = vmatpush1.bf16.msra.mxu0 0
        %2963 = vmatprep.subr.bf16.mxu0 0
        %2964 = vmatpush1.bf16.msra.mxu0 0
        %2965 = vmatprep.subr.bf16.mxu0 0
        %2966 = vmatpush1.bf16.msra.mxu0 0
        %2967 = vmatprep.subr.bf16.mxu0 0
        %2968 = vmatpush1.bf16.msra.mxu0 0
        %2969 = vmatprep.subr.bf16.mxu0 0
        %2970 = vmatpush1.bf16.msra.mxu0 0
        %2971 = vmatprep.subr.bf16.mxu0 0
        %2972 = vmatpush1.bf16.msra.mxu0 0
        %2973 = vmatprep.subr.bf16.mxu0 0
        %2974 = vmatpush1.bf16.msra.mxu0 0
        %2975 = vmatprep.mubr.bf16.mxu0 0
        %2976 = vmatmul.mubr.bf16.gmra.mrb[0].mxu0 %v2938
        %v2977 = vpop.f32.mrb[0].mxu0
        %v2978 = vadd.f32 0.0, %v2977
        %v2979 = vpop.f32.mrb[0].mxu0
        %v2980 = vpop.f32.mrb[0].mxu0
        %v2981 = vpop.f32.mrb[0].mxu0
        %2982 = vdwg.mxu0
        %v2984 = vsel %vm901, %v2885, 0
        %v2987 = vsel %vm888, %v2421, 0
        %2989 = vmatprep.subr.bf16.mxu0 0
        %2990 = vmatpush1.bf16.msra.mxu0 %v2987
        %2991 = vmatprep.subr.bf16.mxu0 0
        %2992 = vmatpush1.bf16.msra.mxu0 0
        %2993 = vmatprep.subr.bf16.mxu0 0
        %2994 = vmatpush1.bf16.msra.mxu0 0
        %2995 = vmatprep.subr.bf16.mxu0 0
        %2996 = vmatpush1.bf16.msra.mxu0 0
        %2997 = vmatprep.subr.bf16.mxu0 0
        %2998 = vmatpush1.bf16.msra.mxu0 0
        %2999 = vmatprep.subr.bf16.mxu0 0
        %3000 = vmatpush1.bf16.msra.mxu0 0
        %3001 = vmatprep.subr.bf16.mxu0 0
        %3002 = vmatpush1.bf16.msra.mxu0 0
        %3003 = vmatprep.subr.bf16.mxu0 0
        %3004 = vmatpush1.bf16.msra.mxu0 0
        %3005 = vmatprep.subr.bf16.mxu0 0
        %3006 = vmatpush1.bf16.msra.mxu0 0
        %3007 = vmatprep.subr.bf16.mxu0 0
        %3008 = vmatpush1.bf16.msra.mxu0 0
        %3009 = vmatprep.subr.bf16.mxu0 0
        %3010 = vmatpush1.bf16.msra.mxu0 0
        %3011 = vmatprep.subr.bf16.mxu0 0
        %3012 = vmatpush1.bf16.msra.mxu0 0
        %3013 = vmatprep.subr.bf16.mxu0 0
        %3014 = vmatpush1.bf16.msra.mxu0 0
        %3015 = vmatprep.subr.bf16.mxu0 0
        %3016 = vmatpush1.bf16.msra.mxu0 0
        %3017 = vmatprep.subr.bf16.mxu0 0
        %3018 = vmatpush1.bf16.msra.mxu0 0
        %3019 = vmatprep.subr.bf16.mxu0 0
        %3020 = vmatpush1.bf16.msra.mxu0 0
        %3021 = vmatprep.mubr.bf16.mxu0 0
        %3022 = vmatmul.mubr.bf16.gmra.mrb[0].mxu0 %v2984
        %v3023 = vpop.f32.mrb[0].mxu0
        %v3024 = vadd.f32 0.0, %v3023
        %v3025 = vpop.f32.mrb[0].mxu0
        %v3026 = vpop.f32.mrb[0].mxu0
        %v3027 = vpop.f32.mrb[0].mxu0
        %3028 = vdwg.mxu0
        %v3030 = vsel %vm901, %v2886, 0
        %v3033 = vsel %vm888, %v2422, 0
        %3035 = vmatprep.subr.bf16.mxu0 0
        %3036 = vmatpush1.bf16.msra.mxu0 %v3033
        %3037 = vmatprep.subr.bf16.mxu0 0
        %3038 = vmatpush1.bf16.msra.mxu0 0
        %3039 = vmatprep.subr.bf16.mxu0 0
        %3040 = vmatpush1.bf16.msra.mxu0 0
        %3041 = vmatprep.subr.bf16.mxu0 0
        %3042 = vmatpush1.bf16.msra.mxu0 0
        %3043 = vmatprep.subr.bf16.mxu0 0
        %3044 = vmatpush1.bf16.msra.mxu0 0
        %3045 = vmatprep.subr.bf16.mxu0 0
        %3046 = vmatpush1.bf16.msra.mxu0 0
        %3047 = vmatprep.subr.bf16.mxu0 0
        %3048 = vmatpush1.bf16.msra.mxu0 0
        %3049 = vmatprep.subr.bf16.mxu0 0
        %3050 = vmatpush1.bf16.msra.mxu0 0
        %3051 = vmatprep.subr.bf16.mxu0 0
        %3052 = vmatpush1.bf16.msra.mxu0 0
        %3053 = vmatprep.subr.bf16.mxu0 0
        %3054 = vmatpush1.bf16.msra.mxu0 0
        %3055 = vmatprep.subr.bf16.mxu0 0
        %3056 = vmatpush1.bf16.msra.mxu0 0
        %3057 = vmatprep.subr.bf16.mxu0 0
        %3058 = vmatpush1.bf16.msra.mxu0 0
        %3059 = vmatprep.subr.bf16.mxu0 0
        %3060 = vmatpush1.bf16.msra.mxu0 0
        %3061 = vmatprep.subr.bf16.mxu0 0
        %3062 = vmatpush1.bf16.msra.mxu0 0
        %3063 = vmatprep.subr.bf16.mxu0 0
        %3064 = vmatpush1.bf16.msra.mxu0 0
        %3065 = vmatprep.subr.bf16.mxu0 0
        %3066 = vmatpush1.bf16.msra.mxu0 0
        %3067 = vmatprep.mubr.bf16.mxu0 0
        %3068 = vmatmul.mubr.bf16.gmra.mrb[0].mxu0 %v3030
        %v3069 = vpop.f32.mrb[0].mxu0
        %v3070 = vadd.f32 0.0, %v3069
        %v3071 = vpop.f32.mrb[0].mxu0
        %v3072 = vpop.f32.mrb[0].mxu0
        %v3073 = vpop.f32.mrb[0].mxu0
        %3074 = vdwg.mxu0
        %v3076 = vsel %vm901, %v2887, 0
        %v3079 = vsel %vm888, %v2423, 0
        %3081 = vmatprep.subr.bf16.mxu0 0
        %3082 = vmatpush1.bf16.msra.mxu0 %v3079
        %3083 = vmatprep.subr.bf16.mxu0 0
        %3084 = vmatpush1.bf16.msra.mxu0 0
        %3085 = vmatprep.subr.bf16.mxu0 0
        %3086 = vmatpush1.bf16.msra.mxu0 0
        %3087 = vmatprep.subr.bf16.mxu0 0
        %3088 = vmatpush1.bf16.msra.mxu0 0
        %3089 = vmatprep.subr.bf16.mxu0 0
        %3090 = vmatpush1.bf16.msra.mxu0 0
        %3091 = vmatprep.subr.bf16.mxu0 0
        %3092 = vmatpush1.bf16.msra.mxu0 0
        %3093 = vmatprep.subr.bf16.mxu0 0
        %3094 = vmatpush1.bf16.msra.mxu0 0
        %3095 = vmatprep.subr.bf16.mxu0 0
        %3096 = vmatpush1.bf16.msra.mxu0 0
        %3097 = vmatprep.subr.bf16.mxu0 0
        %3098 = vmatpush1.bf16.msra.mxu0 0
        %3099 = vmatprep.subr.bf16.mxu0 0
        %3100 = vmatpush1.bf16.msra.mxu0 0
        %3101 = vmatprep.subr.bf16.mxu0 0
        %3102 = vmatpush1.bf16.msra.mxu0 0
        %3103 = vmatprep.subr.bf16.mxu0 0
        %3104 = vmatpush1.bf16.msra.mxu0 0
        %3105 = vmatprep.subr.bf16.mxu0 0
        %3106 = vmatpush1.bf16.msra.mxu0 0
        %3107 = vmatprep.subr.bf16.mxu0 0
        %3108 = vmatpush1.bf16.msra.mxu0 0
        %3109 = vmatprep.subr.bf16.mxu0 0
        %3110 = vmatpush1.bf16.msra.mxu0 0
        %3111 = vmatprep.subr.bf16.mxu0 0
        %3112 = vmatpush1.bf16.msra.mxu0 0
        %3113 = vmatprep.mubr.bf16.mxu0 0
        %3114 = vmatmul.mubr.bf16.gmra.mrb[0].mxu0 %v3076
        %v3115 = vpop.f32.mrb[0].mxu0
        %v3116 = vadd.f32 0.0, %v3115
        %v3117 = vpop.f32.mrb[0].mxu0
        %v3118 = vpop.f32.mrb[0].mxu0
        %v3119 = vpop.f32.mrb[0].mxu0
        %3120 = vdwg.mxu0
        %v3122 = vsel %vm901, %v2888, 0
        %v3125 = vsel %vm888, %v2424, 0
        %3127 = vmatprep.subr.bf16.mxu0 0
        %3128 = vmatpush1.bf16.msra.mxu0 %v3125
        %3129 = vmatprep.subr.bf16.mxu0 0
        %3130 = vmatpush1.bf16.msra.mxu0 0
        %3131 = vmatprep.subr.bf16.mxu0 0
        %3132 = vmatpush1.bf16.msra.mxu0 0
        %3133 = vmatprep.subr.bf16.mxu0 0
        %3134 = vmatpush1.bf16.msra.mxu0 0
        %3135 = vmatprep.subr.bf16.mxu0 0
        %3136 = vmatpush1.bf16.msra.mxu0 0
        %3137 = vmatprep.subr.bf16.mxu0 0
        %3138 = vmatpush1.bf16.msra.mxu0 0
        %3139 = vmatprep.subr.bf16.mxu0 0
        %3140 = vmatpush1.bf16.msra.mxu0 0
        %3141 = vmatprep.subr.bf16.mxu0 0
        %3142 = vmatpush1.bf16.msra.mxu0 0
        %3143 = vmatprep.subr.bf16.mxu0 0
        %3144 = vmatpush1.bf16.msra.mxu0 0
        %3145 = vmatprep.subr.bf16.mxu0 0
        %3146 = vmatpush1.bf16.msra.mxu0 0
        %3147 = vmatprep.subr.bf16.mxu0 0
        %3148 = vmatpush1.bf16.msra.mxu0 0
        %3149 = vmatprep.subr.bf16.mxu0 0
        %3150 = vmatpush1.bf16.msra.mxu0 0
        %3151 = vmatprep.subr.bf16.mxu0 0
        %3152 = vmatpush1.bf16.msra.mxu0 0
        %3153 = vmatprep.subr.bf16.mxu0 0
        %3154 = vmatpush1.bf16.msra.mxu0 0
        %3155 = vmatprep.subr.bf16.mxu0 0
        %3156 = vmatpush1.bf16.msra.mxu0 0
        %3157 = vmatprep.subr.bf16.mxu0 0
        %3158 = vmatpush1.bf16.msra.mxu0 0
        %3159 = vmatprep.mubr.bf16.mxu0 0
        %3160 = vmatmul.mubr.bf16.gmra.mrb[0].mxu0 %v3122
        %v3161 = vpop.f32.mrb[0].mxu0
        %v3162 = vadd.f32 0.0, %v3161
        %v3163 = vpop.f32.mrb[0].mxu0
        %v3164 = vpop.f32.mrb[0].mxu0
        %v3165 = vpop.f32.mrb[0].mxu0
        %3166 = vdwg.mxu0
        %v3168 = vsel %vm901, %v2889, 0
        %v3171 = vsel %vm888, %v2425, 0
        %3173 = vmatprep.subr.bf16.mxu0 0
        %3174 = vmatpush1.bf16.msra.mxu0 %v3171
        %3175 = vmatprep.subr.bf16.mxu0 0
        %3176 = vmatpush1.bf16.msra.mxu0 0
        %3177 = vmatprep.subr.bf16.mxu0 0
        %3178 = vmatpush1.bf16.msra.mxu0 0
        %3179 = vmatprep.subr.bf16.mxu0 0
        %3180 = vmatpush1.bf16.msra.mxu0 0
        %3181 = vmatprep.subr.bf16.mxu0 0
        %3182 = vmatpush1.bf16.msra.mxu0 0
        %3183 = vmatprep.subr.bf16.mxu0 0
        %3184 = vmatpush1.bf16.msra.mxu0 0
        %3185 = vmatprep.subr.bf16.mxu0 0
        %3186 = vmatpush1.bf16.msra.mxu0 0
        %3187 = vmatprep.subr.bf16.mxu0 0
        %3188 = vmatpush1.bf16.msra.mxu0 0
        %3189 = vmatprep.subr.bf16.mxu0 0
        %3190 = vmatpush1.bf16.msra.mxu0 0
        %3191 = vmatprep.subr.bf16.mxu0 0
        %3192 = vmatpush1.bf16.msra.mxu0 0
        %3193 = vmatprep.subr.bf16.mxu0 0
        %3194 = vmatpush1.bf16.msra.mxu0 0
        %3195 = vmatprep.subr.bf16.mxu0 0
        %3196 = vmatpush1.bf16.msra.mxu0 0
        %3197 = vmatprep.subr.bf16.mxu0 0
        %3198 = vmatpush1.bf16.msra.mxu0 0
        %3199 = vmatprep.subr.bf16.mxu0 0
        %3200 = vmatpush1.bf16.msra.mxu0 0
        %3201 = vmatprep.subr.bf16.mxu0 0
        %3202 = vmatpush1.bf16.msra.mxu0 0
        %3203 = vmatprep.subr.bf16.mxu0 0
        %3204 = vmatpush1.bf16.msra.mxu0 0
        %3205 = vmatprep.mubr.bf16.mxu0 0
        %3206 = vmatmul.mubr.bf16.gmra.mrb[0].mxu0 %v3168
        %v3207 = vpop.f32.mrb[0].mxu0
        %v3208 = vadd.f32 0.0, %v3207
        %v3209 = vpop.f32.mrb[0].mxu0
        %v3210 = vpop.f32.mrb[0].mxu0
        %v3211 = vpop.f32.mrb[0].mxu0
        %3212 = vdwg.mxu0
        %v3214 = vsel %vm901, %v2890, 0
        %v3217 = vsel %vm888, %v2426, 0
        %3219 = vmatprep.subr.bf16.mxu0 0
        %3220 = vmatpush1.bf16.msra.mxu0 %v3217
        %3221 = vmatprep.subr.bf16.mxu0 0
        %3222 = vmatpush1.bf16.msra.mxu0 0
        %3223 = vmatprep.subr.bf16.mxu0 0
        %3224 = vmatpush1.bf16.msra.mxu0 0
        %3225 = vmatprep.subr.bf16.mxu0 0
        %3226 = vmatpush1.bf16.msra.mxu0 0
        %3227 = vmatprep.subr.bf16.mxu0 0
        %3228 = vmatpush1.bf16.msra.mxu0 0
        %3229 = vmatprep.subr.bf16.mxu0 0
        %3230 = vmatpush1.bf16.msra.mxu0 0
        %3231 = vmatprep.subr.bf16.mxu0 0
        %3232 = vmatpush1.bf16.msra.mxu0 0
        %3233 = vmatprep.subr.bf16.mxu0 0
        %3234 = vmatpush1.bf16.msra.mxu0 0
        %3235 = vmatprep.subr.bf16.mxu0 0
        %3236 = vmatpush1.bf16.msra.mxu0 0
        %3237 = vmatprep.subr.bf16.mxu0 0
        %3238 = vmatpush1.bf16.msra.mxu0 0
        %3239 = vmatprep.subr.bf16.mxu0 0
        %3240 = vmatpush1.bf16.msra.mxu0 0
        %3241 = vmatprep.subr.bf16.mxu0 0
        %3242 = vmatpush1.bf16.msra.mxu0 0
        %3243 = vmatprep.subr.bf16.mxu0 0
        %3244 = vmatpush1.bf16.msra.mxu0 0
        %3245 = vmatprep.subr.bf16.mxu0 0
        %3246 = vmatpush1.bf16.msra.mxu0 0
        %3247 = vmatprep.subr.bf16.mxu0 0
        %3248 = vmatpush1.bf16.msra.mxu0 0
        %3249 = vmatprep.subr.bf16.mxu0 0
        %3250 = vmatpush1.bf16.msra.mxu0 0
        %3251 = vmatprep.mubr.bf16.mxu0 0
        %3252 = vmatmul.mubr.bf16.gmra.mrb[0].mxu0 %v3214
        %v3253 = vpop.f32.mrb[0].mxu0
        %v3254 = vadd.f32 0.0, %v3253
        %v3255 = vpop.f32.mrb[0].mxu0
        %v3256 = vpop.f32.mrb[0].mxu0
        %v3257 = vpop.f32.mrb[0].mxu0
        %3258 = vdwg.mxu0
        %v3259 = vpack.c.bf16 %v2932, %v2932
        %v3260 = vpack.c.bf16 %v2978, %v2978
        %v3261 = vpack.c.bf16 %v3024, %v3024
        %v3262 = vpack.c.bf16 %v3070, %v3070
        %v3263 = vpack.c.bf16 %v3116, %v3116
        %v3264 = vpack.c.bf16 %v3162, %v3162
        %v3265 = vpack.c.bf16 %v3208, %v3208
        %v3266 = vpack.c.bf16 %v3254, %v3254
        %3268 = vrot.lane.b32.xlu0 %v3260, 8
        %v3269 = vpop.permute.xlu0 %3268
        %3271 = vrot.lane.b32.xlu0 %v3261, 16
        %v3272 = vpop.permute.xlu0 %3271
        %3274 = vrot.lane.b32.xlu0 %v3262, 24
        %v3275 = vpop.permute.xlu0 %3274
        %3277 = vrot.lane.b32.xlu0 %v3263, 32
        %v3278 = vpop.permute.xlu0 %3277
        %3280 = vrot.lane.b32.xlu0 %v3264, 40
        %v3281 = vpop.permute.xlu0 %3280
        %3283 = vrot.lane.b32.xlu0 %v3265, 48
        %v3284 = vpop.permute.xlu0 %3283
        %3286 = vrot.lane.b32.xlu0 %v3266, 56
        %v3287 = vpop.permute.xlu0 %3286
        %v3290 = vsel %vm901, %v3259, %v3269
        %v3292 = vsel %vm1906, %v3290, %v3272
        %v3294 = vsel %vm1909, %v3292, %v3275
        %v3296 = vsel %vm1912, %v3294, %v3278
        %v3298 = vsel %vm1915, %v3296, %v3281
        %v3300 = vsel %vm1918, %v3298, %v3284
        %v3302 = vsel %vm1921, %v3300, %v3287
        %v3304 = vlaneseq
        %v3305 = vshrl.u32 %v3304, 7
        %v3306 = vsub.s32 0, %v3305
        %v3307 = vrot.slane %v2039, %v3306
        %v3317 = vunpack.c.l.b16 %v2031
        %v3318 = vunpack.c.l.b16 %v2032
        %v3319 = vunpack.c.l.b16 %v2033
        %v3320 = vunpack.c.l.b16 %v2034
        %v3321 = vunpack.c.l.b16 %v2035
        %v3322 = vunpack.c.l.b16 %v2036
        %v3323 = vunpack.c.l.b16 %v2037
        %v3324 = vunpack.c.l.b16 %v2038
        %v3325 = vpack.c.b16 %v3318, %v3317
        %v3326 = vpack.c.b16 %v3320, %v3319
        %v3327 = vpack.c.b16 %v3322, %v3321
        %v3328 = vpack.c.b16 %v3324, %v3323
        %v3333 = vsel %vm1954, %v3302, 0
        %3335 = vmatprep.subr.bf16.mxu0 0
        %3336 = vmatpush1.bf16.msra.mxu0 %v3325
        %3337 = vmatprep.subr.bf16.mxu0 0
        %3338 = vmatpush1.bf16.msra.mxu0 %v3326
        %3339 = vmatprep.subr.bf16.mxu0 0
        %3340 = vmatpush1.bf16.msra.mxu0 %v3327
        %3341 = vmatprep.subr.bf16.mxu0 0
        %3342 = vmatpush1.bf16.msra.mxu0 %v3328
        %3343 = vmatprep.subr.bf16.mxu0 0
        %3344 = vmatpush1.bf16.msra.mxu0 0
        %3345 = vmatprep.subr.bf16.mxu0 0
        %3346 = vmatpush1.bf16.msra.mxu0 0
        %3347 = vmatprep.subr.bf16.mxu0 0
        %3348 = vmatpush1.bf16.msra.mxu0 0
        %3349 = vmatprep.subr.bf16.mxu0 0
        %3350 = vmatpush1.bf16.msra.mxu0 0
        %3351 = vmatprep.subr.bf16.mxu0 0
        %3352 = vmatpush1.bf16.msra.mxu0 0
        %3353 = vmatprep.subr.bf16.mxu0 0
        %3354 = vmatpush1.bf16.msra.mxu0 0
        %3355 = vmatprep.subr.bf16.mxu0 0
        %3356 = vmatpush1.bf16.msra.mxu0 0
        %3357 = vmatprep.subr.bf16.mxu0 0
        %3358 = vmatpush1.bf16.msra.mxu0 0
        %3359 = vmatprep.subr.bf16.mxu0 0
        %3360 = vmatpush1.bf16.msra.mxu0 0
        %3361 = vmatprep.subr.bf16.mxu0 0
        %3362 = vmatpush1.bf16.msra.mxu0 0
        %3363 = vmatprep.subr.bf16.mxu0 0
        %3364 = vmatpush1.bf16.msra.mxu0 0
        %3365 = vmatprep.subr.bf16.mxu0 0
        %3366 = vmatpush1.bf16.msra.mxu0 0
        %3367 = vmatprep.mubr.bf16.mxu0 0
        %3368 = vmatmul.mubr.bf16.gmra.mrb[0].mxu0 %v3333
        %v3369 = vpop.f32.mrb[0].mxu0
        %v3370 = vadd.f32 %v3307, %v3369
        %v3371 = vpop.f32.mrb[0].mxu0
        %v3372 = vpop.f32.mrb[0].mxu0
        %v3373 = vpop.f32.mrb[0].mxu0
        %3374 = vdwg.mxu0
        %v3375 = vadd.f32 %v3370, %v2027
        %v3376 = vld [vmem:[#allocation14] sm:$0x1]
        %v3377 = vld [vmem:[#allocation16] sm:$0x1]
        %v3378 = vsel %vm1954, %v3375, 0.0
        %3379 = vadd.xlane.f32.xlu0 %v3378
        %v3380 = vpop.xlane.xlu0 %3379
        %v3381 = vmul.f32 %v3380, %v2003
        %v3382 = vsub.f32 %v3375, %v3381
        %v3383 = vmul.f32 %v3382, %v3382
        %v3384 = vsel %vm1954, %v3383, 0.0
        %3385 = vadd.xlane.f32.xlu0 %v3384
        %v3386 = vpop.xlane.xlu0 %3385
        %v3387 = vmul.f32 %v3386, %v2003
        %v3388 = vadd.f32 %v3387, 1e-05
        %v3389 = vrsqrt.pop %v3388
        %v3390 = vmul.f32 %v3382, %v3389
        %v3392 = vlaneseq
        %v3393 = vshrl.u32 %v3392, 7
        %v3394 = vsub.s32 0, %v3393
        %v3395 = vrot.slane %v3376, %v3394
        %v3397 = vmul.f32 %v3390, %v3395
        %v3399 = vlaneseq
        %v3400 = vshrl.u32 %v3399, 7
        %v3401 = vsub.s32 0, %v3400
        %v3402 = vrot.slane %v3377, %v3401
        %v3404 = vadd.f32 %v3397, %v3402
        %v3405 = vpack.c.bf16 %v3404, %v3404
        %v3406 = vld [vmem:[%s16] sm:$0xff]
        %v3407 = vld [vmem:[%s16 + $0x8] sm:$0xff]
        %v3408 = vld [vmem:[%s16 + $0x10] sm:$0xff]
        %v3409 = vld [vmem:[%s16 + $0x18] sm:$0xff]
        %v3410 = vld [vmem:[%s16 + $0x20] sm:$0xff]
        %v3411 = vld [vmem:[%s16 + $0x28] sm:$0xff]
        %v3412 = vld [vmem:[%s16 + $0x30] sm:$0xff]
        %v3413 = vld [vmem:[%s16 + $0x38] sm:$0xff]
        %v3414 = vld [vmem:[#allocation17] sm:$0x3]
        %v3416 = vlaneseq
        %v3417 = vshrl.u32 %v3416, 7
        %v3418 = vsub.s32 0, %v3417
        %v3419 = vrot.slane %v3414, %v3418
        %v3420 = vlaneseq
        %v3421 = vshrl.u32 %v3420, 7
        %v3422 = vsub.s32 1, %v3421
        %v3423 = vrot.slane %v3414, %v3422
        %v3434 = vunpack.c.l.b16 %v3406
        %v3435 = vunpack.c.h.b16 %v3406
        %v3436 = vunpack.c.l.b16 %v3407
        %v3437 = vunpack.c.h.b16 %v3407
        %v3438 = vunpack.c.l.b16 %v3408
        %v3439 = vunpack.c.h.b16 %v3408
        %v3440 = vunpack.c.l.b16 %v3409
        %v3441 = vunpack.c.h.b16 %v3409
        %v3442 = vunpack.c.l.b16 %v3410
        %v3443 = vunpack.c.h.b16 %v3410
        %v3444 = vunpack.c.l.b16 %v3411
        %v3445 = vunpack.c.h.b16 %v3411
        %v3446 = vunpack.c.l.b16 %v3412
        %v3447 = vunpack.c.h.b16 %v3412
        %v3448 = vunpack.c.l.b16 %v3413
        %v3449 = vunpack.c.h.b16 %v3413
        %v3450 = vpack.c.b16 %v3436, %v3434
        %v3451 = vpack.c.b16 %v3437, %v3435
        %v3452 = vpack.c.b16 %v3440, %v3438
        %v3453 = vpack.c.b16 %v3441, %v3439
        %v3454 = vpack.c.b16 %v3444, %v3442
        %v3455 = vpack.c.b16 %v3445, %v3443
        %v3456 = vpack.c.b16 %v3448, %v3446
        %v3457 = vpack.c.b16 %v3449, %v3447
        %v3467 = vsel %vm1954, %v3405, 0
        %3469 = vmatprep.subr.bf16.mxu0 %v3451
        %3470 = vmatpush1.bf16.msra.mxu0 %v3450
        %3471 = vmatprep.subr.bf16.mxu0 %v3453
        %3472 = vmatpush1.bf16.msra.mxu0 %v3452
        %3473 = vmatprep.subr.bf16.mxu0 %v3455
        %3474 = vmatpush1.bf16.msra.mxu0 %v3454
        %3475 = vmatprep.subr.bf16.mxu0 %v3457
        %3476 = vmatpush1.bf16.msra.mxu0 %v3456
        %3477 = vmatprep.subr.bf16.mxu0 0
        %3478 = vmatpush1.bf16.msra.mxu0 0
        %3479 = vmatprep.subr.bf16.mxu0 0
        %3480 = vmatpush1.bf16.msra.mxu0 0
        %3481 = vmatprep.subr.bf16.mxu0 0
        %3482 = vmatpush1.bf16.msra.mxu0 0
        %3483 = vmatprep.subr.bf16.mxu0 0
        %3484 = vmatpush1.bf16.msra.mxu0 0
        %3485 = vmatprep.subr.bf16.mxu0 0
        %3486 = vmatpush1.bf16.msra.mxu0 0
        %3487 = vmatprep.subr.bf16.mxu0 0
        %3488 = vmatpush1.bf16.msra.mxu0 0
        %3489 = vmatprep.subr.bf16.mxu0 0
        %3490 = vmatpush1.bf16.msra.mxu0 0
        %3491 = vmatprep.subr.bf16.mxu0 0
        %3492 = vmatpush1.bf16.msra.mxu0 0
        %3493 = vmatprep.subr.bf16.mxu0 0
        %3494 = vmatpush1.bf16.msra.mxu0 0
        %3495 = vmatprep.subr.bf16.mxu0 0
        %3496 = vmatpush1.bf16.msra.mxu0 0
        %3497 = vmatprep.subr.bf16.mxu0 0
        %3498 = vmatpush1.bf16.msra.mxu0 0
        %3499 = vmatprep.subr.bf16.mxu0 0
        %3500 = vmatpush1.bf16.msra.mxu0 0
        %3501 = vmatprep.mubr.bf16.mxu0 0
        %3502 = vmatmul.mubr.bf16.gmra.mrb[0].mxu0 %v3467
        %v3503 = vpop.f32.mrb[0].mxu0
        %v3504 = vadd.f32 %v3419, %v3503
        %v3505 = vpop.f32.mrb[0].mxu0
        %v3506 = vadd.f32 %v3423, %v3505
        %v3507 = vpop.f32.mrb[0].mxu0
        %v3508 = vpop.f32.mrb[0].mxu0
        %3509 = vdwg.mxu0
        %v3510 = vmax.f32 %v3504, 0.0
        %v3511 = vmax.f32 %v3506, 0.0
        %v3512 = vpack.c.bf16 %v3510, %v3510
        %v3513 = vpack.c.bf16 %v3511, %v3511
        %v3514 = vld [vmem:[%s18] sm:$0xf]
        %v3515 = vld [vmem:[%s18 + $0x4] sm:$0xf]
        %v3516 = vld [vmem:[%s18 + $0x8] sm:$0xf]
        %v3517 = vld [vmem:[%s18 + $0xc] sm:$0xf]
        %v3518 = vld [vmem:[%s18 + $0x10] sm:$0xf]
        %v3519 = vld [vmem:[%s18 + $0x14] sm:$0xf]
        %v3520 = vld [vmem:[%s18 + $0x18] sm:$0xf]
        %v3521 = vld [vmem:[%s18 + $0x1c] sm:$0xf]
        %v3522 = vld [vmem:[%s18 + $0x20] sm:$0xf]
        %v3523 = vld [vmem:[%s18 + $0x24] sm:$0xf]
        %v3524 = vld [vmem:[%s18 + $0x28] sm:$0xf]
        %v3525 = vld [vmem:[%s18 + $0x2c] sm:$0xf]
        %v3526 = vld [vmem:[%s18 + $0x30] sm:$0xf]
        %v3527 = vld [vmem:[%s18 + $0x34] sm:$0xf]
        %v3528 = vld [vmem:[%s18 + $0x38] sm:$0xf]
        %v3529 = vld [vmem:[%s18 + $0x3c] sm:$0xf]
        %v3530 = vld [vmem:[%s18 + $0x40] sm:$0xf]
        %v3531 = vld [vmem:[%s18 + $0x44] sm:$0xf]
        %v3532 = vld [vmem:[%s18 + $0x48] sm:$0xf]
        %v3533 = vld [vmem:[%s18 + $0x4c] sm:$0xf]
        %v3534 = vld [vmem:[%s18 + $0x50] sm:$0xf]
        %v3535 = vld [vmem:[%s18 + $0x54] sm:$0xf]
        %v3536 = vld [vmem:[%s18 + $0x58] sm:$0xf]
        %v3537 = vld [vmem:[%s18 + $0x5c] sm:$0xf]
        %v3538 = vld [vmem:[%s18 + $0x60] sm:$0xf]
        %v3539 = vld [vmem:[%s18 + $0x64] sm:$0xf]
        %v3540 = vld [vmem:[%s18 + $0x68] sm:$0xf]
        %v3541 = vld [vmem:[%s18 + $0x6c] sm:$0xf]
        %v3542 = vld [vmem:[%s18 + $0x70] sm:$0xf]
        %v3543 = vld [vmem:[%s18 + $0x74] sm:$0xf]
        %v3544 = vld [vmem:[%s18 + $0x78] sm:$0xf]
        %v3545 = vld [vmem:[%s18 + $0x7c] sm:$0xf]
        %v3546 = vld [vmem:[%s19] sm:$0x1]
        %v3548 = vlaneseq
        %v3549 = vshrl.u32 %v3548, 7
        %v3550 = vsub.s32 0, %v3549
        %v3551 = vrot.slane %v3546, %v3550
        %v3585 = vunpack.c.l.b16 %v3514
        %v3586 = vunpack.c.l.b16 %v3515
        %v3587 = vunpack.c.l.b16 %v3516
        %v3588 = vunpack.c.l.b16 %v3517
        %v3589 = vunpack.c.l.b16 %v3518
        %v3590 = vunpack.c.l.b16 %v3519
        %v3591 = vunpack.c.l.b16 %v3520
        %v3592 = vunpack.c.l.b16 %v3521
        %v3593 = vunpack.c.l.b16 %v3522
        %v3594 = vunpack.c.l.b16 %v3523
        %v3595 = vunpack.c.l.b16 %v3524
        %v3596 = vunpack.c.l.b16 %v3525
        %v3597 = vunpack.c.l.b16 %v3526
        %v3598 = vunpack.c.l.b16 %v3527
        %v3599 = vunpack.c.l.b16 %v3528
        %v3600 = vunpack.c.l.b16 %v3529
        %v3601 = vunpack.c.l.b16 %v3530
        %v3602 = vunpack.c.l.b16 %v3531
        %v3603 = vunpack.c.l.b16 %v3532
        %v3604 = vunpack.c.l.b16 %v3533
        %v3605 = vunpack.c.l.b16 %v3534
        %v3606 = vunpack.c.l.b16 %v3535
        %v3607 = vunpack.c.l.b16 %v3536
        %v3608 = vunpack.c.l.b16 %v3537
        %v3609 = vunpack.c.l.b16 %v3538
        %v3610 = vunpack.c.l.b16 %v3539
        %v3611 = vunpack.c.l.b16 %v3540
        %v3612 = vunpack.c.l.b16 %v3541
        %v3613 = vunpack.c.l.b16 %v3542
        %v3614 = vunpack.c.l.b16 %v3543
        %v3615 = vunpack.c.l.b16 %v3544
        %v3616 = vunpack.c.l.b16 %v3545
        %v3617 = vpack.c.b16 %v3586, %v3585
        %v3618 = vpack.c.b16 %v3588, %v3587
        %v3619 = vpack.c.b16 %v3590, %v3589
        %v3620 = vpack.c.b16 %v3592, %v3591
        %v3621 = vpack.c.b16 %v3594, %v3593
        %v3622 = vpack.c.b16 %v3596, %v3595
        %v3623 = vpack.c.b16 %v3598, %v3597
        %v3624 = vpack.c.b16 %v3600, %v3599
        %v3625 = vpack.c.b16 %v3602, %v3601
        %v3626 = vpack.c.b16 %v3604, %v3603
        %v3627 = vpack.c.b16 %v3606, %v3605
        %v3628 = vpack.c.b16 %v3608, %v3607
        %v3629 = vpack.c.b16 %v3610, %v3609
        %v3630 = vpack.c.b16 %v3612, %v3611
        %v3631 = vpack.c.b16 %v3614, %v3613
        %v3632 = vpack.c.b16 %v3616, %v3615
        %3649 = vmatprep.subr.bf16.mxu0 0
        %3650 = vmatpush1.bf16.msra.mxu0 %v3617
        %3651 = vmatprep.subr.bf16.mxu0 0
        %3652 = vmatpush1.bf16.msra.mxu0 %v3618
        %3653 = vmatprep.subr.bf16.mxu0 0
        %3654 = vmatpush1.bf16.msra.mxu0 %v3619
        %3655 = vmatprep.subr.bf16.mxu0 0
        %3656 = vmatpush1.bf16.msra.mxu0 %v3620
        %3657 = vmatprep.subr.bf16.mxu0 0
        %3658 = vmatpush1.bf16.msra.mxu0 %v3621
        %3659 = vmatprep.subr.bf16.mxu0 0
        %3660 = vmatpush1.bf16.msra.mxu0 %v3622
        %3661 = vmatprep.subr.bf16.mxu0 0
        %3662 = vmatpush1.bf16.msra.mxu0 %v3623
        %3663 = vmatprep.subr.bf16.mxu0 0
        %3664 = vmatpush1.bf16.msra.mxu0 %v3624
        %3665 = vmatprep.subr.bf16.mxu0 0
        %3666 = vmatpush1.bf16.msra.mxu0 %v3625
        %3667 = vmatprep.subr.bf16.mxu0 0
        %3668 = vmatpush1.bf16.msra.mxu0 %v3626
        %3669 = vmatprep.subr.bf16.mxu0 0
        %3670 = vmatpush1.bf16.msra.mxu0 %v3627
        %3671 = vmatprep.subr.bf16.mxu0 0
        %3672 = vmatpush1.bf16.msra.mxu0 %v3628
        %3673 = vmatprep.subr.bf16.mxu0 0
        %3674 = vmatpush1.bf16.msra.mxu0 %v3629
        %3675 = vmatprep.subr.bf16.mxu0 0
        %3676 = vmatpush1.bf16.msra.mxu0 %v3630
        %3677 = vmatprep.subr.bf16.mxu0 0
        %3678 = vmatpush1.bf16.msra.mxu0 %v3631
        %3679 = vmatprep.subr.bf16.mxu0 0
        %3680 = vmatpush1.bf16.msra.mxu0 %v3632
        %3681 = vmatprep.mubr.bf16.mxu0 %v3513
        %3682 = vmatmul.mubr.bf16.gmra.mrb[0].mxu0 %v3512
        %v3683 = vpop.f32.mrb[0].mxu0
        %v3684 = vadd.f32 %v3551, %v3683
        %v3685 = vpop.f32.mrb[0].mxu0
        %v3686 = vpop.f32.mrb[0].mxu0
        %v3687 = vpop.f32.mrb[0].mxu0
        %3688 = vdwg.mxu0
        %v3689 = vadd.f32 %v3684, %v3404
        %v3690 = vld [vmem:[%s20] sm:$0x1]
        %v3691 = vld [vmem:[%s21] sm:$0x1]
        %v3692 = vsel %vm1954, %v3689, 0.0
        %3693 = vadd.xlane.f32.xlu0 %v3692
        %v3694 = vpop.xlane.xlu0 %3693
        %v3695 = vmul.f32 %v3694, %v2003
        %v3696 = vsub.f32 %v3689, %v3695
        %v3697 = vmul.f32 %v3696, %v3696
        %v3698 = vsel %vm1954, %v3697, 0.0
        %3699 = vadd.xlane.f32.xlu0 %v3698
        %v3700 = vpop.xlane.xlu0 %3699
        %v3701 = vmul.f32 %v3700, %v2003
        %v3702 = vadd.f32 %v3701, 1e-05
        %v3703 = vrsqrt.pop %v3702
        %v3704 = vmul.f32 %v3696, %v3703
        %v3706 = vlaneseq
        %v3707 = vshrl.u32 %v3706, 7
        %v3708 = vsub.s32 0, %v3707
        %v3709 = vrot.slane %v3690, %v3708
        %v3711 = vmul.f32 %v3704, %v3709
        %v3713 = vlaneseq
        %v3714 = vshrl.u32 %v3713, 7
        %v3715 = vsub.s32 0, %v3714
        %v3716 = vrot.slane %v3691, %v3715
        %v3718 = vadd.f32 %v3711, %v3716
        %3719 = vst.msk [vmem:[%s839] sm:$0xff] %vm1954, %v3718
        %s3720 = sand.u32 %s532, 1
        %s3721 = scalar_lea.sflag [#allocation4], %s3720
        %s3722 = sand.u32 %s532, 1
        %s3723 = smul.addr %s3722, 8
        %s3724 = scalar_lea.vmem [#allocation19], %s3723
        // Predicated region
        $region149: #{tpu_custom_call.1} parent=107 // pred_check
          %p3725 = pneg %p542
        $region150: #{tpu_custom_call.1} parent=107 // pred_check_branch
          %3727 = sbr.rel (%p3725) target = $region152
        $region151: #{tpu_custom_call.1} parent=107 // pred_region
          %s3729 = ssub.s32 128, 128
          %3730 = vsyncadd %s3721, %s3729
          %s3731 = smul.addr %s42, 128
          %s3732 = scalar_lea.hbm %s22, %s3731
          %s3734 = sshll.u32 %s3724, 4
          %s3735 = int_to_ptr.vmem [resolvable:$true] %s3734
          %3737 = dma.vmem_to_hbm [thread:$0]  %s3735, 128, %s3732, %s3721
        $region152: #{tpu_custom_call.1} parent=107 // pred_fallthru
          _
      $region108: #{tpu_custom_call.1} parent=5 // pred_fallthru
        _
      %p3738 = scmp.le.s32.totalorder 2, %s37
      // Predicated region
      $region153: #{tpu_custom_call.1} parent=5 // pred_check
        %p3739 = pneg %p3738
      $region154: #{tpu_custom_call.1} parent=5 // pred_check_branch
        %3741 = sbr.rel (%p3739) target = $region156
      $region155: #{tpu_custom_call.1} parent=5 // pred_region
        %s3742 = ssub.s32 %s37, 2
        // Predicated region
        $region157: #{tpu_custom_call.1} parent=155 // pred_check
          %p3743 = pneg %p548
        $region158: #{tpu_custom_call.1} parent=155 // pred_check_branch
          %3745 = sbr.rel (%p3743) target = $region160
        $region159: #{tpu_custom_call.1} parent=155 // pred_region
          %s3746 = sand.u32 %s533, 1
          %s3747 = scalar_lea.sflag [#allocation4], %s3746
          %s3748 = sand.u32 %s533, 1
          %s3749 = smul.addr %s3748, 8
          %s3750 = scalar_lea.vmem [#allocation19], %s3749
          %3751 = dma.done %s3747, 128
        $region160: #{tpu_custom_call.1} parent=155 // pred_fallthru
          _
      $region156: #{tpu_custom_call.1} parent=5 // pred_fallthru
        _
    $region6: #{tpu_custom_call.1} parent=1 // loop_footer
      %s41 = sadd.s32 1, %s37
    $region7: #{tpu_custom_call.1} parent=1 // loop_footer_branch
      %36 = sbr.rel target = $region3
    $region8: #{tpu_custom_call.1} parent=1 // loop_exit
      _
    %3752 = vsyncpa [#allocation3], 1
    %s3753 = scalar_lea.sflag [#allocation3], 1
    %3754 = vsyncpa %s3753, 1
    %3755 = vsyncpa [#allocation6], 1
    %3756 = vsyncpa [#allocation9], 1
    %3757 = vsyncpa [#allocation12], 1
    %3758 = vsyncpa [#allocation15], 1
    %3759 = vsyncpa [#allocation18], 1
    %3760 = vsyncpa [#allocation4], 1
    %s3761 = scalar_lea.sflag [#allocation4], 1
    %3762 = vsyncpa %s3761, 1

</llo_original>
